<compile_context>
chip_gen: v6e
topology: v6e:2x2x1
jax: 0.10.0
libtpu: 0.0.40
codegen_flags: <defaults>
</compile_context>

<pallas_src>
from functools import partial

import jax
import jax.numpy as jnp
from jax import lax
from jax.experimental import pallas as pl
from jax.experimental.pallas import tpu as pltpu

LEAKY_SLOPE = 0.01   # PyTorch nn.LeakyReLU default
EPS = 1e-5           # PyTorch BatchNorm3d default eps

# Tap order shared by the kernel (roll offsets) and the host mask builder:
# tap index t = (kd)*9 + (kh)*3 + (kw) with (dd, dh, dw) = (kd-1, kh-1, kw-1).
_TAPS = tuple((dd, dh, dw) for dd in (-1, 0, 1) for dh in (-1, 0, 1) for dw in (-1, 0, 1))


def _leaky_relu(x):
    return jnp.where(x >= 0, x, LEAKY_SLOPE * x)


def resnet_block_kernel(x_ref, w1_ref, w2_ref, shift_ref, mask_ref, o_ref,
                        col_ref, *, C, H, W):
    """One grid step = `batch_block` volumes folded into the lane axis.

    x_ref:     (C, L)      L = batch_block * D*H*W, channel-major, lane-dense
    w*_ref:    (C, 27*C)   BN scale folded in, column = tap*C + ci
    shift_ref: (C, 1)      eval-mode BN shift (f32 bias column)
    mask_ref:  (27, L)     0/1 boundary masks, one lane-dense row per tap
    o_ref:     (C, L)
    col_ref:   (27*C, L)   im2col scratch, compute dtype
    """
    HW = H * W
    L = x_ref.shape[1]
    cdt = col_ref.dtype

    x_in = x_ref[...]                            # (C, L) input dtype
    x_c = x_in.astype(cdt)
    masks = mask_ref[...]                        # (27, L) 0/1, compute dtype
    shift = shift_ref[...].astype(jnp.float32)   # (C, 1)

    def conv(w_ref_, src):
        # Fill the im2col scratch: row block t*C:(t+1)*C holds tap t of `src`
        # (static lane roll on the XLU, 0/1 mask multiply on the VPU, dense
        # row-block store), then contract everything in ONE K=27*C matmul.
        # Circular wraparound positions are exactly the masked ones, so the
        # roll over the whole (multi-volume) lane axis is safe.
        for t, (dd, dh, dw) in enumerate(_TAPS):
            off = dd * HW + dh * W + dw
            tap = src if off == 0 else pltpu.roll(src, shift=(-off) % L, axis=1)
            if (dd, dh, dw) != (0, 0, 0):
                tap = tap * masks[t:t + 1, :]
            # NOTE: for bf16 with C == 8 this is a half-of-16-row packed-tile
            # store; fully aligned whenever C % 16 == 0.
            col_ref[t * C:(t + 1) * C, :] = tap
        return jnp.dot(w_ref_[...], col_ref[...],
                       preferred_element_type=jnp.float32)

    out1 = _leaky_relu(conv(w1_ref, x_c) + shift)            # (C, L) f32
    out2 = conv(w2_ref, out1.astype(cdt)) + shift             # (C, L) f32
    o_ref[...] = _leaky_relu(out2 + x_in.astype(jnp.float32)).astype(o_ref.dtype)


def _pick_batch_block(n, dhw, lane_target=2048):
    """Largest divisor of n keeping lane width <= lane_target, partial blocks
    lane-aligned, and >= 2 grid steps when n > 1 (v7x dual TensorCore)."""
    valid = []
    for b in range(1, n + 1):
        if n % b:
            continue
        l = b * dhw
        if b != n and l % 128:
            continue
        if n > 1 and b == n:
            continue
        if l > lane_target:
            continue
        valid.append(b)
    return max(valid) if valid else n    # fallback: one full-array block


def resnet_block(x_ncdhw, w1, w2, gamma, beta, running_mean, running_var,
                 *, compute_dtype=jnp.bfloat16, batch_block=None):
    """x_ncdhw: (N, C, D, H, W) like PyTorch.  Weights: (Cout, Cin, 3, 3, 3)."""
    N, C, D, H, W = x_ncdhw.shape
    Cout = w1.shape[0]
    assert Cout == C and w2.shape == (C, C, 3, 3, 3), \
        "downsample=None requires in_c == out_c (stride=1 3x3x3 convs)"
    DHW = D * H * W
    if batch_block is None:
        batch_block = _pick_batch_block(N, DHW)
    assert N % batch_block == 0
    L = batch_block * DHW
    num_steps = N // batch_block

    # Channel-major, batch folded into the lane axis: (C, N*DHW).
    x2d = jnp.transpose(x_ncdhw.reshape(N, C, DHW), (1, 0, 2)).reshape(C, N * DHW)

    # Fold eval-mode BN scale into the conv output channels; keep the shift.
    inv_std = lax.rsqrt(running_var.astype(jnp.float32) + EPS)
    scale = gamma.astype(jnp.float32) * inv_std                         # (C,)
    shift = beta.astype(jnp.float32) - running_mean.astype(jnp.float32) * scale

    def flatten_w(w):
        wf = w.astype(jnp.float32) * scale[:, None, None, None, None]
        # (Cout, Cin, 3,3,3) -> (Cout, kd,kh,kw, Cin) -> (Cout, 27*Cin),
        # column index = tap*Cin + ci, matching the im2col row layout.
        return jnp.transpose(wf, (0, 2, 3, 4, 1)).reshape(C, 27 * C).astype(compute_dtype)

    w1_flat = flatten_w(w1)
    w2_flat = flatten_w(w2)
    shift_col = shift.reshape(C, 1)

    # Host-precomputed 0/1 boundary masks (one lane-dense row per tap); they
    # only depend on position modulo DHW, so the same block serves every step.
    pos = jnp.arange(DHW, dtype=jnp.int32)
    d_i, h_i, w_i = pos // (H * W), (pos // W) % H, pos % W
    rows = []
    for dd, dh, dw in _TAPS:
        m = jnp.ones((DHW,), jnp.bool_)
        if dd == -1: m = m & (d_i >= 1)
        if dd == 1:  m = m & (d_i <= D - 2)
        if dh == -1: m = m & (h_i >= 1)
        if dh == 1:  m = m & (h_i <= H - 2)
        if dw == -1: m = m & (w_i >= 1)
        if dw == 1:  m = m & (w_i <= W - 2)
        rows.append(m)
    mask = jnp.tile(jnp.stack(rows).astype(compute_dtype), (1, batch_block))  # (27, L)

    kernel = partial(resnet_block_kernel, C=C, H=H, W=W)
    # TODO(synk): stride > 1 / downsample path not implemented (module defaults
    # are stride=1, downsample=None, so identity == x).
    # TODO(synk): for large volumes add a halo-tiled D-axis grid dimension and
    # size the blocks + (27*C, tile) im2col scratch for v7x's 64 MiB VMEM
    # (set pltpu.CompilerParams(vmem_limit_bytes=...)); unnecessary here.
    out2d = pl.pallas_call(
        kernel,
        out_shape=jax.ShapeDtypeStruct((C, N * DHW), x_ncdhw.dtype),
        grid_spec=pltpu.PrefetchScalarGridSpec(
            num_scalar_prefetch=0,
            grid=(num_steps,),
            in_specs=[
                pl.BlockSpec((C, L), lambda i: (0, i)),
                pl.BlockSpec((C, 27 * C), lambda i: (0, 0)),
                pl.BlockSpec((C, 27 * C), lambda i: (0, 0)),
                pl.BlockSpec((C, 1), lambda i: (0, 0)),
                pl.BlockSpec((27, L), lambda i: (0, 0)),
            ],
            out_specs=pl.BlockSpec((C, L), lambda i: (0, i)),
            scratch_shapes=[pltpu.VMEM((27 * C, L), compute_dtype)],
        ),
        compiler_params=pltpu.CompilerParams(
            dimension_semantics=("parallel",)),
    )(x2d, w1_flat, w2_flat, shift_col, mask)

    return jnp.transpose(out2d.reshape(C, N, DHW), (1, 0, 2)).reshape(N, C, D, H, W)


def reference(x, w1, w2, gamma, beta, running_mean, running_var):
    """Pure-JAX f32 reference matching the PyTorch forward (NCDHW)."""
    dn = lax.conv_dimension_numbers(x.shape, w1.shape, ('NCDHW', 'OIDHW', 'NCDHW'))
    inv_std = 1.0 / jnp.sqrt(running_var + EPS)
    s = (gamma * inv_std)[None, :, None, None, None]
    b = (beta - running_mean * gamma * inv_std)[None, :, None, None, None]

    def norm(y): return y * s + b
    def lrelu(y): return jnp.where(y >= 0, y, LEAKY_SLOPE * y)

    out = lax.conv_general_dilated(x, w1, (1, 1, 1), [(1, 1)] * 3,
                                   dimension_numbers=dn)
    out = lrelu(norm(out))
    out = lax.conv_general_dilated(out, w2, (1, 1, 1), [(1, 1)] * 3,
                                   dimension_numbers=dn)
    out = norm(out)
    return lrelu(out + x)


if __name__ == "__main__":
    key = jax.random.PRNGKey(0)
    k1, k2, k3, k4, k5 = jax.random.split(key, 5)

    N, C, D, H, W = 4, 8, 8, 8, 8            # small shapes; in_c == out_c == 8
    in_c = out_c = C

    x = jax.random.normal(k1, (N, C, D, H, W), jnp.float32)
    w1 = jax.random.normal(k2, (out_c, in_c, 3, 3, 3), jnp.float32) / jnp.sqrt(27.0 * in_c)
    w2 = jax.random.normal(k3, (out_c, out_c, 3, 3, 3), jnp.float32) / jnp.sqrt(27.0 * out_c)
    gamma = 1.0 + 0.1 * jax.random.normal(k4, (out_c,), jnp.float32)
    beta = 0.1 * jax.random.normal(k5, (out_c,), jnp.float32)
    running_mean = jnp.zeros((out_c,), jnp.float32)
    running_var = jnp.ones((out_c,), jnp.float32)

    ref = reference(x, w1, w2, gamma, beta, running_mean, running_var)

    # Exact path (f32 matmul inputs): must match the reference tightly.
    out_f32 = jax.block_until_ready(
        resnet_block(x, w1, w2, gamma, beta, running_mean, running_var,
                     compute_dtype=jnp.float32))
    err_f32 = float(jnp.max(jnp.abs(out_f32 - ref)))
    assert err_f32 < 1e-3, f"f32 path max_err={err_f32}"

    # Default perf path (bf16 MXU inputs, f32 accumulation): looser tolerance
    # for two chained bf16 convs vs. the f32 reference.
    out_bf16 = jax.block_until_ready(
        resnet_block(x, w1, w2, gamma, beta, running_mean, running_var))
    err_bf16 = float(jnp.max(jnp.abs(out_bf16.astype(jnp.float32) - ref)))
    assert err_bf16 < 0.15, f"bf16 path max_err={err_bf16}"

    print("KERNEL_OK")
</pallas_src>

<mosaic_0001>
module attributes {stable_mosaic.version = 11 : i64} {
  func.func @resnet_block_kernel(%arg0: i32, %arg1: memref<8x1024xf32, #tpu.memory_space<vmem>>, %arg2: memref<8x216xf32, #tpu.memory_space<vmem>>, %arg3: memref<8x216xf32, #tpu.memory_space<vmem>>, %arg4: memref<8x1xf32, #tpu.memory_space<vmem>>, %arg5: memref<27x1024xf32, #tpu.memory_space<vmem>>, %arg6: memref<8x1024xf32, #tpu.memory_space<vmem>>, %arg7: memref<216x1024xf32, #tpu.memory_space<vmem>>) attributes {dimension_semantics = [#tpu.dimension_semantics<parallel>], iteration_bounds = array<i64: 2>, scalar_prefetch = 0 : i64, scratch_operands = 1 : i64, tpu.core_type = #tpu.core_type<tc>, window_params = [{transform_indices = @transform_0, window_bounds = array<i64: 8, 1024>}, {pipeline_mode = #tpu.pipeline_mode<synchronous>, transform_indices = @transform_1, window_bounds = array<i64: 8, 216>}, {pipeline_mode = #tpu.pipeline_mode<synchronous>, transform_indices = @transform_2, window_bounds = array<i64: 8, 216>}, {pipeline_mode = #tpu.pipeline_mode<synchronous>, transform_indices = @transform_3, window_bounds = array<i64: 8, 1>}, {pipeline_mode = #tpu.pipeline_mode<synchronous>, transform_indices = @transform_4, window_bounds = array<i64: 27, 1024>}, {transform_indices = @transform_5, window_bounds = array<i64: 8, 1024>}]} {
    %c0 = arith.constant 0 : index
    %c0_0 = arith.constant 0 : index
    %0 = vector.load %arg1[%c0, %c0_0] : memref<8x1024xf32, #tpu.memory_space<vmem>>, vector<8x1024xf32>
    %c0_1 = arith.constant 0 : index
    %c0_2 = arith.constant 0 : index
    %1 = vector.load %arg5[%c0_1, %c0_2] : memref<27x1024xf32, #tpu.memory_space<vmem>>, vector<27x1024xf32>
    %c0_3 = arith.constant 0 : index
    %c0_4 = arith.constant 0 : index
    %2 = vector.load %arg4[%c0_3, %c0_4] : memref<8x1xf32, #tpu.memory_space<vmem>>, vector<8x1xf32>
    %c73_i32 = arith.constant 73 : i32
    %3 = tpu.dynamic_rotate %0 by %c73_i32 dim 1 : vector<8x1024xf32>, i32 -> vector<8x1024xf32>
    %4 = vector.extract_strided_slice %1 {offsets = [0, 0], sizes = [1, 1024], strides = [1, 1]} : vector<27x1024xf32> to vector<1x1024xf32>
    %5 = vector.broadcast %4 : vector<1x1024xf32> to vector<8x1024xf32>
    %6 = arith.mulf %3, %5 : vector<8x1024xf32>
    %c0_5 = arith.constant 0 : index
    %c0_6 = arith.constant 0 : index
    %7 = vector.load %arg7[%c0_5, %c0_6] : memref<216x1024xf32, #tpu.memory_space<vmem>>, vector<8x1024xf32>
    tpu.vector_store %arg7[%c0_5, %c0_6], %6 {strides = array<i32>} : memref<216x1024xf32, #tpu.memory_space<vmem>>, vector<8x1024xf32>,
    %c72_i32 = arith.constant 72 : i32
    %8 = tpu.dynamic_rotate %0 by %c72_i32 dim 1 : vector<8x1024xf32>, i32 -> vector<8x1024xf32>
    %9 = vector.extract_strided_slice %1 {offsets = [1, 0], sizes = [1, 1024], strides = [1, 1]} : vector<27x1024xf32> to vector<1x1024xf32>
    %10 = vector.broadcast %9 : vector<1x1024xf32> to vector<8x1024xf32>
    %11 = arith.mulf %8, %10 : vector<8x1024xf32>
    %c8 = arith.constant 8 : index
    %c0_7 = arith.constant 0 : index
    %12 = vector.load %arg7[%c8, %c0_7] : memref<216x1024xf32, #tpu.memory_space<vmem>>, vector<8x1024xf32>
    tpu.vector_store %arg7[%c8, %c0_7], %11 {strides = array<i32>} : memref<216x1024xf32, #tpu.memory_space<vmem>>, vector<8x1024xf32>,
    %c71_i32 = arith.constant 71 : i32
    %13 = tpu.dynamic_rotate %0 by %c71_i32 dim 1 : vector<8x1024xf32>, i32 -> vector<8x1024xf32>
    %14 = vector.extract_strided_slice %1 {offsets = [2, 0], sizes = [1, 1024], strides = [1, 1]} : vector<27x1024xf32> to vector<1x1024xf32>
    %15 = vector.broadcast %14 : vector<1x1024xf32> to vector<8x1024xf32>
    %16 = arith.mulf %13, %15 : vector<8x1024xf32>
    %c16 = arith.constant 16 : index
    %c0_8 = arith.constant 0 : index
    %17 = vector.load %arg7[%c16, %c0_8] : memref<216x1024xf32, #tpu.memory_space<vmem>>, vector<8x1024xf32>
    tpu.vector_store %arg7[%c16, %c0_8], %16 {strides = array<i32>} : memref<216x1024xf32, #tpu.memory_space<vmem>>, vector<8x1024xf32>,
    %c65_i32 = arith.constant 65 : i32
    %18 = tpu.dynamic_rotate %0 by %c65_i32 dim 1 : vector<8x1024xf32>, i32 -> vector<8x1024xf32>
    %19 = vector.extract_strided_slice %1 {offsets = [3, 0], sizes = [1, 1024], strides = [1, 1]} : vector<27x1024xf32> to vector<1x1024xf32>
    %20 = vector.broadcast %19 : vector<1x1024xf32> to vector<8x1024xf32>
    %21 = arith.mulf %18, %20 : vector<8x1024xf32>
    %c24 = arith.constant 24 : index
    %c0_9 = arith.constant 0 : index
    %22 = vector.load %arg7[%c24, %c0_9] : memref<216x1024xf32, #tpu.memory_space<vmem>>, vector<8x1024xf32>
    tpu.vector_store %arg7[%c24, %c0_9], %21 {strides = array<i32>} : memref<216x1024xf32, #tpu.memory_space<vmem>>, vector<8x1024xf32>,
    %c64_i32 = arith.constant 64 : i32
    %23 = tpu.dynamic_rotate %0 by %c64_i32 dim 1 : vector<8x1024xf32>, i32 -> vector<8x1024xf32>
    %24 = vector.extract_strided_slice %1 {offsets = [4, 0], sizes = [1, 1024], strides = [1, 1]} : vector<27x1024xf32> to vector<1x1024xf32>
    %25 = vector.broadcast %24 : vector<1x1024xf32> to vector<8x1024xf32>
    %26 = arith.mulf %23, %25 : vector<8x1024xf32>
    %c32 = arith.constant 32 : index
    %c0_10 = arith.constant 0 : index
    %27 = vector.load %arg7[%c32, %c0_10] : memref<216x1024xf32, #tpu.memory_space<vmem>>, vector<8x1024xf32>
    tpu.vector_store %arg7[%c32, %c0_10], %26 {strides = array<i32>} : memref<216x1024xf32, #tpu.memory_space<vmem>>, vector<8x1024xf32>,
    %c63_i32 = arith.constant 63 : i32
    %28 = tpu.dynamic_rotate %0 by %c63_i32 dim 1 : vector<8x1024xf32>, i32 -> vector<8x1024xf32>
    %29 = vector.extract_strided_slice %1 {offsets = [5, 0], sizes = [1, 1024], strides = [1, 1]} : vector<27x1024xf32> to vector<1x1024xf32>
    %30 = vector.broadcast %29 : vector<1x1024xf32> to vector<8x1024xf32>
    %31 = arith.mulf %28, %30 : vector<8x1024xf32>
    %c40 = arith.constant 40 : index
    %c0_11 = arith.constant 0 : index
    %32 = vector.load %arg7[%c40, %c0_11] : memref<216x1024xf32, #tpu.memory_space<vmem>>, vector<8x1024xf32>
    tpu.vector_store %arg7[%c40, %c0_11], %31 {strides = array<i32>} : memref<216x1024xf32, #tpu.memory_space<vmem>>, vector<8x1024xf32>,
    %c57_i32 = arith.constant 57 : i32
    %33 = tpu.dynamic_rotate %0 by %c57_i32 dim 1 : vector<8x1024xf32>, i32 -> vector<8x1024xf32>
    %34 = vector.extract_strided_slice %1 {offsets = [6, 0], sizes = [1, 1024], strides = [1, 1]} : vector<27x1024xf32> to vector<1x1024xf32>
    %35 = vector.broadcast %34 : vector<1x1024xf32> to vector<8x1024xf32>
    %36 = arith.mulf %33, %35 : vector<8x1024xf32>
    %c48 = arith.constant 48 : index
    %c0_12 = arith.constant 0 : index
    %37 = vector.load %arg7[%c48, %c0_12] : memref<216x1024xf32, #tpu.memory_space<vmem>>, vector<8x1024xf32>
    tpu.vector_store %arg7[%c48, %c0_12], %36 {strides = array<i32>} : memref<216x1024xf32, #tpu.memory_space<vmem>>, vector<8x1024xf32>,
    %c56_i32 = arith.constant 56 : i32
    %38 = tpu.dynamic_rotate %0 by %c56_i32 dim 1 : vector<8x1024xf32>, i32 -> vector<8x1024xf32>
    %39 = vector.extract_strided_slice %1 {offsets = [7, 0], sizes = [1, 1024], strides = [1, 1]} : vector<27x1024xf32> to vector<1x1024xf32>
    %40 = vector.broadcast %39 : vector<1x1024xf32> to vector<8x1024xf32>
    %41 = arith.mulf %38, %40 : vector<8x1024xf32>
    %c56 = arith.constant 56 : index
    %c0_13 = arith.constant 0 : index
    %42 = vector.load %arg7[%c56, %c0_13] : memref<216x1024xf32, #tpu.memory_space<vmem>>, vector<8x1024xf32>
    tpu.vector_store %arg7[%c56, %c0_13], %41 {strides = array<i32>} : memref<216x1024xf32, #tpu.memory_space<vmem>>, vector<8x1024xf32>,
    %c55_i32 = arith.constant 55 : i32
    %43 = tpu.dynamic_rotate %0 by %c55_i32 dim 1 : vector<8x1024xf32>, i32 -> vector<8x1024xf32>
    %44 = vector.extract_strided_slice %1 {offsets = [8, 0], sizes = [1, 1024], strides = [1, 1]} : vector<27x1024xf32> to vector<1x1024xf32>
    %45 = vector.broadcast %44 : vector<1x1024xf32> to vector<8x1024xf32>
    %46 = arith.mulf %43, %45 : vector<8x1024xf32>
    %c64 = arith.constant 64 : index
    %c0_14 = arith.constant 0 : index
    %47 = vector.load %arg7[%c64, %c0_14] : memref<216x1024xf32, #tpu.memory_space<vmem>>, vector<8x1024xf32>
    tpu.vector_store %arg7[%c64, %c0_14], %46 {strides = array<i32>} : memref<216x1024xf32, #tpu.memory_space<vmem>>, vector<8x1024xf32>,
    %c9_i32 = arith.constant 9 : i32
    %48 = tpu.dynamic_rotate %0 by %c9_i32 dim 1 : vector<8x1024xf32>, i32 -> vector<8x1024xf32>
    %49 = vector.extract_strided_slice %1 {offsets = [9, 0], sizes = [1, 1024], strides = [1, 1]} : vector<27x1024xf32> to vector<1x1024xf32>
    %50 = vector.broadcast %49 : vector<1x1024xf32> to vector<8x1024xf32>
    %51 = arith.mulf %48, %50 : vector<8x1024xf32>
    %c72 = arith.constant 72 : index
    %c0_15 = arith.constant 0 : index
    %52 = vector.load %arg7[%c72, %c0_15] : memref<216x1024xf32, #tpu.memory_space<vmem>>, vector<8x1024xf32>
    tpu.vector_store %arg7[%c72, %c0_15], %51 {strides = array<i32>} : memref<216x1024xf32, #tpu.memory_space<vmem>>, vector<8x1024xf32>,
    %c8_i32 = arith.constant 8 : i32
    %53 = tpu.dynamic_rotate %0 by %c8_i32 dim 1 : vector<8x1024xf32>, i32 -> vector<8x1024xf32>
    %54 = vector.extract_strided_slice %1 {offsets = [10, 0], sizes = [1, 1024], strides = [1, 1]} : vector<27x1024xf32> to vector<1x1024xf32>
    %55 = vector.broadcast %54 : vector<1x1024xf32> to vector<8x1024xf32>
    %56 = arith.mulf %53, %55 : vector<8x1024xf32>
    %c80 = arith.constant 80 : index
    %c0_16 = arith.constant 0 : index
    %57 = vector.load %arg7[%c80, %c0_16] : memref<216x1024xf32, #tpu.memory_space<vmem>>, vector<8x1024xf32>
    tpu.vector_store %arg7[%c80, %c0_16], %56 {strides = array<i32>} : memref<216x1024xf32, #tpu.memory_space<vmem>>, vector<8x1024xf32>,
    %c7_i32 = arith.constant 7 : i32
    %58 = tpu.dynamic_rotate %0 by %c7_i32 dim 1 : vector<8x1024xf32>, i32 -> vector<8x1024xf32>
    %59 = vector.extract_strided_slice %1 {offsets = [11, 0], sizes = [1, 1024], strides = [1, 1]} : vector<27x1024xf32> to vector<1x1024xf32>
    %60 = vector.broadcast %59 : vector<1x1024xf32> to vector<8x1024xf32>
    %61 = arith.mulf %58, %60 : vector<8x1024xf32>
    %c88 = arith.constant 88 : index
    %c0_17 = arith.constant 0 : index
    %62 = vector.load %arg7[%c88, %c0_17] : memref<216x1024xf32, #tpu.memory_space<vmem>>, vector<8x1024xf32>
    tpu.vector_store %arg7[%c88, %c0_17], %61 {strides = array<i32>} : memref<216x1024xf32, #tpu.memory_space<vmem>>, vector<8x1024xf32>,
    %c1_i32 = arith.constant 1 : i32
    %63 = tpu.dynamic_rotate %0 by %c1_i32 dim 1 : vector<8x1024xf32>, i32 -> vector<8x1024xf32>
    %64 = vector.extract_strided_slice %1 {offsets = [12, 0], sizes = [1, 1024], strides = [1, 1]} : vector<27x1024xf32> to vector<1x1024xf32>
    %65 = vector.broadcast %64 : vector<1x1024xf32> to vector<8x1024xf32>
    %66 = arith.mulf %63, %65 : vector<8x1024xf32>
    %c96 = arith.constant 96 : index
    %c0_18 = arith.constant 0 : index
    %67 = vector.load %arg7[%c96, %c0_18] : memref<216x1024xf32, #tpu.memory_space<vmem>>, vector<8x1024xf32>
    tpu.vector_store %arg7[%c96, %c0_18], %66 {strides = array<i32>} : memref<216x1024xf32, #tpu.memory_space<vmem>>, vector<8x1024xf32>,
    %c104 = arith.constant 104 : index
    %c0_19 = arith.constant 0 : index
    %68 = vector.load %arg7[%c104, %c0_19] : memref<216x1024xf32, #tpu.memory_space<vmem>>, vector<8x1024xf32>
    tpu.vector_store %arg7[%c104, %c0_19], %0 {strides = array<i32>} : memref<216x1024xf32, #tpu.memory_space<vmem>>, vector<8x1024xf32>,
    %c1023_i32 = arith.constant 1023 : i32
    %69 = tpu.dynamic_rotate %0 by %c1023_i32 dim 1 : vector<8x1024xf32>, i32 -> vector<8x1024xf32>
    %70 = vector.extract_strided_slice %1 {offsets = [14, 0], sizes = [1, 1024], strides = [1, 1]} : vector<27x1024xf32> to vector<1x1024xf32>
    %71 = vector.broadcast %70 : vector<1x1024xf32> to vector<8x1024xf32>
    %72 = arith.mulf %69, %71 : vector<8x1024xf32>
    %c112 = arith.constant 112 : index
    %c0_20 = arith.constant 0 : index
    %73 = vector.load %arg7[%c112, %c0_20] : memref<216x1024xf32, #tpu.memory_space<vmem>>, vector<8x1024xf32>
    tpu.vector_store %arg7[%c112, %c0_20], %72 {strides = array<i32>} : memref<216x1024xf32, #tpu.memory_space<vmem>>, vector<8x1024xf32>,
    %c1017_i32 = arith.constant 1017 : i32
    %74 = tpu.dynamic_rotate %0 by %c1017_i32 dim 1 : vector<8x1024xf32>, i32 -> vector<8x1024xf32>
    %75 = vector.extract_strided_slice %1 {offsets = [15, 0], sizes = [1, 1024], strides = [1, 1]} : vector<27x1024xf32> to vector<1x1024xf32>
    %76 = vector.broadcast %75 : vector<1x1024xf32> to vector<8x1024xf32>
    %77 = arith.mulf %74, %76 : vector<8x1024xf32>
    %c120 = arith.constant 120 : index
    %c0_21 = arith.constant 0 : index
    %78 = vector.load %arg7[%c120, %c0_21] : memref<216x1024xf32, #tpu.memory_space<vmem>>, vector<8x1024xf32>
    tpu.vector_store %arg7[%c120, %c0_21], %77 {strides = array<i32>} : memref<216x1024xf32, #tpu.memory_space<vmem>>, vector<8x1024xf32>,
    %c1016_i32 = arith.constant 1016 : i32
    %79 = tpu.dynamic_rotate %0 by %c1016_i32 dim 1 : vector<8x1024xf32>, i32 -> vector<8x1024xf32>
    %80 = vector.extract_strided_slice %1 {offsets = [16, 0], sizes = [1, 1024], strides = [1, 1]} : vector<27x1024xf32> to vector<1x1024xf32>
    %81 = vector.broadcast %80 : vector<1x1024xf32> to vector<8x1024xf32>
    %82 = arith.mulf %79, %81 : vector<8x1024xf32>
    %c128 = arith.constant 128 : index
    %c0_22 = arith.constant 0 : index
    %83 = vector.load %arg7[%c128, %c0_22] : memref<216x1024xf32, #tpu.memory_space<vmem>>, vector<8x1024xf32>
    tpu.vector_store %arg7[%c128, %c0_22], %82 {strides = array<i32>} : memref<216x1024xf32, #tpu.memory_space<vmem>>, vector<8x1024xf32>,
    %c1015_i32 = arith.constant 1015 : i32
    %84 = tpu.dynamic_rotate %0 by %c1015_i32 dim 1 : vector<8x1024xf32>, i32 -> vector<8x1024xf32>
    %85 = vector.extract_strided_slice %1 {offsets = [17, 0], sizes = [1, 1024], strides = [1, 1]} : vector<27x1024xf32> to vector<1x1024xf32>
    %86 = vector.broadcast %85 : vector<1x1024xf32> to vector<8x1024xf32>
    %87 = arith.mulf %84, %86 : vector<8x1024xf32>
    %c136 = arith.constant 136 : index
    %c0_23 = arith.constant 0 : index
    %88 = vector.load %arg7[%c136, %c0_23] : memref<216x1024xf32, #tpu.memory_space<vmem>>, vector<8x1024xf32>
    tpu.vector_store %arg7[%c136, %c0_23], %87 {strides = array<i32>} : memref<216x1024xf32, #tpu.memory_space<vmem>>, vector<8x1024xf32>,
    %c969_i32 = arith.constant 969 : i32
    %89 = tpu.dynamic_rotate %0 by %c969_i32 dim 1 : vector<8x1024xf32>, i32 -> vector<8x1024xf32>
    %90 = vector.extract_strided_slice %1 {offsets = [18, 0], sizes = [1, 1024], strides = [1, 1]} : vector<27x1024xf32> to vector<1x1024xf32>
    %91 = vector.broadcast %90 : vector<1x1024xf32> to vector<8x1024xf32>
    %92 = arith.mulf %89, %91 : vector<8x1024xf32>
    %c144 = arith.constant 144 : index
    %c0_24 = arith.constant 0 : index
    %93 = vector.load %arg7[%c144, %c0_24] : memref<216x1024xf32, #tpu.memory_space<vmem>>, vector<8x1024xf32>
    tpu.vector_store %arg7[%c144, %c0_24], %92 {strides = array<i32>} : memref<216x1024xf32, #tpu.memory_space<vmem>>, vector<8x1024xf32>,
    %c968_i32 = arith.constant 968 : i32
    %94 = tpu.dynamic_rotate %0 by %c968_i32 dim 1 : vector<8x1024xf32>, i32 -> vector<8x1024xf32>
    %95 = vector.extract_strided_slice %1 {offsets = [19, 0], sizes = [1, 1024], strides = [1, 1]} : vector<27x1024xf32> to vector<1x1024xf32>
    %96 = vector.broadcast %95 : vector<1x1024xf32> to vector<8x1024xf32>
    %97 = arith.mulf %94, %96 : vector<8x1024xf32>
    %c152 = arith.constant 152 : index
    %c0_25 = arith.constant 0 : index
    %98 = vector.load %arg7[%c152, %c0_25] : memref<216x1024xf32, #tpu.memory_space<vmem>>, vector<8x1024xf32>
    tpu.vector_store %arg7[%c152, %c0_25], %97 {strides = array<i32>} : memref<216x1024xf32, #tpu.memory_space<vmem>>, vector<8x1024xf32>,
    %c967_i32 = arith.constant 967 : i32
    %99 = tpu.dynamic_rotate %0 by %c967_i32 dim 1 : vector<8x1024xf32>, i32 -> vector<8x1024xf32>
    %100 = vector.extract_strided_slice %1 {offsets = [20, 0], sizes = [1, 1024], strides = [1, 1]} : vector<27x1024xf32> to vector<1x1024xf32>
    %101 = vector.broadcast %100 : vector<1x1024xf32> to vector<8x1024xf32>
    %102 = arith.mulf %99, %101 : vector<8x1024xf32>
    %c160 = arith.constant 160 : index
    %c0_26 = arith.constant 0 : index
    %103 = vector.load %arg7[%c160, %c0_26] : memref<216x1024xf32, #tpu.memory_space<vmem>>, vector<8x1024xf32>
    tpu.vector_store %arg7[%c160, %c0_26], %102 {strides = array<i32>} : memref<216x1024xf32, #tpu.memory_space<vmem>>, vector<8x1024xf32>,
    %c961_i32 = arith.constant 961 : i32
    %104 = tpu.dynamic_rotate %0 by %c961_i32 dim 1 : vector<8x1024xf32>, i32 -> vector<8x1024xf32>
    %105 = vector.extract_strided_slice %1 {offsets = [21, 0], sizes = [1, 1024], strides = [1, 1]} : vector<27x1024xf32> to vector<1x1024xf32>
    %106 = vector.broadcast %105 : vector<1x1024xf32> to vector<8x1024xf32>
    %107 = arith.mulf %104, %106 : vector<8x1024xf32>
    %c168 = arith.constant 168 : index
    %c0_27 = arith.constant 0 : index
    %108 = vector.load %arg7[%c168, %c0_27] : memref<216x1024xf32, #tpu.memory_space<vmem>>, vector<8x1024xf32>
    tpu.vector_store %arg7[%c168, %c0_27], %107 {strides = array<i32>} : memref<216x1024xf32, #tpu.memory_space<vmem>>, vector<8x1024xf32>,
    %c960_i32 = arith.constant 960 : i32
    %109 = tpu.dynamic_rotate %0 by %c960_i32 dim 1 : vector<8x1024xf32>, i32 -> vector<8x1024xf32>
    %110 = vector.extract_strided_slice %1 {offsets = [22, 0], sizes = [1, 1024], strides = [1, 1]} : vector<27x1024xf32> to vector<1x1024xf32>
    %111 = vector.broadcast %110 : vector<1x1024xf32> to vector<8x1024xf32>
    %112 = arith.mulf %109, %111 : vector<8x1024xf32>
    %c176 = arith.constant 176 : index
    %c0_28 = arith.constant 0 : index
    %113 = vector.load %arg7[%c176, %c0_28] : memref<216x1024xf32, #tpu.memory_space<vmem>>, vector<8x1024xf32>
    tpu.vector_store %arg7[%c176, %c0_28], %112 {strides = array<i32>} : memref<216x1024xf32, #tpu.memory_space<vmem>>, vector<8x1024xf32>,
    %c959_i32 = arith.constant 959 : i32
    %114 = tpu.dynamic_rotate %0 by %c959_i32 dim 1 : vector<8x1024xf32>, i32 -> vector<8x1024xf32>
    %115 = vector.extract_strided_slice %1 {offsets = [23, 0], sizes = [1, 1024], strides = [1, 1]} : vector<27x1024xf32> to vector<1x1024xf32>
    %116 = vector.broadcast %115 : vector<1x1024xf32> to vector<8x1024xf32>
    %117 = arith.mulf %114, %116 : vector<8x1024xf32>
    %c184 = arith.constant 184 : index
    %c0_29 = arith.constant 0 : index
    %118 = vector.load %arg7[%c184, %c0_29] : memref<216x1024xf32, #tpu.memory_space<vmem>>, vector<8x1024xf32>
    tpu.vector_store %arg7[%c184, %c0_29], %117 {strides = array<i32>} : memref<216x1024xf32, #tpu.memory_space<vmem>>, vector<8x1024xf32>,
    %c953_i32 = arith.constant 953 : i32
    %119 = tpu.dynamic_rotate %0 by %c953_i32 dim 1 : vector<8x1024xf32>, i32 -> vector<8x1024xf32>
    %120 = vector.extract_strided_slice %1 {offsets = [24, 0], sizes = [1, 1024], strides = [1, 1]} : vector<27x1024xf32> to vector<1x1024xf32>
    %121 = vector.broadcast %120 : vector<1x1024xf32> to vector<8x1024xf32>
    %122 = arith.mulf %119, %121 : vector<8x1024xf32>
    %c192 = arith.constant 192 : index
    %c0_30 = arith.constant 0 : index
    %123 = vector.load %arg7[%c192, %c0_30] : memref<216x1024xf32, #tpu.memory_space<vmem>>, vector<8x1024xf32>
    tpu.vector_store %arg7[%c192, %c0_30], %122 {strides = array<i32>} : memref<216x1024xf32, #tpu.memory_space<vmem>>, vector<8x1024xf32>,
    %c952_i32 = arith.constant 952 : i32
    %124 = tpu.dynamic_rotate %0 by %c952_i32 dim 1 : vector<8x1024xf32>, i32 -> vector<8x1024xf32>
    %125 = vector.extract_strided_slice %1 {offsets = [25, 0], sizes = [1, 1024], strides = [1, 1]} : vector<27x1024xf32> to vector<1x1024xf32>
    %126 = vector.broadcast %125 : vector<1x1024xf32> to vector<8x1024xf32>
    %127 = arith.mulf %124, %126 : vector<8x1024xf32>
    %c200 = arith.constant 200 : index
    %c0_31 = arith.constant 0 : index
    %128 = vector.load %arg7[%c200, %c0_31] : memref<216x1024xf32, #tpu.memory_space<vmem>>, vector<8x1024xf32>
    tpu.vector_store %arg7[%c200, %c0_31], %127 {strides = array<i32>} : memref<216x1024xf32, #tpu.memory_space<vmem>>, vector<8x1024xf32>,
    %c951_i32 = arith.constant 951 : i32
    %129 = tpu.dynamic_rotate %0 by %c951_i32 dim 1 : vector<8x1024xf32>, i32 -> vector<8x1024xf32>
    %130 = vector.extract_strided_slice %1 {offsets = [26, 0], sizes = [1, 1024], strides = [1, 1]} : vector<27x1024xf32> to vector<1x1024xf32>
    %131 = vector.broadcast %130 : vector<1x1024xf32> to vector<8x1024xf32>
    %132 = arith.mulf %129, %131 : vector<8x1024xf32>
    %c208 = arith.constant 208 : index
    %c0_32 = arith.constant 0 : index
    %133 = vector.load %arg7[%c208, %c0_32] : memref<216x1024xf32, #tpu.memory_space<vmem>>, vector<8x1024xf32>
    tpu.vector_store %arg7[%c208, %c0_32], %132 {strides = array<i32>} : memref<216x1024xf32, #tpu.memory_space<vmem>>, vector<8x1024xf32>,
    %c0_33 = arith.constant 0 : index
    %c0_34 = arith.constant 0 : index
    %134 = vector.load %arg2[%c0_33, %c0_34] : memref<8x216xf32, #tpu.memory_space<vmem>>, vector<8x216xf32>
    %c0_35 = arith.constant 0 : index
    %c0_36 = arith.constant 0 : index
    %135 = vector.load %arg7[%c0_35, %c0_36] : memref<216x1024xf32, #tpu.memory_space<vmem>>, vector<216x1024xf32>
    %cst = arith.constant dense<0.000000e+00> : vector<8x1024xf32>
    %136 = tpu.matmul %134, %135, %cst {dimension_numbers = #tpu.dot_dimension_numbers<[1], [0], [0], [1], [0, 0, 1, 1], [], []>} : vector<8x216xf32>, vector<216x1024xf32>, vector<8x1024xf32> -> vector<8x1024xf32>
    %137 = vector.broadcast %2 : vector<8x1xf32> to vector<8x1024xf32>
    %138 = arith.addf %136, %137 : vector<8x1024xf32>
    %cst_37 = arith.constant 0.000000e+00 : f32
    %139 = vector.broadcast %cst_37 : f32 to vector<8x1024xf32>
    %140 = arith.cmpf oge, %138, %139 : vector<8x1024xf32>
    %cst_38 = arith.constant 0.00999999977 : f32
    %141 = vector.broadcast %cst_38 : f32 to vector<8x1024xf32>
    %142 = arith.mulf %141, %138 : vector<8x1024xf32>
    %143 = arith.select %140, %138, %142 : vector<8x1024xi1>, vector<8x1024xf32>
    %c73_i32_39 = arith.constant 73 : i32
    %144 = tpu.dynamic_rotate %143 by %c73_i32_39 dim 1 : vector<8x1024xf32>, i32 -> vector<8x1024xf32>
    %145 = vector.extract_strided_slice %1 {offsets = [0, 0], sizes = [1, 1024], strides = [1, 1]} : vector<27x1024xf32> to vector<1x1024xf32>
    %146 = vector.broadcast %145 : vector<1x1024xf32> to vector<8x1024xf32>
    %147 = arith.mulf %144, %146 : vector<8x1024xf32>
    %c0_40 = arith.constant 0 : index
    %c0_41 = arith.constant 0 : index
    %148 = vector.load %arg7[%c0_40, %c0_41] : memref<216x1024xf32, #tpu.memory_space<vmem>>, vector<8x1024xf32>
    tpu.vector_store %arg7[%c0_40, %c0_41], %147 {strides = array<i32>} : memref<216x1024xf32, #tpu.memory_space<vmem>>, vector<8x1024xf32>,
    %c72_i32_42 = arith.constant 72 : i32
    %149 = tpu.dynamic_rotate %143 by %c72_i32_42 dim 1 : vector<8x1024xf32>, i32 -> vector<8x1024xf32>
    %150 = vector.extract_strided_slice %1 {offsets = [1, 0], sizes = [1, 1024], strides = [1, 1]} : vector<27x1024xf32> to vector<1x1024xf32>
    %151 = vector.broadcast %150 : vector<1x1024xf32> to vector<8x1024xf32>
    %152 = arith.mulf %149, %151 : vector<8x1024xf32>
    %c8_43 = arith.constant 8 : index
    %c0_44 = arith.constant 0 : index
    %153 = vector.load %arg7[%c8_43, %c0_44] : memref<216x1024xf32, #tpu.memory_space<vmem>>, vector<8x1024xf32>
    tpu.vector_store %arg7[%c8_43, %c0_44], %152 {strides = array<i32>} : memref<216x1024xf32, #tpu.memory_space<vmem>>, vector<8x1024xf32>,
    %c71_i32_45 = arith.constant 71 : i32
    %154 = tpu.dynamic_rotate %143 by %c71_i32_45 dim 1 : vector<8x1024xf32>, i32 -> vector<8x1024xf32>
    %155 = vector.extract_strided_slice %1 {offsets = [2, 0], sizes = [1, 1024], strides = [1, 1]} : vector<27x1024xf32> to vector<1x1024xf32>
    %156 = vector.broadcast %155 : vector<1x1024xf32> to vector<8x1024xf32>
    %157 = arith.mulf %154, %156 : vector<8x1024xf32>
    %c16_46 = arith.constant 16 : index
    %c0_47 = arith.constant 0 : index
    %158 = vector.load %arg7[%c16_46, %c0_47] : memref<216x1024xf32, #tpu.memory_space<vmem>>, vector<8x1024xf32>
    tpu.vector_store %arg7[%c16_46, %c0_47], %157 {strides = array<i32>} : memref<216x1024xf32, #tpu.memory_space<vmem>>, vector<8x1024xf32>,
    %c65_i32_48 = arith.constant 65 : i32
    %159 = tpu.dynamic_rotate %143 by %c65_i32_48 dim 1 : vector<8x1024xf32>, i32 -> vector<8x1024xf32>
    %160 = vector.extract_strided_slice %1 {offsets = [3, 0], sizes = [1, 1024], strides = [1, 1]} : vector<27x1024xf32> to vector<1x1024xf32>
    %161 = vector.broadcast %160 : vector<1x1024xf32> to vector<8x1024xf32>
    %162 = arith.mulf %159, %161 : vector<8x1024xf32>
    %c24_49 = arith.constant 24 : index
    %c0_50 = arith.constant 0 : index
    %163 = vector.load %arg7[%c24_49, %c0_50] : memref<216x1024xf32, #tpu.memory_space<vmem>>, vector<8x1024xf32>
    tpu.vector_store %arg7[%c24_49, %c0_50], %162 {strides = array<i32>} : memref<216x1024xf32, #tpu.memory_space<vmem>>, vector<8x1024xf32>,
    %c64_i32_51 = arith.constant 64 : i32
    %164 = tpu.dynamic_rotate %143 by %c64_i32_51 dim 1 : vector<8x1024xf32>, i32 -> vector<8x1024xf32>
    %165 = vector.extract_strided_slice %1 {offsets = [4, 0], sizes = [1, 1024], strides = [1, 1]} : vector<27x1024xf32> to vector<1x1024xf32>
    %166 = vector.broadcast %165 : vector<1x1024xf32> to vector<8x1024xf32>
    %167 = arith.mulf %164, %166 : vector<8x1024xf32>
    %c32_52 = arith.constant 32 : index
    %c0_53 = arith.constant 0 : index
    %168 = vector.load %arg7[%c32_52, %c0_53] : memref<216x1024xf32, #tpu.memory_space<vmem>>, vector<8x1024xf32>
    tpu.vector_store %arg7[%c32_52, %c0_53], %167 {strides = array<i32>} : memref<216x1024xf32, #tpu.memory_space<vmem>>, vector<8x1024xf32>,
    %c63_i32_54 = arith.constant 63 : i32
    %169 = tpu.dynamic_rotate %143 by %c63_i32_54 dim 1 : vector<8x1024xf32>, i32 -> vector<8x1024xf32>
    %170 = vector.extract_strided_slice %1 {offsets = [5, 0], sizes = [1, 1024], strides = [1, 1]} : vector<27x1024xf32> to vector<1x1024xf32>
    %171 = vector.broadcast %170 : vector<1x1024xf32> to vector<8x1024xf32>
    %172 = arith.mulf %169, %171 : vector<8x1024xf32>
    %c40_55 = arith.constant 40 : index
    %c0_56 = arith.constant 0 : index
    %173 = vector.load %arg7[%c40_55, %c0_56] : memref<216x1024xf32, #tpu.memory_space<vmem>>, vector<8x1024xf32>
    tpu.vector_store %arg7[%c40_55, %c0_56], %172 {strides = array<i32>} : memref<216x1024xf32, #tpu.memory_space<vmem>>, vector<8x1024xf32>,
    %c57_i32_57 = arith.constant 57 : i32
    %174 = tpu.dynamic_rotate %143 by %c57_i32_57 dim 1 : vector<8x1024xf32>, i32 -> vector<8x1024xf32>
    %175 = vector.extract_strided_slice %1 {offsets = [6, 0], sizes = [1, 1024], strides = [1, 1]} : vector<27x1024xf32> to vector<1x1024xf32>
    %176 = vector.broadcast %175 : vector<1x1024xf32> to vector<8x1024xf32>
    %177 = arith.mulf %174, %176 : vector<8x1024xf32>
    %c48_58 = arith.constant 48 : index
    %c0_59 = arith.constant 0 : index
    %178 = vector.load %arg7[%c48_58, %c0_59] : memref<216x1024xf32, #tpu.memory_space<vmem>>, vector<8x1024xf32>
    tpu.vector_store %arg7[%c48_58, %c0_59], %177 {strides = array<i32>} : memref<216x1024xf32, #tpu.memory_space<vmem>>, vector<8x1024xf32>,
    %c56_i32_60 = arith.constant 56 : i32
    %179 = tpu.dynamic_rotate %143 by %c56_i32_60 dim 1 : vector<8x1024xf32>, i32 -> vector<8x1024xf32>
    %180 = vector.extract_strided_slice %1 {offsets = [7, 0], sizes = [1, 1024], strides = [1, 1]} : vector<27x1024xf32> to vector<1x1024xf32>
    %181 = vector.broadcast %180 : vector<1x1024xf32> to vector<8x1024xf32>
    %182 = arith.mulf %179, %181 : vector<8x1024xf32>
    %c56_61 = arith.constant 56 : index
    %c0_62 = arith.constant 0 : index
    %183 = vector.load %arg7[%c56_61, %c0_62] : memref<216x1024xf32, #tpu.memory_space<vmem>>, vector<8x1024xf32>
    tpu.vector_store %arg7[%c56_61, %c0_62], %182 {strides = array<i32>} : memref<216x1024xf32, #tpu.memory_space<vmem>>, vector<8x1024xf32>,
    %c55_i32_63 = arith.constant 55 : i32
    %184 = tpu.dynamic_rotate %143 by %c55_i32_63 dim 1 : vector<8x1024xf32>, i32 -> vector<8x1024xf32>
    %185 = vector.extract_strided_slice %1 {offsets = [8, 0], sizes = [1, 1024], strides = [1, 1]} : vector<27x1024xf32> to vector<1x1024xf32>
    %186 = vector.broadcast %185 : vector<1x1024xf32> to vector<8x1024xf32>
    %187 = arith.mulf %184, %186 : vector<8x1024xf32>
    %c64_64 = arith.constant 64 : index
    %c0_65 = arith.constant 0 : index
    %188 = vector.load %arg7[%c64_64, %c0_65] : memref<216x1024xf32, #tpu.memory_space<vmem>>, vector<8x1024xf32>
    tpu.vector_store %arg7[%c64_64, %c0_65], %187 {strides = array<i32>} : memref<216x1024xf32, #tpu.memory_space<vmem>>, vector<8x1024xf32>,
    %c9_i32_66 = arith.constant 9 : i32
    %189 = tpu.dynamic_rotate %143 by %c9_i32_66 dim 1 : vector<8x1024xf32>, i32 -> vector<8x1024xf32>
    %190 = vector.extract_strided_slice %1 {offsets = [9, 0], sizes = [1, 1024], strides = [1, 1]} : vector<27x1024xf32> to vector<1x1024xf32>
    %191 = vector.broadcast %190 : vector<1x1024xf32> to vector<8x1024xf32>
    %192 = arith.mulf %189, %191 : vector<8x1024xf32>
    %c72_67 = arith.constant 72 : index
    %c0_68 = arith.constant 0 : index
    %193 = vector.load %arg7[%c72_67, %c0_68] : memref<216x1024xf32, #tpu.memory_space<vmem>>, vector<8x1024xf32>
    tpu.vector_store %arg7[%c72_67, %c0_68], %192 {strides = array<i32>} : memref<216x1024xf32, #tpu.memory_space<vmem>>, vector<8x1024xf32>,
    %c8_i32_69 = arith.constant 8 : i32
    %194 = tpu.dynamic_rotate %143 by %c8_i32_69 dim 1 : vector<8x1024xf32>, i32 -> vector<8x1024xf32>
    %195 = vector.extract_strided_slice %1 {offsets = [10, 0], sizes = [1, 1024], strides = [1, 1]} : vector<27x1024xf32> to vector<1x1024xf32>
    %196 = vector.broadcast %195 : vector<1x1024xf32> to vector<8x1024xf32>
    %197 = arith.mulf %194, %196 : vector<8x1024xf32>
    %c80_70 = arith.constant 80 : index
    %c0_71 = arith.constant 0 : index
    %198 = vector.load %arg7[%c80_70, %c0_71] : memref<216x1024xf32, #tpu.memory_space<vmem>>, vector<8x1024xf32>
    tpu.vector_store %arg7[%c80_70, %c0_71], %197 {strides = array<i32>} : memref<216x1024xf32, #tpu.memory_space<vmem>>, vector<8x1024xf32>,
    %c7_i32_72 = arith.constant 7 : i32
    %199 = tpu.dynamic_rotate %143 by %c7_i32_72 dim 1 : vector<8x1024xf32>, i32 -> vector<8x1024xf32>
    %200 = vector.extract_strided_slice %1 {offsets = [11, 0], sizes = [1, 1024], strides = [1, 1]} : vector<27x1024xf32> to vector<1x1024xf32>
    %201 = vector.broadcast %200 : vector<1x1024xf32> to vector<8x1024xf32>
    %202 = arith.mulf %199, %201 : vector<8x1024xf32>
    %c88_73 = arith.constant 88 : index
    %c0_74 = arith.constant 0 : index
    %203 = vector.load %arg7[%c88_73, %c0_74] : memref<216x1024xf32, #tpu.memory_space<vmem>>, vector<8x1024xf32>
    tpu.vector_store %arg7[%c88_73, %c0_74], %202 {strides = array<i32>} : memref<216x1024xf32, #tpu.memory_space<vmem>>, vector<8x1024xf32>,
    %c1_i32_75 = arith.constant 1 : i32
    %204 = tpu.dynamic_rotate %143 by %c1_i32_75 dim 1 : vector<8x1024xf32>, i32 -> vector<8x1024xf32>
    %205 = vector.extract_strided_slice %1 {offsets = [12, 0], sizes = [1, 1024], strides = [1, 1]} : vector<27x1024xf32> to vector<1x1024xf32>
    %206 = vector.broadcast %205 : vector<1x1024xf32> to vector<8x1024xf32>
    %207 = arith.mulf %204, %206 : vector<8x1024xf32>
    %c96_76 = arith.constant 96 : index
    %c0_77 = arith.constant 0 : index
    %208 = vector.load %arg7[%c96_76, %c0_77] : memref<216x1024xf32, #tpu.memory_space<vmem>>, vector<8x1024xf32>
    tpu.vector_store %arg7[%c96_76, %c0_77], %207 {strides = array<i32>} : memref<216x1024xf32, #tpu.memory_space<vmem>>, vector<8x1024xf32>,
    %c104_78 = arith.constant 104 : index
    %c0_79 = arith.constant 0 : index
    %209 = vector.load %arg7[%c104_78, %c0_79] : memref<216x1024xf32, #tpu.memory_space<vmem>>, vector<8x1024xf32>
    tpu.vector_store %arg7[%c104_78, %c0_79], %143 {strides = array<i32>} : memref<216x1024xf32, #tpu.memory_space<vmem>>, vector<8x1024xf32>,
    %c1023_i32_80 = arith.constant 1023 : i32
    %210 = tpu.dynamic_rotate %143 by %c1023_i32_80 dim 1 : vector<8x1024xf32>, i32 -> vector<8x1024xf32>
    %211 = vector.extract_strided_slice %1 {offsets = [14, 0], sizes = [1, 1024], strides = [1, 1]} : vector<27x1024xf32> to vector<1x1024xf32>
    %212 = vector.broadcast %211 : vector<1x1024xf32> to vector<8x1024xf32>
    %213 = arith.mulf %210, %212 : vector<8x1024xf32>
    %c112_81 = arith.constant 112 : index
    %c0_82 = arith.constant 0 : index
    %214 = vector.load %arg7[%c112_81, %c0_82] : memref<216x1024xf32, #tpu.memory_space<vmem>>, vector<8x1024xf32>
    tpu.vector_store %arg7[%c112_81, %c0_82], %213 {strides = array<i32>} : memref<216x1024xf32, #tpu.memory_space<vmem>>, vector<8x1024xf32>,
    %c1017_i32_83 = arith.constant 1017 : i32
    %215 = tpu.dynamic_rotate %143 by %c1017_i32_83 dim 1 : vector<8x1024xf32>, i32 -> vector<8x1024xf32>
    %216 = vector.extract_strided_slice %1 {offsets = [15, 0], sizes = [1, 1024], strides = [1, 1]} : vector<27x1024xf32> to vector<1x1024xf32>
    %217 = vector.broadcast %216 : vector<1x1024xf32> to vector<8x1024xf32>
    %218 = arith.mulf %215, %217 : vector<8x1024xf32>
    %c120_84 = arith.constant 120 : index
    %c0_85 = arith.constant 0 : index
    %219 = vector.load %arg7[%c120_84, %c0_85] : memref<216x1024xf32, #tpu.memory_space<vmem>>, vector<8x1024xf32>
    tpu.vector_store %arg7[%c120_84, %c0_85], %218 {strides = array<i32>} : memref<216x1024xf32, #tpu.memory_space<vmem>>, vector<8x1024xf32>,
    %c1016_i32_86 = arith.constant 1016 : i32
    %220 = tpu.dynamic_rotate %143 by %c1016_i32_86 dim 1 : vector<8x1024xf32>, i32 -> vector<8x1024xf32>
    %221 = vector.extract_strided_slice %1 {offsets = [16, 0], sizes = [1, 1024], strides = [1, 1]} : vector<27x1024xf32> to vector<1x1024xf32>
    %222 = vector.broadcast %221 : vector<1x1024xf32> to vector<8x1024xf32>
    %223 = arith.mulf %220, %222 : vector<8x1024xf32>
    %c128_87 = arith.constant 128 : index
    %c0_88 = arith.constant 0 : index
    %224 = vector.load %arg7[%c128_87, %c0_88] : memref<216x1024xf32, #tpu.memory_space<vmem>>, vector<8x1024xf32>
    tpu.vector_store %arg7[%c128_87, %c0_88], %223 {strides = array<i32>} : memref<216x1024xf32, #tpu.memory_space<vmem>>, vector<8x1024xf32>,
    %c1015_i32_89 = arith.constant 1015 : i32
    %225 = tpu.dynamic_rotate %143 by %c1015_i32_89 dim 1 : vector<8x1024xf32>, i32 -> vector<8x1024xf32>
    %226 = vector.extract_strided_slice %1 {offsets = [17, 0], sizes = [1, 1024], strides = [1, 1]} : vector<27x1024xf32> to vector<1x1024xf32>
    %227 = vector.broadcast %226 : vector<1x1024xf32> to vector<8x1024xf32>
    %228 = arith.mulf %225, %227 : vector<8x1024xf32>
    %c136_90 = arith.constant 136 : index
    %c0_91 = arith.constant 0 : index
    %229 = vector.load %arg7[%c136_90, %c0_91] : memref<216x1024xf32, #tpu.memory_space<vmem>>, vector<8x1024xf32>
    tpu.vector_store %arg7[%c136_90, %c0_91], %228 {strides = array<i32>} : memref<216x1024xf32, #tpu.memory_space<vmem>>, vector<8x1024xf32>,
    %c969_i32_92 = arith.constant 969 : i32
    %230 = tpu.dynamic_rotate %143 by %c969_i32_92 dim 1 : vector<8x1024xf32>, i32 -> vector<8x1024xf32>
    %231 = vector.extract_strided_slice %1 {offsets = [18, 0], sizes = [1, 1024], strides = [1, 1]} : vector<27x1024xf32> to vector<1x1024xf32>
    %232 = vector.broadcast %231 : vector<1x1024xf32> to vector<8x1024xf32>
    %233 = arith.mulf %230, %232 : vector<8x1024xf32>
    %c144_93 = arith.constant 144 : index
    %c0_94 = arith.constant 0 : index
    %234 = vector.load %arg7[%c144_93, %c0_94] : memref<216x1024xf32, #tpu.memory_space<vmem>>, vector<8x1024xf32>
    tpu.vector_store %arg7[%c144_93, %c0_94], %233 {strides = array<i32>} : memref<216x1024xf32, #tpu.memory_space<vmem>>, vector<8x1024xf32>,
    %c968_i32_95 = arith.constant 968 : i32
    %235 = tpu.dynamic_rotate %143 by %c968_i32_95 dim 1 : vector<8x1024xf32>, i32 -> vector<8x1024xf32>
    %236 = vector.extract_strided_slice %1 {offsets = [19, 0], sizes = [1, 1024], strides = [1, 1]} : vector<27x1024xf32> to vector<1x1024xf32>
    %237 = vector.broadcast %236 : vector<1x1024xf32> to vector<8x1024xf32>
    %238 = arith.mulf %235, %237 : vector<8x1024xf32>
    %c152_96 = arith.constant 152 : index
    %c0_97 = arith.constant 0 : index
    %239 = vector.load %arg7[%c152_96, %c0_97] : memref<216x1024xf32, #tpu.memory_space<vmem>>, vector<8x1024xf32>
    tpu.vector_store %arg7[%c152_96, %c0_97], %238 {strides = array<i32>} : memref<216x1024xf32, #tpu.memory_space<vmem>>, vector<8x1024xf32>,
    %c967_i32_98 = arith.constant 967 : i32
    %240 = tpu.dynamic_rotate %143 by %c967_i32_98 dim 1 : vector<8x1024xf32>, i32 -> vector<8x1024xf32>
    %241 = vector.extract_strided_slice %1 {offsets = [20, 0], sizes = [1, 1024], strides = [1, 1]} : vector<27x1024xf32> to vector<1x1024xf32>
    %242 = vector.broadcast %241 : vector<1x1024xf32> to vector<8x1024xf32>
    %243 = arith.mulf %240, %242 : vector<8x1024xf32>
    %c160_99 = arith.constant 160 : index
    %c0_100 = arith.constant 0 : index
    %244 = vector.load %arg7[%c160_99, %c0_100] : memref<216x1024xf32, #tpu.memory_space<vmem>>, vector<8x1024xf32>
    tpu.vector_store %arg7[%c160_99, %c0_100], %243 {strides = array<i32>} : memref<216x1024xf32, #tpu.memory_space<vmem>>, vector<8x1024xf32>,
    %c961_i32_101 = arith.constant 961 : i32
    %245 = tpu.dynamic_rotate %143 by %c961_i32_101 dim 1 : vector<8x1024xf32>, i32 -> vector<8x1024xf32>
    %246 = vector.extract_strided_slice %1 {offsets = [21, 0], sizes = [1, 1024], strides = [1, 1]} : vector<27x1024xf32> to vector<1x1024xf32>
    %247 = vector.broadcast %246 : vector<1x1024xf32> to vector<8x1024xf32>
    %248 = arith.mulf %245, %247 : vector<8x1024xf32>
    %c168_102 = arith.constant 168 : index
    %c0_103 = arith.constant 0 : index
    %249 = vector.load %arg7[%c168_102, %c0_103] : memref<216x1024xf32, #tpu.memory_space<vmem>>, vector<8x1024xf32>
    tpu.vector_store %arg7[%c168_102, %c0_103], %248 {strides = array<i32>} : memref<216x1024xf32, #tpu.memory_space<vmem>>, vector<8x1024xf32>,
    %c960_i32_104 = arith.constant 960 : i32
    %250 = tpu.dynamic_rotate %143 by %c960_i32_104 dim 1 : vector<8x1024xf32>, i32 -> vector<8x1024xf32>
    %251 = vector.extract_strided_slice %1 {offsets = [22, 0], sizes = [1, 1024], strides = [1, 1]} : vector<27x1024xf32> to vector<1x1024xf32>
    %252 = vector.broadcast %251 : vector<1x1024xf32> to vector<8x1024xf32>
    %253 = arith.mulf %250, %252 : vector<8x1024xf32>
    %c176_105 = arith.constant 176 : index
    %c0_106 = arith.constant 0 : index
    %254 = vector.load %arg7[%c176_105, %c0_106] : memref<216x1024xf32, #tpu.memory_space<vmem>>, vector<8x1024xf32>
    tpu.vector_store %arg7[%c176_105, %c0_106], %253 {strides = array<i32>} : memref<216x1024xf32, #tpu.memory_space<vmem>>, vector<8x1024xf32>,
    %c959_i32_107 = arith.constant 959 : i32
    %255 = tpu.dynamic_rotate %143 by %c959_i32_107 dim 1 : vector<8x1024xf32>, i32 -> vector<8x1024xf32>
    %256 = vector.extract_strided_slice %1 {offsets = [23, 0], sizes = [1, 1024], strides = [1, 1]} : vector<27x1024xf32> to vector<1x1024xf32>
    %257 = vector.broadcast %256 : vector<1x1024xf32> to vector<8x1024xf32>
    %258 = arith.mulf %255, %257 : vector<8x1024xf32>
    %c184_108 = arith.constant 184 : index
    %c0_109 = arith.constant 0 : index
    %259 = vector.load %arg7[%c184_108, %c0_109] : memref<216x1024xf32, #tpu.memory_space<vmem>>, vector<8x1024xf32>
    tpu.vector_store %arg7[%c184_108, %c0_109], %258 {strides = array<i32>} : memref<216x1024xf32, #tpu.memory_space<vmem>>, vector<8x1024xf32>,
    %c953_i32_110 = arith.constant 953 : i32
    %260 = tpu.dynamic_rotate %143 by %c953_i32_110 dim 1 : vector<8x1024xf32>, i32 -> vector<8x1024xf32>
    %261 = vector.extract_strided_slice %1 {offsets = [24, 0], sizes = [1, 1024], strides = [1, 1]} : vector<27x1024xf32> to vector<1x1024xf32>
    %262 = vector.broadcast %261 : vector<1x1024xf32> to vector<8x1024xf32>
    %263 = arith.mulf %260, %262 : vector<8x1024xf32>
    %c192_111 = arith.constant 192 : index
    %c0_112 = arith.constant 0 : index
    %264 = vector.load %arg7[%c192_111, %c0_112] : memref<216x1024xf32, #tpu.memory_space<vmem>>, vector<8x1024xf32>
    tpu.vector_store %arg7[%c192_111, %c0_112], %263 {strides = array<i32>} : memref<216x1024xf32, #tpu.memory_space<vmem>>, vector<8x1024xf32>,
    %c952_i32_113 = arith.constant 952 : i32
    %265 = tpu.dynamic_rotate %143 by %c952_i32_113 dim 1 : vector<8x1024xf32>, i32 -> vector<8x1024xf32>
    %266 = vector.extract_strided_slice %1 {offsets = [25, 0], sizes = [1, 1024], strides = [1, 1]} : vector<27x1024xf32> to vector<1x1024xf32>
    %267 = vector.broadcast %266 : vector<1x1024xf32> to vector<8x1024xf32>
    %268 = arith.mulf %265, %267 : vector<8x1024xf32>
    %c200_114 = arith.constant 200 : index
    %c0_115 = arith.constant 0 : index
    %269 = vector.load %arg7[%c200_114, %c0_115] : memref<216x1024xf32, #tpu.memory_space<vmem>>, vector<8x1024xf32>
    tpu.vector_store %arg7[%c200_114, %c0_115], %268 {strides = array<i32>} : memref<216x1024xf32, #tpu.memory_space<vmem>>, vector<8x1024xf32>,
    %c951_i32_116 = arith.constant 951 : i32
    %270 = tpu.dynamic_rotate %143 by %c951_i32_116 dim 1 : vector<8x1024xf32>, i32 -> vector<8x1024xf32>
    %271 = vector.extract_strided_slice %1 {offsets = [26, 0], sizes = [1, 1024], strides = [1, 1]} : vector<27x1024xf32> to vector<1x1024xf32>
    %272 = vector.broadcast %271 : vector<1x1024xf32> to vector<8x1024xf32>
    %273 = arith.mulf %270, %272 : vector<8x1024xf32>
    %c208_117 = arith.constant 208 : index
    %c0_118 = arith.constant 0 : index
    %274 = vector.load %arg7[%c208_117, %c0_118] : memref<216x1024xf32, #tpu.memory_space<vmem>>, vector<8x1024xf32>
    tpu.vector_store %arg7[%c208_117, %c0_118], %273 {strides = array<i32>} : memref<216x1024xf32, #tpu.memory_space<vmem>>, vector<8x1024xf32>,
    %c0_119 = arith.constant 0 : index
    %c0_120 = arith.constant 0 : index
    %275 = vector.load %arg3[%c0_119, %c0_120] : memref<8x216xf32, #tpu.memory_space<vmem>>, vector<8x216xf32>
    %c0_121 = arith.constant 0 : index
    %c0_122 = arith.constant 0 : index
    %276 = vector.load %arg7[%c0_121, %c0_122] : memref<216x1024xf32, #tpu.memory_space<vmem>>, vector<216x1024xf32>
    %cst_123 = arith.constant dense<0.000000e+00> : vector<8x1024xf32>
    %277 = tpu.matmul %275, %276, %cst_123 {dimension_numbers = #tpu.dot_dimension_numbers<[1], [0], [0], [1], [0, 0, 1, 1], [], []>} : vector<8x216xf32>, vector<216x1024xf32>, vector<8x1024xf32> -> vector<8x1024xf32>
    %278 = vector.broadcast %2 : vector<8x1xf32> to vector<8x1024xf32>
    %279 = arith.addf %277, %278 : vector<8x1024xf32>
    %280 = arith.addf %279, %0 : vector<8x1024xf32>
    %cst_124 = arith.constant 0.000000e+00 : f32
    %281 = vector.broadcast %cst_124 : f32 to vector<8x1024xf32>
    %282 = arith.cmpf oge, %280, %281 : vector<8x1024xf32>
    %cst_125 = arith.constant 0.00999999977 : f32
    %283 = vector.broadcast %cst_125 : f32 to vector<8x1024xf32>
    %284 = arith.mulf %283, %280 : vector<8x1024xf32>
    %285 = arith.select %282, %280, %284 : vector<8x1024xi1>, vector<8x1024xf32>
    %c0_126 = arith.constant 0 : index
    %c0_127 = arith.constant 0 : index
    %286 = vector.load %arg6[%c0_126, %c0_127] : memref<8x1024xf32, #tpu.memory_space<vmem>>, vector<8x1024xf32>
    tpu.vector_store %arg6[%c0_126, %c0_127], %285 {strides = array<i32>} : memref<8x1024xf32, #tpu.memory_space<vmem>>, vector<8x1024xf32>,
    return
  }
  func.func @transform_0(%arg0: i32) -> (i32, i32) {
    %c0_i32 = arith.constant 0 : i32
    %c0_i32_0 = arith.constant 0 : i32
    return %c0_i32, %arg0 : i32, i32
  }
  func.func @transform_1(%arg0: i32) -> (i32, i32) {
    %c0_i32 = arith.constant 0 : i32
    %c0_i32_0 = arith.constant 0 : i32
    %c0_i32_1 = arith.constant 0 : i32
    return %c0_i32, %c0_i32_0 : i32, i32
  }
  func.func @transform_2(%arg0: i32) -> (i32, i32) {
    %c0_i32 = arith.constant 0 : i32
    %c0_i32_0 = arith.constant 0 : i32
    %c0_i32_1 = arith.constant 0 : i32
    return %c0_i32, %c0_i32_0 : i32, i32
  }
  func.func @transform_3(%arg0: i32) -> (i32, i32) {
    %c0_i32 = arith.constant 0 : i32
    %c0_i32_0 = arith.constant 0 : i32
    %c0_i32_1 = arith.constant 0 : i32
    return %c0_i32, %c0_i32_0 : i32, i32
  }
  func.func @transform_4(%arg0: i32) -> (i32, i32) {
    %c0_i32 = arith.constant 0 : i32
    %c0_i32_0 = arith.constant 0 : i32
    %c0_i32_1 = arith.constant 0 : i32
    return %c0_i32, %c0_i32_0 : i32, i32
  }
  func.func @transform_5(%arg0: i32) -> (i32, i32) {
    %c0_i32 = arith.constant 0 : i32
    %c0_i32_0 = arith.constant 0 : i32
    return %c0_i32, %arg0 : i32, i32
  }
}

</mosaic_0001>

<llo_original>
// kernel: tpu_custom_call.1
$region0: #{tpu_custom_call.1}
  #allocation0 [shape = 'u32[]', space=smem, size = 0x4, offset = 0x4, fixed_abs, tag = 'smem constant byte address 0x4 - core index']
  #allocation1 [shape = 'u32[144,128]{1,0:T(1,128)}', space=vmem, size = 0x12000, scoped, tag = 'internal scratch']
  #allocation2 [shape = 'f32[216,1024]{1,0:T(8,128)}', space=vmem, size = 0xd8000, scoped, tag = 'scratch operand']
  %s0 = inlined_call_operand.hbm [shape: f32[8,2048], index: 0, kind: input, shape index: {}]
  %s1 = inlined_call_operand.hbm [shape: f32[8,216], index: 1, kind: input, shape index: {}]
  %s2 = inlined_call_operand.hbm [shape: f32[8,216], index: 2, kind: input, shape index: {}]
  %s3 = inlined_call_operand.vmem [shape: f32[8,1], index: 3, kind: input, shape index: {}]
  %s4 = inlined_call_operand.hbm [shape: f32[27,1024], index: 4, kind: input, shape index: {}]
  %s5 = inlined_call_operand.hbm [shape: f32[8,2048], index: 5, kind: output, shape index: {}]
  %s6 = sld [smem:[#allocation0]]
  $region69: #{tpu_custom_call.1} parent=0
    _
  %s8 = ssub.s32 1, %s6
  %s9 = scalar_select 0, %s8, %s6
  $region1: #{tpu_custom_call.1} parent=0
    #allocation3 [shape = 'u8[65536]{0}', space=vmem, size = 0x10000, scoped, tag = 'input window, operand 0']
    #allocation4 [shape = 's32[2]{0}', space=sflag, size = 0x8, scoped, tag = 'scoped memory for tpu_custom_call.1']
    #allocation5 [shape = 's32[2]{0}', space=sflag, size = 0x8, scoped, tag = 'scoped memory for tpu_custom_call.1']
    #allocation6 [shape = 'u8[8192]{0}', space=vmem, size = 0x2000, scoped, tag = 'input window, operand 1, single buffered']
    #allocation7 [shape = 's32[1]{0}', space=sflag, size = 0x4, scoped, tag = 'scoped memory for tpu_custom_call.1']
    #allocation8 [shape = 'u8[8192]{0}', space=vmem, size = 0x2000, scoped, tag = 'input window, operand 2, single buffered']
    #allocation9 [shape = 'u8[131072]{0}', space=vmem, size = 0x20000, scoped, tag = 'input window, operand 4, single buffered']
    #allocation10 [shape = 's32[1]{0}', space=sflag, size = 0x4, scoped, tag = 'scoped memory for tpu_custom_call.1']
    #allocation11 [shape = 'u8[65536]{0}', space=vmem, size = 0x10000, scoped, tag = 'output window, operand 0']
    %10 = vsyncpa [#allocation4], 0
    %s11 = scalar_lea.sflag [#allocation4], 1
    %12 = vsyncpa %s11, 0
    %13 = vsyncpa [#allocation7], 0
    %14 = vsyncpa [#allocation10], 0
    %15 = vsyncpa [#allocation5], 0
    %s16 = scalar_lea.sflag [#allocation5], 1
    %17 = vsyncpa %s16, 0
    loop: start=0, step=1, limit=4
    $region2: #{tpu_custom_call.1} parent=1 // loop_pre_header
      _
    $region3: #{tpu_custom_call.1} parent=1 // loop_header
      %s19 = sphi 0, %s23
      %p20 = scmp.ge.s32.totalorder %s19, 4
      %s29 = sphi 0, %s31
      %s32 = sphi 0, %s29
      %s33 = sphi 0, %s32
      %s49 = sphi 0, %s33
      %s53 = sphi 0, %s53
      %s55 = sphi 0, %s53
      %s56 = sphi 0, %s55
      %s70 = sphi 0, %s56
      %s74 = sphi 0, %s74
      %s76 = sphi 0, %s74
      %s77 = sphi 0, %s76
      %s91 = sphi 0, %s77
      %s95 = sphi 0, %s95
      %s97 = sphi 0, %s95
      %s98 = sphi 0, %s97
      %s112 = sphi 0, %s98
      %s116 = sphi 0, %s116
      %s118 = sphi 0, %s116
      %s119 = sphi 0, %s118
      %s133 = sphi 0, %s119
      %s139 = sphi 0, %s141
      %s142 = sphi 0, %s139
      %s143 = sphi 0, %s142
      %s159 = sphi 0, %s143
    $region4: #{tpu_custom_call.1} parent=1 // loop_header_branch
      %22 = sbr.rel (%p20) target = $region8
    $region5: #{tpu_custom_call.1} parent=1 // loop_body
      %s24 = ssub.s32 %s19, 1
      %s25 = ssub.s32 %s19, 2
      %s26 = sadd.s32 %s19, 1
      %s27 = ssub.s32 %s19, %s26
      %p28 = scmp.eq.s32.totalorder %s27, 0
      %s30 = sadd.s32 %s29, 1
      %s31 = scalar_select %p28, %s29, %s30
      %p34 = pneg %p28
      %p35 = scmp.eq.s32.totalorder %s19, 1
      %p36 = por %p34, %p35
      %p37 = scmp.ne.s32.totalorder %s29, %s32
      %p38 = scmp.eq.s32.totalorder %s19, 0
      %p39 = por %p37, %p38
      %p40 = scmp.ne.s32.totalorder %s29, %s32
      %p41 = scmp.eq.s32.totalorder %s24, 1
      %p42 = por %p40, %p41
      %p43 = scmp.ne.s32.totalorder %s32, %s33
      %p44 = scmp.eq.s32.totalorder %s24, 0
      %p45 = por %p43, %p44
      %p46 = scmp.ne.s32.totalorder %s32, %s33
      %p47 = scmp.eq.s32.totalorder %s25, 1
      %p48 = por %p46, %p47
      %p50 = scmp.ne.s32.totalorder %s33, %s49
      %p51 = scmp.eq.s32.totalorder %s25, 0
      %p52 = por %p50, %p51
      %s54 = sadd.s32 %s53, 1
      %p57 = scmp.eq.s32.totalorder %s19, 1
      %p58 = scmp.ne.s32.totalorder %s53, %s55
      %p59 = scmp.eq.s32.totalorder %s19, 0
      %p60 = por %p58, %p59
      %p61 = scmp.ne.s32.totalorder %s53, %s55
      %p62 = scmp.eq.s32.totalorder %s24, 1
      %p63 = por %p61, %p62
      %p64 = scmp.ne.s32.totalorder %s55, %s56
      %p65 = scmp.eq.s32.totalorder %s24, 0
      %p66 = por %p64, %p65
      %p67 = scmp.ne.s32.totalorder %s55, %s56
      %p68 = scmp.eq.s32.totalorder %s25, 1
      %p69 = por %p67, %p68
      %p71 = scmp.ne.s32.totalorder %s56, %s70
      %p72 = scmp.eq.s32.totalorder %s25, 0
      %p73 = por %p71, %p72
      %s75 = sadd.s32 %s74, 1
      %p78 = scmp.eq.s32.totalorder %s19, 1
      %p79 = scmp.ne.s32.totalorder %s74, %s76
      %p80 = scmp.eq.s32.totalorder %s19, 0
      %p81 = por %p79, %p80
      %p82 = scmp.ne.s32.totalorder %s74, %s76
      %p83 = scmp.eq.s32.totalorder %s24, 1
      %p84 = por %p82, %p83
      %p85 = scmp.ne.s32.totalorder %s76, %s77
      %p86 = scmp.eq.s32.totalorder %s24, 0
      %p87 = por %p85, %p86
      %p88 = scmp.ne.s32.totalorder %s76, %s77
      %p89 = scmp.eq.s32.totalorder %s25, 1
      %p90 = por %p88, %p89
      %p92 = scmp.ne.s32.totalorder %s77, %s91
      %p93 = scmp.eq.s32.totalorder %s25, 0
      %p94 = por %p92, %p93
      %s96 = sadd.s32 %s95, 1
      %p99 = scmp.eq.s32.totalorder %s19, 1
      %p100 = scmp.ne.s32.totalorder %s95, %s97
      %p101 = scmp.eq.s32.totalorder %s19, 0
      %p102 = por %p100, %p101
      %p103 = scmp.ne.s32.totalorder %s95, %s97
      %p104 = scmp.eq.s32.totalorder %s24, 1
      %p105 = por %p103, %p104
      %p106 = scmp.ne.s32.totalorder %s97, %s98
      %p107 = scmp.eq.s32.totalorder %s24, 0
      %p108 = por %p106, %p107
      %p109 = scmp.ne.s32.totalorder %s97, %s98
      %p110 = scmp.eq.s32.totalorder %s25, 1
      %p111 = por %p109, %p110
      %p113 = scmp.ne.s32.totalorder %s98, %s112
      %p114 = scmp.eq.s32.totalorder %s25, 0
      %p115 = por %p113, %p114
      %s117 = sadd.s32 %s116, 1
      %p120 = scmp.eq.s32.totalorder %s19, 1
      %p121 = scmp.ne.s32.totalorder %s116, %s118
      %p122 = scmp.eq.s32.totalorder %s19, 0
      %p123 = por %p121, %p122
      %p124 = scmp.ne.s32.totalorder %s116, %s118
      %p125 = scmp.eq.s32.totalorder %s24, 1
      %p126 = por %p124, %p125
      %p127 = scmp.ne.s32.totalorder %s118, %s119
      %p128 = scmp.eq.s32.totalorder %s24, 0
      %p129 = por %p127, %p128
      %p130 = scmp.ne.s32.totalorder %s118, %s119
      %p131 = scmp.eq.s32.totalorder %s25, 1
      %p132 = por %p130, %p131
      %p134 = scmp.ne.s32.totalorder %s119, %s133
      %p135 = scmp.eq.s32.totalorder %s25, 0
      %p136 = por %p134, %p135
      %s137 = ssub.s32 %s19, %s26
      %p138 = scmp.eq.s32.totalorder %s137, 0
      %s140 = sadd.s32 %s139, 1
      %s141 = scalar_select %p138, %s139, %s140
      %p144 = pneg %p138
      %p145 = scmp.eq.s32.totalorder %s19, 1
      %p146 = por %p144, %p145
      %p147 = scmp.ne.s32.totalorder %s139, %s142
      %p148 = scmp.eq.s32.totalorder %s19, 0
      %p149 = por %p147, %p148
      %p150 = scmp.ne.s32.totalorder %s139, %s142
      %p151 = scmp.eq.s32.totalorder %s24, 1
      %p152 = por %p150, %p151
      %p153 = scmp.ne.s32.totalorder %s142, %s143
      %p154 = scmp.eq.s32.totalorder %s24, 0
      %p155 = por %p153, %p154
      %p156 = scmp.ne.s32.totalorder %s142, %s143
      %p157 = scmp.eq.s32.totalorder %s25, 1
      %p158 = por %p156, %p157
      %p160 = scmp.ne.s32.totalorder %s143, %s159
      %p161 = scmp.eq.s32.totalorder %s25, 0
      %p162 = por %p160, %p161
      %p163 = scmp.le.s32.totalorder 1, %s19
      %p164 = scmp.lt.s32.totalorder %s19, 3
      %p165 = pnand %p163, %p164
      %p166 = pneg %p165
      // Predicated region
      $region9: #{tpu_custom_call.1} parent=5 // pred_check
        _
      $region10: #{tpu_custom_call.1} parent=5 // pred_check_branch
        %168 = sbr.rel (%p165) target = $region12
      $region11: #{tpu_custom_call.1} parent=5 // pred_region
        %s169 = ssub.s32 %s19, 1
        // Predicated region
        $region13: #{tpu_custom_call.1} parent=11 // pred_check
          %p170 = pneg %p66
        $region14: #{tpu_custom_call.1} parent=11 // pred_check_branch
          %172 = sbr.rel (%p170) target = $region16
        $region15: #{tpu_custom_call.1} parent=11 // pred_region
          %s174 = ssub.s32 256, 256
          %175 = vsyncadd [#allocation7], %s174
          %s177 = sshll.u32 [#allocation6], 4
          %s178 = int_to_ptr.vmem [resolvable:$true] %s177
          %180 = dma.hbm_to_vmem [thread:$0]  %s1, 256, %s178, [#allocation7]
        $region16: #{tpu_custom_call.1} parent=11 // pred_fallthru
          _
        // Predicated region
        $region17: #{tpu_custom_call.1} parent=11 // pred_check
          %p181 = pneg %p87
        $region18: #{tpu_custom_call.1} parent=11 // pred_check_branch
          %183 = sbr.rel (%p181) target = $region20
        $region19: #{tpu_custom_call.1} parent=11 // pred_region
          %s185 = ssub.s32 256, 256
          %186 = vsyncadd [#allocation7], %s185
          %s188 = sshll.u32 [#allocation8], 4
          %s189 = int_to_ptr.vmem [resolvable:$true] %s188
          %191 = dma.hbm_to_vmem [thread:$0]  %s2, 256, %s189, [#allocation7]
        $region20: #{tpu_custom_call.1} parent=11 // pred_fallthru
          _
        // Predicated region
        $region21: #{tpu_custom_call.1} parent=11 // pred_check
          %p192 = pneg %p108
        $region22: #{tpu_custom_call.1} parent=11 // pred_check_branch
          %194 = sbr.rel (%p192) target = $region24
        $region23: #{tpu_custom_call.1} parent=11 // pred_region
          _
        $region24: #{tpu_custom_call.1} parent=11 // pred_fallthru
          _
        // Predicated region
        $region25: #{tpu_custom_call.1} parent=11 // pred_check
          %p195 = pneg %p129
        $region26: #{tpu_custom_call.1} parent=11 // pred_check_branch
          %197 = sbr.rel (%p195) target = $region28
        $region27: #{tpu_custom_call.1} parent=11 // pred_region
          %s199 = ssub.s32 4096, 4096
          %200 = vsyncadd [#allocation10], %s199
          %s201 = sshll.u32 [#allocation9], 4
          %s202 = int_to_ptr.vmem [resolvable:$true] %s201
          %207 = dma.hbm_to_vmem [thread:$0]  %s4, 4096, %s202, [#allocation10], 1024, 1024, 64
        $region28: #{tpu_custom_call.1} parent=11 // pred_fallthru
          _
      $region12: #{tpu_custom_call.1} parent=5 // pred_fallthru
        _
      %p208 = scmp.lt.s32.totalorder %s19, 2
      // Predicated region
      $region29: #{tpu_custom_call.1} parent=5 // pred_check
        %p209 = pneg %p208
      $region30: #{tpu_custom_call.1} parent=5 // pred_check_branch
        %211 = sbr.rel (%p209) target = $region32
      $region31: #{tpu_custom_call.1} parent=5 // pred_region
        // Predicated region
        $region33: #{tpu_custom_call.1} parent=31 // pred_check
          %p212 = pneg %p39
        $region34: #{tpu_custom_call.1} parent=31 // pred_check_branch
          %214 = sbr.rel (%p212) target = $region36
        $region35: #{tpu_custom_call.1} parent=31 // pred_region
          %s215 = sand.u32 %s29, 1
          %s216 = scalar_lea.sflag [#allocation4], %s215
          %s217 = sand.u32 %s29, 1
          %s218 = smul.addr %s217, 64
          %s219 = scalar_lea.vmem [#allocation3], %s218
          %s220 = smul.u32 8, %s19
          %s222 = ssub.s32 1024, 1024
          %223 = vsyncadd %s216, %s222
          %s224 = smul.addr %s220, 128
          %s225 = scalar_lea.hbm %s0, %s224
          %s227 = sshll.u32 %s219, 4
          %s228 = int_to_ptr.vmem [resolvable:$true] %s227
          %230 = dma.hbm_to_vmem [thread:$0]  %s225, 1024, %s228, %s216
        $region36: #{tpu_custom_call.1} parent=31 // pred_fallthru
          _
      $region32: #{tpu_custom_call.1} parent=5 // pred_fallthru
        _
      %p231 = scmp.le.s32.totalorder 1, %s19
      %p232 = scmp.lt.s32.totalorder %s19, 3
      %p233 = pnand %p231, %p232
      %p234 = pneg %p233
      // Predicated region
      $region37: #{tpu_custom_call.1} parent=5 // pred_check
        _
      $region38: #{tpu_custom_call.1} parent=5 // pred_check_branch
        %236 = sbr.rel (%p233) target = $region40
      $region39: #{tpu_custom_call.1} parent=5 // pred_region
        %s237 = ssub.s32 %s19, 1
        %s238 = sand.u32 %s32, 1
        %s239 = scalar_lea.sflag [#allocation4], %s238
        %s240 = sand.u32 %s32, 1
        %s241 = smul.addr %s240, 64
        %s242 = scalar_lea.vmem [#allocation3], %s241
        // Predicated region
        $region41: #{tpu_custom_call.1} parent=39 // pred_check
          %p243 = pneg %p45
        $region42: #{tpu_custom_call.1} parent=39 // pred_check_branch
          %245 = sbr.rel (%p243) target = $region44
        $region43: #{tpu_custom_call.1} parent=39 // pred_region
          %246 = dma.done %s239, 1024
        $region44: #{tpu_custom_call.1} parent=39 // pred_fallthru
          _
        // Predicated region
        $region45: #{tpu_custom_call.1} parent=39 // pred_check
          %p247 = pneg %p66
        $region46: #{tpu_custom_call.1} parent=39 // pred_check_branch
          %249 = sbr.rel (%p247) target = $region48
        $region47: #{tpu_custom_call.1} parent=39 // pred_region
          %250 = dma.done [#allocation7], 256
        $region48: #{tpu_custom_call.1} parent=39 // pred_fallthru
          _
        // Predicated region
        $region49: #{tpu_custom_call.1} parent=39 // pred_check
          %p251 = pneg %p87
        $region50: #{tpu_custom_call.1} parent=39 // pred_check_branch
          %253 = sbr.rel (%p251) target = $region52
        $region51: #{tpu_custom_call.1} parent=39 // pred_region
          %254 = dma.done [#allocation7], 256
        $region52: #{tpu_custom_call.1} parent=39 // pred_fallthru
          _
        // Predicated region
        $region53: #{tpu_custom_call.1} parent=39 // pred_check
          %p255 = pneg %p129
        $region54: #{tpu_custom_call.1} parent=39 // pred_check_branch
          %257 = sbr.rel (%p255) target = $region56
        $region55: #{tpu_custom_call.1} parent=39 // pred_region
          %258 = dma.done [#allocation10], 4096
        $region56: #{tpu_custom_call.1} parent=39 // pred_fallthru
          _
        %s259 = sand.u32 %s32, 1
        %s260 = scalar_lea.sflag [#allocation4], %s259
        %s261 = sand.u32 %s32, 1
        %s262 = smul.addr %s261, 64
        %s263 = scalar_lea.vmem [#allocation3], %s262
        %p264 = pneg %p45
        %p265 = pneg %p42
        %p266 = pneg %p66
        %p267 = pneg %p63
        %p268 = pneg %p87
        %p269 = pneg %p84
        %p270 = pneg %p108
        %p271 = pneg %p105
        %p272 = pneg %p129
        %p273 = pneg %p126
        %p274 = pneg %p155
        %p275 = pneg %p152
        %s276 = sand.u32 %s142, 1
        %s277 = scalar_lea.sflag [#allocation5], %s276
        %s278 = sand.u32 %s142, 1
        %s279 = smul.addr %s278, 64
        %s280 = scalar_lea.vmem [#allocation11], %s279
        %s281 = smul.u32 8, %s24
        %s282 = smul.u32 8, %s24
        %v283 = vld [vmem:[%s242] sm:$0xff]
        %v284 = vld [vmem:[%s242 + $0x8] sm:$0xff]
        %v285 = vld [vmem:[%s242 + $0x10] sm:$0xff]
        %v286 = vld [vmem:[%s242 + $0x18] sm:$0xff]
        %v287 = vld [vmem:[%s242 + $0x20] sm:$0xff]
        %v288 = vld [vmem:[%s242 + $0x28] sm:$0xff]
        %v289 = vld [vmem:[%s242 + $0x30] sm:$0xff]
        %v290 = vld [vmem:[%s242 + $0x38] sm:$0xff]
        %v291 = vld [vmem:[#allocation9] sm:$0xff]
        %v292 = vld [vmem:[#allocation9 + $0x8] sm:$0xff]
        %v293 = vld [vmem:[#allocation9 + $0x10] sm:$0xff]
        %v294 = vld [vmem:[#allocation9 + $0x18] sm:$0xff]
        %v295 = vld [vmem:[#allocation9 + $0x20] sm:$0xff]
        %v296 = vld [vmem:[#allocation9 + $0x28] sm:$0xff]
        %v297 = vld [vmem:[#allocation9 + $0x30] sm:$0xff]
        %v298 = vld [vmem:[#allocation9 + $0x38] sm:$0xff]
        %v299 = vld [vmem:[#allocation9 + $0x40] sm:$0xff]
        %v300 = vld [vmem:[#allocation9 + $0x48] sm:$0xff]
        %v301 = vld [vmem:[#allocation9 + $0x50] sm:$0xff]
        %v302 = vld [vmem:[#allocation9 + $0x58] sm:$0xff]
        %v303 = vld [vmem:[#allocation9 + $0x60] sm:$0xff]
        %v304 = vld [vmem:[#allocation9 + $0x68] sm:$0xff]
        %v305 = vld [vmem:[#allocation9 + $0x70] sm:$0xff]
        %v306 = vld [vmem:[#allocation9 + $0x78] sm:$0xff]
        %v307 = vld [vmem:[#allocation9 + $0x80] sm:$0xff]
        %v308 = vld [vmem:[#allocation9 + $0x88] sm:$0xff]
        %v309 = vld [vmem:[#allocation9 + $0x90] sm:$0xff]
        %v310 = vld [vmem:[#allocation9 + $0x98] sm:$0xff]
        %v311 = vld [vmem:[#allocation9 + $0xa0] sm:$0xff]
        %v312 = vld [vmem:[#allocation9 + $0xa8] sm:$0xff]
        %v313 = vld [vmem:[#allocation9 + $0xb0] sm:$0xff]
        %v314 = vld [vmem:[#allocation9 + $0xb8] sm:$0xff]
        %v315 = vld [vmem:[#allocation9 + $0xc0] sm:$0x7]
        %v316 = vld [vmem:[#allocation9 + $0xc8] sm:$0x7]
        %v317 = vld [vmem:[#allocation9 + $0xd0] sm:$0x7]
        %v318 = vld [vmem:[#allocation9 + $0xd8] sm:$0x7]
        %v319 = vld [vmem:[#allocation9 + $0xe0] sm:$0x7]
        %v320 = vld [vmem:[#allocation9 + $0xe8] sm:$0x7]
        %v321 = vld [vmem:[#allocation9 + $0xf0] sm:$0x7]
        %v322 = vld [vmem:[#allocation9 + $0xf8] sm:$0x7]
        %v323 = vld [vmem:[%s3] sm:$0xff]
        %324 = vrot.lane.b32.xlu0 %v283, 73
        %v325 = vpop.permute.xlu0 %324
        %326 = vrot.lane.b32.xlu0 %v284, 73
        %v327 = vpop.permute.xlu0 %326
        %328 = vrot.lane.b32.xlu0 %v285, 73
        %v329 = vpop.permute.xlu0 %328
        %330 = vrot.lane.b32.xlu0 %v286, 73
        %v331 = vpop.permute.xlu0 %330
        %332 = vrot.lane.b32.xlu0 %v287, 73
        %v333 = vpop.permute.xlu0 %332
        %334 = vrot.lane.b32.xlu0 %v288, 73
        %v335 = vpop.permute.xlu0 %334
        %336 = vrot.lane.b32.xlu0 %v289, 73
        %v337 = vpop.permute.xlu0 %336
        %338 = vrot.lane.b32.xlu0 %v290, 73
        %v339 = vpop.permute.xlu0 %338
        %v340 = vlaneseq
        %v341 = vand.u32 %v340, 127
        %vm342 = vcmp.lt.s32.totalorder %v341, 73
        %v343 = vsel %vm342, %v337, %v339
        %v344 = vsel %vm342, %v335, %v337
        %v345 = vsel %vm342, %v333, %v335
        %v346 = vsel %vm342, %v331, %v333
        %v347 = vsel %vm342, %v329, %v331
        %v348 = vsel %vm342, %v327, %v329
        %v349 = vsel %vm342, %v325, %v327
        %v350 = vsel %vm342, %v339, %v325
        %v351 = vlaneseq
        %v352 = vshrl.u32 %v351, 7
        %v353 = vsub.s32 0, %v352
        %v354 = vrot.slane %v291, %v353
        %v355 = vlaneseq
        %v356 = vshrl.u32 %v355, 7
        %v357 = vsub.s32 0, %v356
        %v358 = vrot.slane %v292, %v357
        %v359 = vlaneseq
        %v360 = vshrl.u32 %v359, 7
        %v361 = vsub.s32 0, %v360
        %v362 = vrot.slane %v293, %v361
        %v363 = vlaneseq
        %v364 = vshrl.u32 %v363, 7
        %v365 = vsub.s32 0, %v364
        %v366 = vrot.slane %v294, %v365
        %v367 = vlaneseq
        %v368 = vshrl.u32 %v367, 7
        %v369 = vsub.s32 0, %v368
        %v370 = vrot.slane %v295, %v369
        %v371 = vlaneseq
        %v372 = vshrl.u32 %v371, 7
        %v373 = vsub.s32 0, %v372
        %v374 = vrot.slane %v296, %v373
        %v375 = vlaneseq
        %v376 = vshrl.u32 %v375, 7
        %v377 = vsub.s32 0, %v376
        %v378 = vrot.slane %v297, %v377
        %v379 = vlaneseq
        %v380 = vshrl.u32 %v379, 7
        %v381 = vsub.s32 0, %v380
        %v382 = vrot.slane %v298, %v381
        %v383 = vmul.f32 %v350, %v354
        %v384 = vmul.f32 %v349, %v358
        %v385 = vmul.f32 %v348, %v362
        %v386 = vmul.f32 %v347, %v366
        %v387 = vmul.f32 %v346, %v370
        %v388 = vmul.f32 %v345, %v374
        %v389 = vmul.f32 %v344, %v378
        %v390 = vmul.f32 %v343, %v382
        %391 = vst [vmem:[#allocation2] sm:$0xff] %v383
        %392 = vst [vmem:[#allocation2 + $0x8] sm:$0xff] %v384
        %393 = vst [vmem:[#allocation2 + $0x10] sm:$0xff] %v385
        %394 = vst [vmem:[#allocation2 + $0x18] sm:$0xff] %v386
        %395 = vst [vmem:[#allocation2 + $0x20] sm:$0xff] %v387
        %396 = vst [vmem:[#allocation2 + $0x28] sm:$0xff] %v388
        %397 = vst [vmem:[#allocation2 + $0x30] sm:$0xff] %v389
        %398 = vst [vmem:[#allocation2 + $0x38] sm:$0xff] %v390
        %399 = vrot.lane.b32.xlu0 %v283, 72
        %v400 = vpop.permute.xlu0 %399
        %401 = vrot.lane.b32.xlu0 %v284, 72
        %v402 = vpop.permute.xlu0 %401
        %403 = vrot.lane.b32.xlu0 %v285, 72
        %v404 = vpop.permute.xlu0 %403
        %405 = vrot.lane.b32.xlu0 %v286, 72
        %v406 = vpop.permute.xlu0 %405
        %407 = vrot.lane.b32.xlu0 %v287, 72
        %v408 = vpop.permute.xlu0 %407
        %409 = vrot.lane.b32.xlu0 %v288, 72
        %v410 = vpop.permute.xlu0 %409
        %411 = vrot.lane.b32.xlu0 %v289, 72
        %v412 = vpop.permute.xlu0 %411
        %413 = vrot.lane.b32.xlu0 %v290, 72
        %v414 = vpop.permute.xlu0 %413
        %vm415 = vcmp.lt.s32.totalorder %v341, 72
        %v416 = vsel %vm415, %v412, %v414
        %v417 = vsel %vm415, %v410, %v412
        %v418 = vsel %vm415, %v408, %v410
        %v419 = vsel %vm415, %v406, %v408
        %v420 = vsel %vm415, %v404, %v406
        %v421 = vsel %vm415, %v402, %v404
        %v422 = vsel %vm415, %v400, %v402
        %v423 = vsel %vm415, %v414, %v400
        %v424 = vlaneseq
        %v425 = vshrl.u32 %v424, 7
        %v426 = vsub.s32 1, %v425
        %v427 = vrot.slane %v291, %v426
        %v428 = vlaneseq
        %v429 = vshrl.u32 %v428, 7
        %v430 = vsub.s32 1, %v429
        %v431 = vrot.slane %v292, %v430
        %v432 = vlaneseq
        %v433 = vshrl.u32 %v432, 7
        %v434 = vsub.s32 1, %v433
        %v435 = vrot.slane %v293, %v434
        %v436 = vlaneseq
        %v437 = vshrl.u32 %v436, 7
        %v438 = vsub.s32 1, %v437
        %v439 = vrot.slane %v294, %v438
        %v440 = vlaneseq
        %v441 = vshrl.u32 %v440, 7
        %v442 = vsub.s32 1, %v441
        %v443 = vrot.slane %v295, %v442
        %v444 = vlaneseq
        %v445 = vshrl.u32 %v444, 7
        %v446 = vsub.s32 1, %v445
        %v447 = vrot.slane %v296, %v446
        %v448 = vlaneseq
        %v449 = vshrl.u32 %v448, 7
        %v450 = vsub.s32 1, %v449
        %v451 = vrot.slane %v297, %v450
        %v452 = vlaneseq
        %v453 = vshrl.u32 %v452, 7
        %v454 = vsub.s32 1, %v453
        %v455 = vrot.slane %v298, %v454
        %v456 = vmul.f32 %v423, %v427
        %v457 = vmul.f32 %v422, %v431
        %v458 = vmul.f32 %v421, %v435
        %v459 = vmul.f32 %v420, %v439
        %v460 = vmul.f32 %v419, %v443
        %v461 = vmul.f32 %v418, %v447
        %v462 = vmul.f32 %v417, %v451
        %v463 = vmul.f32 %v416, %v455
        %464 = vst [vmem:[#allocation2 + $0x40] sm:$0xff] %v456
        %465 = vst [vmem:[#allocation2 + $0x48] sm:$0xff] %v457
        %466 = vst [vmem:[#allocation2 + $0x50] sm:$0xff] %v458
        %467 = vst [vmem:[#allocation2 + $0x58] sm:$0xff] %v459
        %468 = vst [vmem:[#allocation2 + $0x60] sm:$0xff] %v460
        %469 = vst [vmem:[#allocation2 + $0x68] sm:$0xff] %v461
        %470 = vst [vmem:[#allocation2 + $0x70] sm:$0xff] %v462
        %471 = vst [vmem:[#allocation2 + $0x78] sm:$0xff] %v463
        %472 = vrot.lane.b32.xlu0 %v283, 71
        %v473 = vpop.permute.xlu0 %472
        %474 = vrot.lane.b32.xlu0 %v284, 71
        %v475 = vpop.permute.xlu0 %474
        %476 = vrot.lane.b32.xlu0 %v285, 71
        %v477 = vpop.permute.xlu0 %476
        %478 = vrot.lane.b32.xlu0 %v286, 71
        %v479 = vpop.permute.xlu0 %478
        %480 = vrot.lane.b32.xlu0 %v287, 71
        %v481 = vpop.permute.xlu0 %480
        %482 = vrot.lane.b32.xlu0 %v288, 71
        %v483 = vpop.permute.xlu0 %482
        %484 = vrot.lane.b32.xlu0 %v289, 71
        %v485 = vpop.permute.xlu0 %484
        %486 = vrot.lane.b32.xlu0 %v290, 71
        %v487 = vpop.permute.xlu0 %486
        %vm488 = vcmp.lt.s32.totalorder %v341, 71
        %v489 = vsel %vm488, %v485, %v487
        %v490 = vsel %vm488, %v483, %v485
        %v491 = vsel %vm488, %v481, %v483
        %v492 = vsel %vm488, %v479, %v481
        %v493 = vsel %vm488, %v477, %v479
        %v494 = vsel %vm488, %v475, %v477
        %v495 = vsel %vm488, %v473, %v475
        %v496 = vsel %vm488, %v487, %v473
        %v497 = vlaneseq
        %v498 = vshrl.u32 %v497, 7
        %v499 = vsub.s32 2, %v498
        %v500 = vrot.slane %v291, %v499
        %v501 = vlaneseq
        %v502 = vshrl.u32 %v501, 7
        %v503 = vsub.s32 2, %v502
        %v504 = vrot.slane %v292, %v503
        %v505 = vlaneseq
        %v506 = vshrl.u32 %v505, 7
        %v507 = vsub.s32 2, %v506
        %v508 = vrot.slane %v293, %v507
        %v509 = vlaneseq
        %v510 = vshrl.u32 %v509, 7
        %v511 = vsub.s32 2, %v510
        %v512 = vrot.slane %v294, %v511
        %v513 = vlaneseq
        %v514 = vshrl.u32 %v513, 7
        %v515 = vsub.s32 2, %v514
        %v516 = vrot.slane %v295, %v515
        %v517 = vlaneseq
        %v518 = vshrl.u32 %v517, 7
        %v519 = vsub.s32 2, %v518
        %v520 = vrot.slane %v296, %v519
        %v521 = vlaneseq
        %v522 = vshrl.u32 %v521, 7
        %v523 = vsub.s32 2, %v522
        %v524 = vrot.slane %v297, %v523
        %v525 = vlaneseq
        %v526 = vshrl.u32 %v525, 7
        %v527 = vsub.s32 2, %v526
        %v528 = vrot.slane %v298, %v527
        %v529 = vmul.f32 %v496, %v500
        %v530 = vmul.f32 %v495, %v504
        %v531 = vmul.f32 %v494, %v508
        %v532 = vmul.f32 %v493, %v512
        %v533 = vmul.f32 %v492, %v516
        %v534 = vmul.f32 %v491, %v520
        %v535 = vmul.f32 %v490, %v524
        %v536 = vmul.f32 %v489, %v528
        %537 = vst [vmem:[#allocation2 + $0x80] sm:$0xff] %v529
        %538 = vst [vmem:[#allocation2 + $0x88] sm:$0xff] %v530
        %539 = vst [vmem:[#allocation2 + $0x90] sm:$0xff] %v531
        %540 = vst [vmem:[#allocation2 + $0x98] sm:$0xff] %v532
        %541 = vst [vmem:[#allocation2 + $0xa0] sm:$0xff] %v533
        %542 = vst [vmem:[#allocation2 + $0xa8] sm:$0xff] %v534
        %543 = vst [vmem:[#allocation2 + $0xb0] sm:$0xff] %v535
        %544 = vst [vmem:[#allocation2 + $0xb8] sm:$0xff] %v536
        %545 = vrot.lane.b32.xlu0 %v283, 65
        %v546 = vpop.permute.xlu0 %545
        %547 = vrot.lane.b32.xlu0 %v284, 65
        %v548 = vpop.permute.xlu0 %547
        %549 = vrot.lane.b32.xlu0 %v285, 65
        %v550 = vpop.permute.xlu0 %549
        %551 = vrot.lane.b32.xlu0 %v286, 65
        %v552 = vpop.permute.xlu0 %551
        %553 = vrot.lane.b32.xlu0 %v287, 65
        %v554 = vpop.permute.xlu0 %553
        %555 = vrot.lane.b32.xlu0 %v288, 65
        %v556 = vpop.permute.xlu0 %555
        %557 = vrot.lane.b32.xlu0 %v289, 65
        %v558 = vpop.permute.xlu0 %557
        %559 = vrot.lane.b32.xlu0 %v290, 65
        %v560 = vpop.permute.xlu0 %559
        %vm561 = vcmp.lt.s32.totalorder %v341, 65
        %v562 = vsel %vm561, %v558, %v560
        %v563 = vsel %vm561, %v556, %v558
        %v564 = vsel %vm561, %v554, %v556
        %v565 = vsel %vm561, %v552, %v554
        %v566 = vsel %vm561, %v550, %v552
        %v567 = vsel %vm561, %v548, %v550
        %v568 = vsel %vm561, %v546, %v548
        %v569 = vsel %vm561, %v560, %v546
        %v570 = vlaneseq
        %v571 = vshrl.u32 %v570, 7
        %v572 = vsub.s32 3, %v571
        %v573 = vrot.slane %v291, %v572
        %v574 = vlaneseq
        %v575 = vshrl.u32 %v574, 7
        %v576 = vsub.s32 3, %v575
        %v577 = vrot.slane %v292, %v576
        %v578 = vlaneseq
        %v579 = vshrl.u32 %v578, 7
        %v580 = vsub.s32 3, %v579
        %v581 = vrot.slane %v293, %v580
        %v582 = vlaneseq
        %v583 = vshrl.u32 %v582, 7
        %v584 = vsub.s32 3, %v583
        %v585 = vrot.slane %v294, %v584
        %v586 = vlaneseq
        %v587 = vshrl.u32 %v586, 7
        %v588 = vsub.s32 3, %v587
        %v589 = vrot.slane %v295, %v588
        %v590 = vlaneseq
        %v591 = vshrl.u32 %v590, 7
        %v592 = vsub.s32 3, %v591
        %v593 = vrot.slane %v296, %v592
        %v594 = vlaneseq
        %v595 = vshrl.u32 %v594, 7
        %v596 = vsub.s32 3, %v595
        %v597 = vrot.slane %v297, %v596
        %v598 = vlaneseq
        %v599 = vshrl.u32 %v598, 7
        %v600 = vsub.s32 3, %v599
        %v601 = vrot.slane %v298, %v600
        %v602 = vmul.f32 %v569, %v573
        %v603 = vmul.f32 %v568, %v577
        %v604 = vmul.f32 %v567, %v581
        %v605 = vmul.f32 %v566, %v585
        %v606 = vmul.f32 %v565, %v589
        %v607 = vmul.f32 %v564, %v593
        %v608 = vmul.f32 %v563, %v597
        %v609 = vmul.f32 %v562, %v601
        %610 = vst [vmem:[#allocation2 + $0xc0] sm:$0xff] %v602
        %611 = vst [vmem:[#allocation2 + $0xc8] sm:$0xff] %v603
        %612 = vst [vmem:[#allocation2 + $0xd0] sm:$0xff] %v604
        %613 = vst [vmem:[#allocation2 + $0xd8] sm:$0xff] %v605
        %614 = vst [vmem:[#allocation2 + $0xe0] sm:$0xff] %v606
        %615 = vst [vmem:[#allocation2 + $0xe8] sm:$0xff] %v607
        %616 = vst [vmem:[#allocation2 + $0xf0] sm:$0xff] %v608
        %617 = vst [vmem:[#allocation2 + $0xf8] sm:$0xff] %v609
        %618 = vrot.lane.b32.xlu0 %v283, 64
        %v619 = vpop.permute.xlu0 %618
        %620 = vrot.lane.b32.xlu0 %v284, 64
        %v621 = vpop.permute.xlu0 %620
        %622 = vrot.lane.b32.xlu0 %v285, 64
        %v623 = vpop.permute.xlu0 %622
        %624 = vrot.lane.b32.xlu0 %v286, 64
        %v625 = vpop.permute.xlu0 %624
        %626 = vrot.lane.b32.xlu0 %v287, 64
        %v627 = vpop.permute.xlu0 %626
        %628 = vrot.lane.b32.xlu0 %v288, 64
        %v629 = vpop.permute.xlu0 %628
        %630 = vrot.lane.b32.xlu0 %v289, 64
        %v631 = vpop.permute.xlu0 %630
        %632 = vrot.lane.b32.xlu0 %v290, 64
        %v633 = vpop.permute.xlu0 %632
        %vm634 = vcmp.lt.s32.totalorder %v341, 64
        %v635 = vsel %vm634, %v631, %v633
        %v636 = vsel %vm634, %v629, %v631
        %v637 = vsel %vm634, %v627, %v629
        %v638 = vsel %vm634, %v625, %v627
        %v639 = vsel %vm634, %v623, %v625
        %v640 = vsel %vm634, %v621, %v623
        %v641 = vsel %vm634, %v619, %v621
        %v642 = vsel %vm634, %v633, %v619
        %v643 = vlaneseq
        %v644 = vshrl.u32 %v643, 7
        %v645 = vsub.s32 4, %v644
        %v646 = vrot.slane %v291, %v645
        %v647 = vlaneseq
        %v648 = vshrl.u32 %v647, 7
        %v649 = vsub.s32 4, %v648
        %v650 = vrot.slane %v292, %v649
        %v651 = vlaneseq
        %v652 = vshrl.u32 %v651, 7
        %v653 = vsub.s32 4, %v652
        %v654 = vrot.slane %v293, %v653
        %v655 = vlaneseq
        %v656 = vshrl.u32 %v655, 7
        %v657 = vsub.s32 4, %v656
        %v658 = vrot.slane %v294, %v657
        %v659 = vlaneseq
        %v660 = vshrl.u32 %v659, 7
        %v661 = vsub.s32 4, %v660
        %v662 = vrot.slane %v295, %v661
        %v663 = vlaneseq
        %v664 = vshrl.u32 %v663, 7
        %v665 = vsub.s32 4, %v664
        %v666 = vrot.slane %v296, %v665
        %v667 = vlaneseq
        %v668 = vshrl.u32 %v667, 7
        %v669 = vsub.s32 4, %v668
        %v670 = vrot.slane %v297, %v669
        %v671 = vlaneseq
        %v672 = vshrl.u32 %v671, 7
        %v673 = vsub.s32 4, %v672
        %v674 = vrot.slane %v298, %v673
        %v675 = vmul.f32 %v642, %v646
        %v676 = vmul.f32 %v641, %v650
        %v677 = vmul.f32 %v640, %v654
        %v678 = vmul.f32 %v639, %v658
        %v679 = vmul.f32 %v638, %v662
        %v680 = vmul.f32 %v637, %v666
        %v681 = vmul.f32 %v636, %v670
        %v682 = vmul.f32 %v635, %v674
        %683 = vst [vmem:[#allocation2 + $0x100] sm:$0xff] %v675
        %684 = vst [vmem:[#allocation2 + $0x108] sm:$0xff] %v676
        %685 = vst [vmem:[#allocation2 + $0x110] sm:$0xff] %v677
        %686 = vst [vmem:[#allocation2 + $0x118] sm:$0xff] %v678
        %687 = vst [vmem:[#allocation2 + $0x120] sm:$0xff] %v679
        %688 = vst [vmem:[#allocation2 + $0x128] sm:$0xff] %v680
        %689 = vst [vmem:[#allocation2 + $0x130] sm:$0xff] %v681
        %690 = vst [vmem:[#allocation2 + $0x138] sm:$0xff] %v682
        %691 = vrot.lane.b32.xlu0 %v283, 63
        %v692 = vpop.permute.xlu0 %691
        %693 = vrot.lane.b32.xlu0 %v284, 63
        %v694 = vpop.permute.xlu0 %693
        %695 = vrot.lane.b32.xlu0 %v285, 63
        %v696 = vpop.permute.xlu0 %695
        %697 = vrot.lane.b32.xlu0 %v286, 63
        %v698 = vpop.permute.xlu0 %697
        %699 = vrot.lane.b32.xlu0 %v287, 63
        %v700 = vpop.permute.xlu0 %699
        %701 = vrot.lane.b32.xlu0 %v288, 63
        %v702 = vpop.permute.xlu0 %701
        %703 = vrot.lane.b32.xlu0 %v289, 63
        %v704 = vpop.permute.xlu0 %703
        %705 = vrot.lane.b32.xlu0 %v290, 63
        %v706 = vpop.permute.xlu0 %705
        %vm707 = vcmp.lt.s32.totalorder %v341, 63
        %v708 = vsel %vm707, %v704, %v706
        %v709 = vsel %vm707, %v702, %v704
        %v710 = vsel %vm707, %v700, %v702
        %v711 = vsel %vm707, %v698, %v700
        %v712 = vsel %vm707, %v696, %v698
        %v713 = vsel %vm707, %v694, %v696
        %v714 = vsel %vm707, %v692, %v694
        %v715 = vsel %vm707, %v706, %v692
        %v716 = vlaneseq
        %v717 = vshrl.u32 %v716, 7
        %v718 = vsub.s32 5, %v717
        %v719 = vrot.slane %v291, %v718
        %v720 = vlaneseq
        %v721 = vshrl.u32 %v720, 7
        %v722 = vsub.s32 5, %v721
        %v723 = vrot.slane %v292, %v722
        %v724 = vlaneseq
        %v725 = vshrl.u32 %v724, 7
        %v726 = vsub.s32 5, %v725
        %v727 = vrot.slane %v293, %v726
        %v728 = vlaneseq
        %v729 = vshrl.u32 %v728, 7
        %v730 = vsub.s32 5, %v729
        %v731 = vrot.slane %v294, %v730
        %v732 = vlaneseq
        %v733 = vshrl.u32 %v732, 7
        %v734 = vsub.s32 5, %v733
        %v735 = vrot.slane %v295, %v734
        %v736 = vlaneseq
        %v737 = vshrl.u32 %v736, 7
        %v738 = vsub.s32 5, %v737
        %v739 = vrot.slane %v296, %v738
        %v740 = vlaneseq
        %v741 = vshrl.u32 %v740, 7
        %v742 = vsub.s32 5, %v741
        %v743 = vrot.slane %v297, %v742
        %v744 = vlaneseq
        %v745 = vshrl.u32 %v744, 7
        %v746 = vsub.s32 5, %v745
        %v747 = vrot.slane %v298, %v746
        %v748 = vmul.f32 %v715, %v719
        %v749 = vmul.f32 %v714, %v723
        %v750 = vmul.f32 %v713, %v727
        %v751 = vmul.f32 %v712, %v731
        %v752 = vmul.f32 %v711, %v735
        %v753 = vmul.f32 %v710, %v739
        %v754 = vmul.f32 %v709, %v743
        %v755 = vmul.f32 %v708, %v747
        %756 = vst [vmem:[#allocation2 + $0x140] sm:$0xff] %v748
        %757 = vst [vmem:[#allocation2 + $0x148] sm:$0xff] %v749
        %758 = vst [vmem:[#allocation2 + $0x150] sm:$0xff] %v750
        %759 = vst [vmem:[#allocation2 + $0x158] sm:$0xff] %v751
        %760 = vst [vmem:[#allocation2 + $0x160] sm:$0xff] %v752
        %761 = vst [vmem:[#allocation2 + $0x168] sm:$0xff] %v753
        %762 = vst [vmem:[#allocation2 + $0x170] sm:$0xff] %v754
        %763 = vst [vmem:[#allocation2 + $0x178] sm:$0xff] %v755
        %764 = vrot.lane.b32.xlu0 %v283, 57
        %v765 = vpop.permute.xlu0 %764
        %766 = vrot.lane.b32.xlu0 %v284, 57
        %v767 = vpop.permute.xlu0 %766
        %768 = vrot.lane.b32.xlu0 %v285, 57
        %v769 = vpop.permute.xlu0 %768
        %770 = vrot.lane.b32.xlu0 %v286, 57
        %v771 = vpop.permute.xlu0 %770
        %772 = vrot.lane.b32.xlu0 %v287, 57
        %v773 = vpop.permute.xlu0 %772
        %774 = vrot.lane.b32.xlu0 %v288, 57
        %v775 = vpop.permute.xlu0 %774
        %776 = vrot.lane.b32.xlu0 %v289, 57
        %v777 = vpop.permute.xlu0 %776
        %778 = vrot.lane.b32.xlu0 %v290, 57
        %v779 = vpop.permute.xlu0 %778
        %vm780 = vcmp.lt.s32.totalorder %v341, 57
        %v781 = vsel %vm780, %v777, %v779
        %v782 = vsel %vm780, %v775, %v777
        %v783 = vsel %vm780, %v773, %v775
        %v784 = vsel %vm780, %v771, %v773
        %v785 = vsel %vm780, %v769, %v771
        %v786 = vsel %vm780, %v767, %v769
        %v787 = vsel %vm780, %v765, %v767
        %v788 = vsel %vm780, %v779, %v765
        %v789 = vlaneseq
        %v790 = vshrl.u32 %v789, 7
        %v791 = vsub.s32 6, %v790
        %v792 = vrot.slane %v291, %v791
        %v793 = vlaneseq
        %v794 = vshrl.u32 %v793, 7
        %v795 = vsub.s32 6, %v794
        %v796 = vrot.slane %v292, %v795
        %v797 = vlaneseq
        %v798 = vshrl.u32 %v797, 7
        %v799 = vsub.s32 6, %v798
        %v800 = vrot.slane %v293, %v799
        %v801 = vlaneseq
        %v802 = vshrl.u32 %v801, 7
        %v803 = vsub.s32 6, %v802
        %v804 = vrot.slane %v294, %v803
        %v805 = vlaneseq
        %v806 = vshrl.u32 %v805, 7
        %v807 = vsub.s32 6, %v806
        %v808 = vrot.slane %v295, %v807
        %v809 = vlaneseq
        %v810 = vshrl.u32 %v809, 7
        %v811 = vsub.s32 6, %v810
        %v812 = vrot.slane %v296, %v811
        %v813 = vlaneseq
        %v814 = vshrl.u32 %v813, 7
        %v815 = vsub.s32 6, %v814
        %v816 = vrot.slane %v297, %v815
        %v817 = vlaneseq
        %v818 = vshrl.u32 %v817, 7
        %v819 = vsub.s32 6, %v818
        %v820 = vrot.slane %v298, %v819
        %v821 = vmul.f32 %v788, %v792
        %v822 = vmul.f32 %v787, %v796
        %v823 = vmul.f32 %v786, %v800
        %v824 = vmul.f32 %v785, %v804
        %v825 = vmul.f32 %v784, %v808
        %v826 = vmul.f32 %v783, %v812
        %v827 = vmul.f32 %v782, %v816
        %v828 = vmul.f32 %v781, %v820
        %829 = vst [vmem:[#allocation2 + $0x180] sm:$0xff] %v821
        %830 = vst [vmem:[#allocation2 + $0x188] sm:$0xff] %v822
        %831 = vst [vmem:[#allocation2 + $0x190] sm:$0xff] %v823
        %832 = vst [vmem:[#allocation2 + $0x198] sm:$0xff] %v824
        %833 = vst [vmem:[#allocation2 + $0x1a0] sm:$0xff] %v825
        %834 = vst [vmem:[#allocation2 + $0x1a8] sm:$0xff] %v826
        %835 = vst [vmem:[#allocation2 + $0x1b0] sm:$0xff] %v827
        %836 = vst [vmem:[#allocation2 + $0x1b8] sm:$0xff] %v828
        %837 = vrot.lane.b32.xlu0 %v283, 56
        %v838 = vpop.permute.xlu0 %837
        %839 = vrot.lane.b32.xlu0 %v284, 56
        %v840 = vpop.permute.xlu0 %839
        %841 = vrot.lane.b32.xlu0 %v285, 56
        %v842 = vpop.permute.xlu0 %841
        %843 = vrot.lane.b32.xlu0 %v286, 56
        %v844 = vpop.permute.xlu0 %843
        %845 = vrot.lane.b32.xlu0 %v287, 56
        %v846 = vpop.permute.xlu0 %845
        %847 = vrot.lane.b32.xlu0 %v288, 56
        %v848 = vpop.permute.xlu0 %847
        %849 = vrot.lane.b32.xlu0 %v289, 56
        %v850 = vpop.permute.xlu0 %849
        %851 = vrot.lane.b32.xlu0 %v290, 56
        %v852 = vpop.permute.xlu0 %851
        %vm853 = vcmp.lt.s32.totalorder %v341, 56
        %v854 = vsel %vm853, %v850, %v852
        %v855 = vsel %vm853, %v848, %v850
        %v856 = vsel %vm853, %v846, %v848
        %v857 = vsel %vm853, %v844, %v846
        %v858 = vsel %vm853, %v842, %v844
        %v859 = vsel %vm853, %v840, %v842
        %v860 = vsel %vm853, %v838, %v840
        %v861 = vsel %vm853, %v852, %v838
        %v862 = vlaneseq
        %v863 = vshrl.u32 %v862, 7
        %v864 = vsub.s32 7, %v863
        %v865 = vrot.slane %v291, %v864
        %v866 = vlaneseq
        %v867 = vshrl.u32 %v866, 7
        %v868 = vsub.s32 7, %v867
        %v869 = vrot.slane %v292, %v868
        %v870 = vlaneseq
        %v871 = vshrl.u32 %v870, 7
        %v872 = vsub.s32 7, %v871
        %v873 = vrot.slane %v293, %v872
        %v874 = vlaneseq
        %v875 = vshrl.u32 %v874, 7
        %v876 = vsub.s32 7, %v875
        %v877 = vrot.slane %v294, %v876
        %v878 = vlaneseq
        %v879 = vshrl.u32 %v878, 7
        %v880 = vsub.s32 7, %v879
        %v881 = vrot.slane %v295, %v880
        %v882 = vlaneseq
        %v883 = vshrl.u32 %v882, 7
        %v884 = vsub.s32 7, %v883
        %v885 = vrot.slane %v296, %v884
        %v886 = vlaneseq
        %v887 = vshrl.u32 %v886, 7
        %v888 = vsub.s32 7, %v887
        %v889 = vrot.slane %v297, %v888
        %v890 = vlaneseq
        %v891 = vshrl.u32 %v890, 7
        %v892 = vsub.s32 7, %v891
        %v893 = vrot.slane %v298, %v892
        %v894 = vmul.f32 %v861, %v865
        %v895 = vmul.f32 %v860, %v869
        %v896 = vmul.f32 %v859, %v873
        %v897 = vmul.f32 %v858, %v877
        %v898 = vmul.f32 %v857, %v881
        %v899 = vmul.f32 %v856, %v885
        %v900 = vmul.f32 %v855, %v889
        %v901 = vmul.f32 %v854, %v893
        %902 = vst [vmem:[#allocation2 + $0x1c0] sm:$0xff] %v894
        %903 = vst [vmem:[#allocation2 + $0x1c8] sm:$0xff] %v895
        %904 = vst [vmem:[#allocation2 + $0x1d0] sm:$0xff] %v896
        %905 = vst [vmem:[#allocation2 + $0x1d8] sm:$0xff] %v897
        %906 = vst [vmem:[#allocation2 + $0x1e0] sm:$0xff] %v898
        %907 = vst [vmem:[#allocation2 + $0x1e8] sm:$0xff] %v899
        %908 = vst [vmem:[#allocation2 + $0x1f0] sm:$0xff] %v900
        %909 = vst [vmem:[#allocation2 + $0x1f8] sm:$0xff] %v901
        %910 = vrot.lane.b32.xlu0 %v283, 55
        %v911 = vpop.permute.xlu0 %910
        %912 = vrot.lane.b32.xlu0 %v284, 55
        %v913 = vpop.permute.xlu0 %912
        %914 = vrot.lane.b32.xlu0 %v285, 55
        %v915 = vpop.permute.xlu0 %914
        %916 = vrot.lane.b32.xlu0 %v286, 55
        %v917 = vpop.permute.xlu0 %916
        %918 = vrot.lane.b32.xlu0 %v287, 55
        %v919 = vpop.permute.xlu0 %918
        %920 = vrot.lane.b32.xlu0 %v288, 55
        %v921 = vpop.permute.xlu0 %920
        %922 = vrot.lane.b32.xlu0 %v289, 55
        %v923 = vpop.permute.xlu0 %922
        %924 = vrot.lane.b32.xlu0 %v290, 55
        %v925 = vpop.permute.xlu0 %924
        %vm926 = vcmp.lt.s32.totalorder %v341, 55
        %v927 = vsel %vm926, %v923, %v925
        %v928 = vsel %vm926, %v921, %v923
        %v929 = vsel %vm926, %v919, %v921
        %v930 = vsel %vm926, %v917, %v919
        %v931 = vsel %vm926, %v915, %v917
        %v932 = vsel %vm926, %v913, %v915
        %v933 = vsel %vm926, %v911, %v913
        %v934 = vsel %vm926, %v925, %v911
        %v935 = vlaneseq
        %v936 = vshrl.u32 %v935, 7
        %v937 = vsub.s32 0, %v936
        %v938 = vrot.slane %v299, %v937
        %v939 = vlaneseq
        %v940 = vshrl.u32 %v939, 7
        %v941 = vsub.s32 0, %v940
        %v942 = vrot.slane %v300, %v941
        %v943 = vlaneseq
        %v944 = vshrl.u32 %v943, 7
        %v945 = vsub.s32 0, %v944
        %v946 = vrot.slane %v301, %v945
        %v947 = vlaneseq
        %v948 = vshrl.u32 %v947, 7
        %v949 = vsub.s32 0, %v948
        %v950 = vrot.slane %v302, %v949
        %v951 = vlaneseq
        %v952 = vshrl.u32 %v951, 7
        %v953 = vsub.s32 0, %v952
        %v954 = vrot.slane %v303, %v953
        %v955 = vlaneseq
        %v956 = vshrl.u32 %v955, 7
        %v957 = vsub.s32 0, %v956
        %v958 = vrot.slane %v304, %v957
        %v959 = vlaneseq
        %v960 = vshrl.u32 %v959, 7
        %v961 = vsub.s32 0, %v960
        %v962 = vrot.slane %v305, %v961
        %v963 = vlaneseq
        %v964 = vshrl.u32 %v963, 7
        %v965 = vsub.s32 0, %v964
        %v966 = vrot.slane %v306, %v965
        %v967 = vmul.f32 %v934, %v938
        %v968 = vmul.f32 %v933, %v942
        %v969 = vmul.f32 %v932, %v946
        %v970 = vmul.f32 %v931, %v950
        %v971 = vmul.f32 %v930, %v954
        %v972 = vmul.f32 %v929, %v958
        %v973 = vmul.f32 %v928, %v962
        %v974 = vmul.f32 %v927, %v966
        %975 = vst [vmem:[#allocation2 + $0x200] sm:$0xff] %v967
        %976 = vst [vmem:[#allocation2 + $0x208] sm:$0xff] %v968
        %977 = vst [vmem:[#allocation2 + $0x210] sm:$0xff] %v969
        %978 = vst [vmem:[#allocation2 + $0x218] sm:$0xff] %v970
        %979 = vst [vmem:[#allocation2 + $0x220] sm:$0xff] %v971
        %980 = vst [vmem:[#allocation2 + $0x228] sm:$0xff] %v972
        %981 = vst [vmem:[#allocation2 + $0x230] sm:$0xff] %v973
        %982 = vst [vmem:[#allocation2 + $0x238] sm:$0xff] %v974
        %983 = vrot.lane.b32.xlu0 %v283, 9
        %v984 = vpop.permute.xlu0 %983
        %985 = vrot.lane.b32.xlu0 %v284, 9
        %v986 = vpop.permute.xlu0 %985
        %987 = vrot.lane.b32.xlu0 %v285, 9
        %v988 = vpop.permute.xlu0 %987
        %989 = vrot.lane.b32.xlu0 %v286, 9
        %v990 = vpop.permute.xlu0 %989
        %991 = vrot.lane.b32.xlu0 %v287, 9
        %v992 = vpop.permute.xlu0 %991
        %993 = vrot.lane.b32.xlu0 %v288, 9
        %v994 = vpop.permute.xlu0 %993
        %995 = vrot.lane.b32.xlu0 %v289, 9
        %v996 = vpop.permute.xlu0 %995
        %997 = vrot.lane.b32.xlu0 %v290, 9
        %v998 = vpop.permute.xlu0 %997
        %vm999 = vcmp.lt.s32.totalorder %v341, 9
        %v1000 = vsel %vm999, %v996, %v998
        %v1001 = vsel %vm999, %v994, %v996
        %v1002 = vsel %vm999, %v992, %v994
        %v1003 = vsel %vm999, %v990, %v992
        %v1004 = vsel %vm999, %v988, %v990
        %v1005 = vsel %vm999, %v986, %v988
        %v1006 = vsel %vm999, %v984, %v986
        %v1007 = vsel %vm999, %v998, %v984
        %v1008 = vlaneseq
        %v1009 = vshrl.u32 %v1008, 7
        %v1010 = vsub.s32 1, %v1009
        %v1011 = vrot.slane %v299, %v1010
        %v1012 = vlaneseq
        %v1013 = vshrl.u32 %v1012, 7
        %v1014 = vsub.s32 1, %v1013
        %v1015 = vrot.slane %v300, %v1014
        %v1016 = vlaneseq
        %v1017 = vshrl.u32 %v1016, 7
        %v1018 = vsub.s32 1, %v1017
        %v1019 = vrot.slane %v301, %v1018
        %v1020 = vlaneseq
        %v1021 = vshrl.u32 %v1020, 7
        %v1022 = vsub.s32 1, %v1021
        %v1023 = vrot.slane %v302, %v1022
        %v1024 = vlaneseq
        %v1025 = vshrl.u32 %v1024, 7
        %v1026 = vsub.s32 1, %v1025
        %v1027 = vrot.slane %v303, %v1026
        %v1028 = vlaneseq
        %v1029 = vshrl.u32 %v1028, 7
        %v1030 = vsub.s32 1, %v1029
        %v1031 = vrot.slane %v304, %v1030
        %v1032 = vlaneseq
        %v1033 = vshrl.u32 %v1032, 7
        %v1034 = vsub.s32 1, %v1033
        %v1035 = vrot.slane %v305, %v1034
        %v1036 = vlaneseq
        %v1037 = vshrl.u32 %v1036, 7
        %v1038 = vsub.s32 1, %v1037
        %v1039 = vrot.slane %v306, %v1038
        %v1040 = vmul.f32 %v1007, %v1011
        %v1041 = vmul.f32 %v1006, %v1015
        %v1042 = vmul.f32 %v1005, %v1019
        %v1043 = vmul.f32 %v1004, %v1023
        %v1044 = vmul.f32 %v1003, %v1027
        %v1045 = vmul.f32 %v1002, %v1031
        %v1046 = vmul.f32 %v1001, %v1035
        %v1047 = vmul.f32 %v1000, %v1039
        %1048 = vst [vmem:[#allocation2 + $0x240] sm:$0xff] %v1040
        %1049 = vst [vmem:[#allocation2 + $0x248] sm:$0xff] %v1041
        %1050 = vst [vmem:[#allocation2 + $0x250] sm:$0xff] %v1042
        %1051 = vst [vmem:[#allocation2 + $0x258] sm:$0xff] %v1043
        %1052 = vst [vmem:[#allocation2 + $0x260] sm:$0xff] %v1044
        %1053 = vst [vmem:[#allocation2 + $0x268] sm:$0xff] %v1045
        %1054 = vst [vmem:[#allocation2 + $0x270] sm:$0xff] %v1046
        %1055 = vst [vmem:[#allocation2 + $0x278] sm:$0xff] %v1047
        %1056 = vrot.lane.b32.xlu0 %v283, 8
        %v1057 = vpop.permute.xlu0 %1056
        %1058 = vrot.lane.b32.xlu0 %v284, 8
        %v1059 = vpop.permute.xlu0 %1058
        %1060 = vrot.lane.b32.xlu0 %v285, 8
        %v1061 = vpop.permute.xlu0 %1060
        %1062 = vrot.lane.b32.xlu0 %v286, 8
        %v1063 = vpop.permute.xlu0 %1062
        %1064 = vrot.lane.b32.xlu0 %v287, 8
        %v1065 = vpop.permute.xlu0 %1064
        %1066 = vrot.lane.b32.xlu0 %v288, 8
        %v1067 = vpop.permute.xlu0 %1066
        %1068 = vrot.lane.b32.xlu0 %v289, 8
        %v1069 = vpop.permute.xlu0 %1068
        %1070 = vrot.lane.b32.xlu0 %v290, 8
        %v1071 = vpop.permute.xlu0 %1070
        %vm1072 = vcmp.lt.s32.totalorder %v341, 8
        %v1073 = vsel %vm1072, %v1069, %v1071
        %v1074 = vsel %vm1072, %v1067, %v1069
        %v1075 = vsel %vm1072, %v1065, %v1067
        %v1076 = vsel %vm1072, %v1063, %v1065
        %v1077 = vsel %vm1072, %v1061, %v1063
        %v1078 = vsel %vm1072, %v1059, %v1061
        %v1079 = vsel %vm1072, %v1057, %v1059
        %v1080 = vsel %vm1072, %v1071, %v1057
        %v1081 = vlaneseq
        %v1082 = vshrl.u32 %v1081, 7
        %v1083 = vsub.s32 2, %v1082
        %v1084 = vrot.slane %v299, %v1083
        %v1085 = vlaneseq
        %v1086 = vshrl.u32 %v1085, 7
        %v1087 = vsub.s32 2, %v1086
        %v1088 = vrot.slane %v300, %v1087
        %v1089 = vlaneseq
        %v1090 = vshrl.u32 %v1089, 7
        %v1091 = vsub.s32 2, %v1090
        %v1092 = vrot.slane %v301, %v1091
        %v1093 = vlaneseq
        %v1094 = vshrl.u32 %v1093, 7
        %v1095 = vsub.s32 2, %v1094
        %v1096 = vrot.slane %v302, %v1095
        %v1097 = vlaneseq
        %v1098 = vshrl.u32 %v1097, 7
        %v1099 = vsub.s32 2, %v1098
        %v1100 = vrot.slane %v303, %v1099
        %v1101 = vlaneseq
        %v1102 = vshrl.u32 %v1101, 7
        %v1103 = vsub.s32 2, %v1102
        %v1104 = vrot.slane %v304, %v1103
        %v1105 = vlaneseq
        %v1106 = vshrl.u32 %v1105, 7
        %v1107 = vsub.s32 2, %v1106
        %v1108 = vrot.slane %v305, %v1107
        %v1109 = vlaneseq
        %v1110 = vshrl.u32 %v1109, 7
        %v1111 = vsub.s32 2, %v1110
        %v1112 = vrot.slane %v306, %v1111
        %v1113 = vmul.f32 %v1080, %v1084
        %v1114 = vmul.f32 %v1079, %v1088
        %v1115 = vmul.f32 %v1078, %v1092
        %v1116 = vmul.f32 %v1077, %v1096
        %v1117 = vmul.f32 %v1076, %v1100
        %v1118 = vmul.f32 %v1075, %v1104
        %v1119 = vmul.f32 %v1074, %v1108
        %v1120 = vmul.f32 %v1073, %v1112
        %1121 = vst [vmem:[#allocation2 + $0x280] sm:$0xff] %v1113
        %1122 = vst [vmem:[#allocation2 + $0x288] sm:$0xff] %v1114
        %1123 = vst [vmem:[#allocation2 + $0x290] sm:$0xff] %v1115
        %1124 = vst [vmem:[#allocation2 + $0x298] sm:$0xff] %v1116
        %1125 = vst [vmem:[#allocation2 + $0x2a0] sm:$0xff] %v1117
        %1126 = vst [vmem:[#allocation2 + $0x2a8] sm:$0xff] %v1118
        %1127 = vst [vmem:[#allocation2 + $0x2b0] sm:$0xff] %v1119
        %1128 = vst [vmem:[#allocation2 + $0x2b8] sm:$0xff] %v1120
        %1129 = vrot.lane.b32.xlu0 %v283, 7
        %v1130 = vpop.permute.xlu0 %1129
        %1131 = vrot.lane.b32.xlu0 %v284, 7
        %v1132 = vpop.permute.xlu0 %1131
        %1133 = vrot.lane.b32.xlu0 %v285, 7
        %v1134 = vpop.permute.xlu0 %1133
        %1135 = vrot.lane.b32.xlu0 %v286, 7
        %v1136 = vpop.permute.xlu0 %1135
        %1137 = vrot.lane.b32.xlu0 %v287, 7
        %v1138 = vpop.permute.xlu0 %1137
        %1139 = vrot.lane.b32.xlu0 %v288, 7
        %v1140 = vpop.permute.xlu0 %1139
        %1141 = vrot.lane.b32.xlu0 %v289, 7
        %v1142 = vpop.permute.xlu0 %1141
        %1143 = vrot.lane.b32.xlu0 %v290, 7
        %v1144 = vpop.permute.xlu0 %1143
        %vm1145 = vcmp.lt.s32.totalorder %v341, 7
        %v1146 = vsel %vm1145, %v1142, %v1144
        %v1147 = vsel %vm1145, %v1140, %v1142
        %v1148 = vsel %vm1145, %v1138, %v1140
        %v1149 = vsel %vm1145, %v1136, %v1138
        %v1150 = vsel %vm1145, %v1134, %v1136
        %v1151 = vsel %vm1145, %v1132, %v1134
        %v1152 = vsel %vm1145, %v1130, %v1132
        %v1153 = vsel %vm1145, %v1144, %v1130
        %v1154 = vlaneseq
        %v1155 = vshrl.u32 %v1154, 7
        %v1156 = vsub.s32 3, %v1155
        %v1157 = vrot.slane %v299, %v1156
        %v1158 = vlaneseq
        %v1159 = vshrl.u32 %v1158, 7
        %v1160 = vsub.s32 3, %v1159
        %v1161 = vrot.slane %v300, %v1160
        %v1162 = vlaneseq
        %v1163 = vshrl.u32 %v1162, 7
        %v1164 = vsub.s32 3, %v1163
        %v1165 = vrot.slane %v301, %v1164
        %v1166 = vlaneseq
        %v1167 = vshrl.u32 %v1166, 7
        %v1168 = vsub.s32 3, %v1167
        %v1169 = vrot.slane %v302, %v1168
        %v1170 = vlaneseq
        %v1171 = vshrl.u32 %v1170, 7
        %v1172 = vsub.s32 3, %v1171
        %v1173 = vrot.slane %v303, %v1172
        %v1174 = vlaneseq
        %v1175 = vshrl.u32 %v1174, 7
        %v1176 = vsub.s32 3, %v1175
        %v1177 = vrot.slane %v304, %v1176
        %v1178 = vlaneseq
        %v1179 = vshrl.u32 %v1178, 7
        %v1180 = vsub.s32 3, %v1179
        %v1181 = vrot.slane %v305, %v1180
        %v1182 = vlaneseq
        %v1183 = vshrl.u32 %v1182, 7
        %v1184 = vsub.s32 3, %v1183
        %v1185 = vrot.slane %v306, %v1184
        %v1186 = vmul.f32 %v1153, %v1157
        %v1187 = vmul.f32 %v1152, %v1161
        %v1188 = vmul.f32 %v1151, %v1165
        %v1189 = vmul.f32 %v1150, %v1169
        %v1190 = vmul.f32 %v1149, %v1173
        %v1191 = vmul.f32 %v1148, %v1177
        %v1192 = vmul.f32 %v1147, %v1181
        %v1193 = vmul.f32 %v1146, %v1185
        %1194 = vst [vmem:[#allocation2 + $0x2c0] sm:$0xff] %v1186
        %1195 = vst [vmem:[#allocation2 + $0x2c8] sm:$0xff] %v1187
        %1196 = vst [vmem:[#allocation2 + $0x2d0] sm:$0xff] %v1188
        %1197 = vst [vmem:[#allocation2 + $0x2d8] sm:$0xff] %v1189
        %1198 = vst [vmem:[#allocation2 + $0x2e0] sm:$0xff] %v1190
        %1199 = vst [vmem:[#allocation2 + $0x2e8] sm:$0xff] %v1191
        %1200 = vst [vmem:[#allocation2 + $0x2f0] sm:$0xff] %v1192
        %1201 = vst [vmem:[#allocation2 + $0x2f8] sm:$0xff] %v1193
        %1202 = vrot.lane.b32.xlu0 %v283, 1
        %v1203 = vpop.permute.xlu0 %1202
        %1204 = vrot.lane.b32.xlu0 %v284, 1
        %v1205 = vpop.permute.xlu0 %1204
        %1206 = vrot.lane.b32.xlu0 %v285, 1
        %v1207 = vpop.permute.xlu0 %1206
        %1208 = vrot.lane.b32.xlu0 %v286, 1
        %v1209 = vpop.permute.xlu0 %1208
        %1210 = vrot.lane.b32.xlu0 %v287, 1
        %v1211 = vpop.permute.xlu0 %1210
        %1212 = vrot.lane.b32.xlu0 %v288, 1
        %v1213 = vpop.permute.xlu0 %1212
        %1214 = vrot.lane.b32.xlu0 %v289, 1
        %v1215 = vpop.permute.xlu0 %1214
        %1216 = vrot.lane.b32.xlu0 %v290, 1
        %v1217 = vpop.permute.xlu0 %1216
        %vm1218 = vcmp.lt.s32.totalorder %v341, 1
        %v1219 = vsel %vm1218, %v1215, %v1217
        %v1220 = vsel %vm1218, %v1213, %v1215
        %v1221 = vsel %vm1218, %v1211, %v1213
        %v1222 = vsel %vm1218, %v1209, %v1211
        %v1223 = vsel %vm1218, %v1207, %v1209
        %v1224 = vsel %vm1218, %v1205, %v1207
        %v1225 = vsel %vm1218, %v1203, %v1205
        %v1226 = vsel %vm1218, %v1217, %v1203
        %v1227 = vlaneseq
        %v1228 = vshrl.u32 %v1227, 7
        %v1229 = vsub.s32 4, %v1228
        %v1230 = vrot.slane %v299, %v1229
        %v1231 = vlaneseq
        %v1232 = vshrl.u32 %v1231, 7
        %v1233 = vsub.s32 4, %v1232
        %v1234 = vrot.slane %v300, %v1233
        %v1235 = vlaneseq
        %v1236 = vshrl.u32 %v1235, 7
        %v1237 = vsub.s32 4, %v1236
        %v1238 = vrot.slane %v301, %v1237
        %v1239 = vlaneseq
        %v1240 = vshrl.u32 %v1239, 7
        %v1241 = vsub.s32 4, %v1240
        %v1242 = vrot.slane %v302, %v1241
        %v1243 = vlaneseq
        %v1244 = vshrl.u32 %v1243, 7
        %v1245 = vsub.s32 4, %v1244
        %v1246 = vrot.slane %v303, %v1245
        %v1247 = vlaneseq
        %v1248 = vshrl.u32 %v1247, 7
        %v1249 = vsub.s32 4, %v1248
        %v1250 = vrot.slane %v304, %v1249
        %v1251 = vlaneseq
        %v1252 = vshrl.u32 %v1251, 7
        %v1253 = vsub.s32 4, %v1252
        %v1254 = vrot.slane %v305, %v1253
        %v1255 = vlaneseq
        %v1256 = vshrl.u32 %v1255, 7
        %v1257 = vsub.s32 4, %v1256
        %v1258 = vrot.slane %v306, %v1257
        %v1259 = vmul.f32 %v1226, %v1230
        %v1260 = vmul.f32 %v1225, %v1234
        %v1261 = vmul.f32 %v1224, %v1238
        %v1262 = vmul.f32 %v1223, %v1242
        %v1263 = vmul.f32 %v1222, %v1246
        %v1264 = vmul.f32 %v1221, %v1250
        %v1265 = vmul.f32 %v1220, %v1254
        %v1266 = vmul.f32 %v1219, %v1258
        %1267 = vst [vmem:[#allocation2 + $0x300] sm:$0xff] %v1259
        %1268 = vst [vmem:[#allocation2 + $0x308] sm:$0xff] %v1260
        %1269 = vst [vmem:[#allocation2 + $0x310] sm:$0xff] %v1261
        %1270 = vst [vmem:[#allocation2 + $0x318] sm:$0xff] %v1262
        %1271 = vst [vmem:[#allocation2 + $0x320] sm:$0xff] %v1263
        %1272 = vst [vmem:[#allocation2 + $0x328] sm:$0xff] %v1264
        %1273 = vst [vmem:[#allocation2 + $0x330] sm:$0xff] %v1265
        %1274 = vst [vmem:[#allocation2 + $0x338] sm:$0xff] %v1266
        %1275 = vst [vmem:[#allocation2 + $0x340] sm:$0xff] %v283
        %1276 = vst [vmem:[#allocation2 + $0x348] sm:$0xff] %v284
        %1277 = vst [vmem:[#allocation2 + $0x350] sm:$0xff] %v285
        %1278 = vst [vmem:[#allocation2 + $0x358] sm:$0xff] %v286
        %1279 = vst [vmem:[#allocation2 + $0x360] sm:$0xff] %v287
        %1280 = vst [vmem:[#allocation2 + $0x368] sm:$0xff] %v288
        %1281 = vst [vmem:[#allocation2 + $0x370] sm:$0xff] %v289
        %1282 = vst [vmem:[#allocation2 + $0x378] sm:$0xff] %v290
        %1283 = vrot.lane.b32.xlu0 %v283, 127
        %v1284 = vpop.permute.xlu0 %1283
        %1285 = vrot.lane.b32.xlu0 %v284, 127
        %v1286 = vpop.permute.xlu0 %1285
        %1287 = vrot.lane.b32.xlu0 %v285, 127
        %v1288 = vpop.permute.xlu0 %1287
        %1289 = vrot.lane.b32.xlu0 %v286, 127
        %v1290 = vpop.permute.xlu0 %1289
        %1291 = vrot.lane.b32.xlu0 %v287, 127
        %v1292 = vpop.permute.xlu0 %1291
        %1293 = vrot.lane.b32.xlu0 %v288, 127
        %v1294 = vpop.permute.xlu0 %1293
        %1295 = vrot.lane.b32.xlu0 %v289, 127
        %v1296 = vpop.permute.xlu0 %1295
        %1297 = vrot.lane.b32.xlu0 %v290, 127
        %v1298 = vpop.permute.xlu0 %1297
        %vm1299 = vcmp.lt.s32.totalorder %v341, 127
        %v1300 = vsel %vm1299, %v1296, %v1298
        %v1301 = vsel %vm1299, %v1294, %v1296
        %v1302 = vsel %vm1299, %v1292, %v1294
        %v1303 = vsel %vm1299, %v1290, %v1292
        %v1304 = vsel %vm1299, %v1288, %v1290
        %v1305 = vsel %vm1299, %v1286, %v1288
        %v1306 = vsel %vm1299, %v1284, %v1286
        %v1307 = vsel %vm1299, %v1298, %v1284
        %v1308 = vlaneseq
        %v1309 = vshrl.u32 %v1308, 7
        %v1310 = vsub.s32 6, %v1309
        %v1311 = vrot.slane %v299, %v1310
        %v1312 = vlaneseq
        %v1313 = vshrl.u32 %v1312, 7
        %v1314 = vsub.s32 6, %v1313
        %v1315 = vrot.slane %v300, %v1314
        %v1316 = vlaneseq
        %v1317 = vshrl.u32 %v1316, 7
        %v1318 = vsub.s32 6, %v1317
        %v1319 = vrot.slane %v301, %v1318
        %v1320 = vlaneseq
        %v1321 = vshrl.u32 %v1320, 7
        %v1322 = vsub.s32 6, %v1321
        %v1323 = vrot.slane %v302, %v1322
        %v1324 = vlaneseq
        %v1325 = vshrl.u32 %v1324, 7
        %v1326 = vsub.s32 6, %v1325
        %v1327 = vrot.slane %v303, %v1326
        %v1328 = vlaneseq
        %v1329 = vshrl.u32 %v1328, 7
        %v1330 = vsub.s32 6, %v1329
        %v1331 = vrot.slane %v304, %v1330
        %v1332 = vlaneseq
        %v1333 = vshrl.u32 %v1332, 7
        %v1334 = vsub.s32 6, %v1333
        %v1335 = vrot.slane %v305, %v1334
        %v1336 = vlaneseq
        %v1337 = vshrl.u32 %v1336, 7
        %v1338 = vsub.s32 6, %v1337
        %v1339 = vrot.slane %v306, %v1338
        %v1340 = vmul.f32 %v1306, %v1311
        %v1341 = vmul.f32 %v1305, %v1315
        %v1342 = vmul.f32 %v1304, %v1319
        %v1343 = vmul.f32 %v1303, %v1323
        %v1344 = vmul.f32 %v1302, %v1327
        %v1345 = vmul.f32 %v1301, %v1331
        %v1346 = vmul.f32 %v1300, %v1335
        %v1347 = vmul.f32 %v1307, %v1339
        %1348 = vst [vmem:[#allocation2 + $0x380] sm:$0xff] %v1340
        %1349 = vst [vmem:[#allocation2 + $0x388] sm:$0xff] %v1341
        %1350 = vst [vmem:[#allocation2 + $0x390] sm:$0xff] %v1342
        %1351 = vst [vmem:[#allocation2 + $0x398] sm:$0xff] %v1343
        %1352 = vst [vmem:[#allocation2 + $0x3a0] sm:$0xff] %v1344
        %1353 = vst [vmem:[#allocation2 + $0x3a8] sm:$0xff] %v1345
        %1354 = vst [vmem:[#allocation2 + $0x3b0] sm:$0xff] %v1346
        %1355 = vst [vmem:[#allocation2 + $0x3b8] sm:$0xff] %v1347
        %1356 = vrot.lane.b32.xlu0 %v283, 121
        %v1357 = vpop.permute.xlu0 %1356
        %1358 = vrot.lane.b32.xlu0 %v284, 121
        %v1359 = vpop.permute.xlu0 %1358
        %1360 = vrot.lane.b32.xlu0 %v285, 121
        %v1361 = vpop.permute.xlu0 %1360
        %1362 = vrot.lane.b32.xlu0 %v286, 121
        %v1363 = vpop.permute.xlu0 %1362
        %1364 = vrot.lane.b32.xlu0 %v287, 121
        %v1365 = vpop.permute.xlu0 %1364
        %1366 = vrot.lane.b32.xlu0 %v288, 121
        %v1367 = vpop.permute.xlu0 %1366
        %1368 = vrot.lane.b32.xlu0 %v289, 121
        %v1369 = vpop.permute.xlu0 %1368
        %1370 = vrot.lane.b32.xlu0 %v290, 121
        %v1371 = vpop.permute.xlu0 %1370
        %vm1372 = vcmp.lt.s32.totalorder %v341, 121
        %v1373 = vsel %vm1372, %v1369, %v1371
        %v1374 = vsel %vm1372, %v1367, %v1369
        %v1375 = vsel %vm1372, %v1365, %v1367
        %v1376 = vsel %vm1372, %v1363, %v1365
        %v1377 = vsel %vm1372, %v1361, %v1363
        %v1378 = vsel %vm1372, %v1359, %v1361
        %v1379 = vsel %vm1372, %v1357, %v1359
        %v1380 = vsel %vm1372, %v1371, %v1357
        %v1381 = vlaneseq
        %v1382 = vshrl.u32 %v1381, 7
        %v1383 = vsub.s32 7, %v1382
        %v1384 = vrot.slane %v299, %v1383
        %v1385 = vlaneseq
        %v1386 = vshrl.u32 %v1385, 7
        %v1387 = vsub.s32 7, %v1386
        %v1388 = vrot.slane %v300, %v1387
        %v1389 = vlaneseq
        %v1390 = vshrl.u32 %v1389, 7
        %v1391 = vsub.s32 7, %v1390
        %v1392 = vrot.slane %v301, %v1391
        %v1393 = vlaneseq
        %v1394 = vshrl.u32 %v1393, 7
        %v1395 = vsub.s32 7, %v1394
        %v1396 = vrot.slane %v302, %v1395
        %v1397 = vlaneseq
        %v1398 = vshrl.u32 %v1397, 7
        %v1399 = vsub.s32 7, %v1398
        %v1400 = vrot.slane %v303, %v1399
        %v1401 = vlaneseq
        %v1402 = vshrl.u32 %v1401, 7
        %v1403 = vsub.s32 7, %v1402
        %v1404 = vrot.slane %v304, %v1403
        %v1405 = vlaneseq
        %v1406 = vshrl.u32 %v1405, 7
        %v1407 = vsub.s32 7, %v1406
        %v1408 = vrot.slane %v305, %v1407
        %v1409 = vlaneseq
        %v1410 = vshrl.u32 %v1409, 7
        %v1411 = vsub.s32 7, %v1410
        %v1412 = vrot.slane %v306, %v1411
        %v1413 = vmul.f32 %v1379, %v1384
        %v1414 = vmul.f32 %v1378, %v1388
        %v1415 = vmul.f32 %v1377, %v1392
        %v1416 = vmul.f32 %v1376, %v1396
        %v1417 = vmul.f32 %v1375, %v1400
        %v1418 = vmul.f32 %v1374, %v1404
        %v1419 = vmul.f32 %v1373, %v1408
        %v1420 = vmul.f32 %v1380, %v1412
        %1421 = vst [vmem:[#allocation2 + $0x3c0] sm:$0xff] %v1413
        %1422 = vst [vmem:[#allocation2 + $0x3c8] sm:$0xff] %v1414
        %1423 = vst [vmem:[#allocation2 + $0x3d0] sm:$0xff] %v1415
        %1424 = vst [vmem:[#allocation2 + $0x3d8] sm:$0xff] %v1416
        %1425 = vst [vmem:[#allocation2 + $0x3e0] sm:$0xff] %v1417
        %1426 = vst [vmem:[#allocation2 + $0x3e8] sm:$0xff] %v1418
        %1427 = vst [vmem:[#allocation2 + $0x3f0] sm:$0xff] %v1419
        %1428 = vst [vmem:[#allocation2 + $0x3f8] sm:$0xff] %v1420
        %1429 = vrot.lane.b32.xlu0 %v283, 120
        %v1430 = vpop.permute.xlu0 %1429
        %1431 = vrot.lane.b32.xlu0 %v284, 120
        %v1432 = vpop.permute.xlu0 %1431
        %1433 = vrot.lane.b32.xlu0 %v285, 120
        %v1434 = vpop.permute.xlu0 %1433
        %1435 = vrot.lane.b32.xlu0 %v286, 120
        %v1436 = vpop.permute.xlu0 %1435
        %1437 = vrot.lane.b32.xlu0 %v287, 120
        %v1438 = vpop.permute.xlu0 %1437
        %1439 = vrot.lane.b32.xlu0 %v288, 120
        %v1440 = vpop.permute.xlu0 %1439
        %1441 = vrot.lane.b32.xlu0 %v289, 120
        %v1442 = vpop.permute.xlu0 %1441
        %1443 = vrot.lane.b32.xlu0 %v290, 120
        %v1444 = vpop.permute.xlu0 %1443
        %vm1445 = vcmp.lt.s32.totalorder %v341, 120
        %v1446 = vsel %vm1445, %v1442, %v1444
        %v1447 = vsel %vm1445, %v1440, %v1442
        %v1448 = vsel %vm1445, %v1438, %v1440
        %v1449 = vsel %vm1445, %v1436, %v1438
        %v1450 = vsel %vm1445, %v1434, %v1436
        %v1451 = vsel %vm1445, %v1432, %v1434
        %v1452 = vsel %vm1445, %v1430, %v1432
        %v1453 = vsel %vm1445, %v1444, %v1430
        %v1454 = vlaneseq
        %v1455 = vshrl.u32 %v1454, 7
        %v1456 = vsub.s32 0, %v1455
        %v1457 = vrot.slane %v307, %v1456
        %v1458 = vlaneseq
        %v1459 = vshrl.u32 %v1458, 7
        %v1460 = vsub.s32 0, %v1459
        %v1461 = vrot.slane %v308, %v1460
        %v1462 = vlaneseq
        %v1463 = vshrl.u32 %v1462, 7
        %v1464 = vsub.s32 0, %v1463
        %v1465 = vrot.slane %v309, %v1464
        %v1466 = vlaneseq
        %v1467 = vshrl.u32 %v1466, 7
        %v1468 = vsub.s32 0, %v1467
        %v1469 = vrot.slane %v310, %v1468
        %v1470 = vlaneseq
        %v1471 = vshrl.u32 %v1470, 7
        %v1472 = vsub.s32 0, %v1471
        %v1473 = vrot.slane %v311, %v1472
        %v1474 = vlaneseq
        %v1475 = vshrl.u32 %v1474, 7
        %v1476 = vsub.s32 0, %v1475
        %v1477 = vrot.slane %v312, %v1476
        %v1478 = vlaneseq
        %v1479 = vshrl.u32 %v1478, 7
        %v1480 = vsub.s32 0, %v1479
        %v1481 = vrot.slane %v313, %v1480
        %v1482 = vlaneseq
        %v1483 = vshrl.u32 %v1482, 7
        %v1484 = vsub.s32 0, %v1483
        %v1485 = vrot.slane %v314, %v1484
        %v1486 = vmul.f32 %v1452, %v1457
        %v1487 = vmul.f32 %v1451, %v1461
        %v1488 = vmul.f32 %v1450, %v1465
        %v1489 = vmul.f32 %v1449, %v1469
        %v1490 = vmul.f32 %v1448, %v1473
        %v1491 = vmul.f32 %v1447, %v1477
        %v1492 = vmul.f32 %v1446, %v1481
        %v1493 = vmul.f32 %v1453, %v1485
        %1494 = vst [vmem:[#allocation2 + $0x400] sm:$0xff] %v1486
        %1495 = vst [vmem:[#allocation2 + $0x408] sm:$0xff] %v1487
        %1496 = vst [vmem:[#allocation2 + $0x410] sm:$0xff] %v1488
        %1497 = vst [vmem:[#allocation2 + $0x418] sm:$0xff] %v1489
        %1498 = vst [vmem:[#allocation2 + $0x420] sm:$0xff] %v1490
        %1499 = vst [vmem:[#allocation2 + $0x428] sm:$0xff] %v1491
        %1500 = vst [vmem:[#allocation2 + $0x430] sm:$0xff] %v1492
        %1501 = vst [vmem:[#allocation2 + $0x438] sm:$0xff] %v1493
        %1502 = vrot.lane.b32.xlu0 %v283, 119
        %v1503 = vpop.permute.xlu0 %1502
        %1504 = vrot.lane.b32.xlu0 %v284, 119
        %v1505 = vpop.permute.xlu0 %1504
        %1506 = vrot.lane.b32.xlu0 %v285, 119
        %v1507 = vpop.permute.xlu0 %1506
        %1508 = vrot.lane.b32.xlu0 %v286, 119
        %v1509 = vpop.permute.xlu0 %1508
        %1510 = vrot.lane.b32.xlu0 %v287, 119
        %v1511 = vpop.permute.xlu0 %1510
        %1512 = vrot.lane.b32.xlu0 %v288, 119
        %v1513 = vpop.permute.xlu0 %1512
        %1514 = vrot.lane.b32.xlu0 %v289, 119
        %v1515 = vpop.permute.xlu0 %1514
        %1516 = vrot.lane.b32.xlu0 %v290, 119
        %v1517 = vpop.permute.xlu0 %1516
        %vm1518 = vcmp.lt.s32.totalorder %v341, 119
        %v1519 = vsel %vm1518, %v1515, %v1517
        %v1520 = vsel %vm1518, %v1513, %v1515
        %v1521 = vsel %vm1518, %v1511, %v1513
        %v1522 = vsel %vm1518, %v1509, %v1511
        %v1523 = vsel %vm1518, %v1507, %v1509
        %v1524 = vsel %vm1518, %v1505, %v1507
        %v1525 = vsel %vm1518, %v1503, %v1505
        %v1526 = vsel %vm1518, %v1517, %v1503
        %v1527 = vlaneseq
        %v1528 = vshrl.u32 %v1527, 7
        %v1529 = vsub.s32 1, %v1528
        %v1530 = vrot.slane %v307, %v1529
        %v1531 = vlaneseq
        %v1532 = vshrl.u32 %v1531, 7
        %v1533 = vsub.s32 1, %v1532
        %v1534 = vrot.slane %v308, %v1533
        %v1535 = vlaneseq
        %v1536 = vshrl.u32 %v1535, 7
        %v1537 = vsub.s32 1, %v1536
        %v1538 = vrot.slane %v309, %v1537
        %v1539 = vlaneseq
        %v1540 = vshrl.u32 %v1539, 7
        %v1541 = vsub.s32 1, %v1540
        %v1542 = vrot.slane %v310, %v1541
        %v1543 = vlaneseq
        %v1544 = vshrl.u32 %v1543, 7
        %v1545 = vsub.s32 1, %v1544
        %v1546 = vrot.slane %v311, %v1545
        %v1547 = vlaneseq
        %v1548 = vshrl.u32 %v1547, 7
        %v1549 = vsub.s32 1, %v1548
        %v1550 = vrot.slane %v312, %v1549
        %v1551 = vlaneseq
        %v1552 = vshrl.u32 %v1551, 7
        %v1553 = vsub.s32 1, %v1552
        %v1554 = vrot.slane %v313, %v1553
        %v1555 = vlaneseq
        %v1556 = vshrl.u32 %v1555, 7
        %v1557 = vsub.s32 1, %v1556
        %v1558 = vrot.slane %v314, %v1557
        %v1559 = vmul.f32 %v1525, %v1530
        %v1560 = vmul.f32 %v1524, %v1534
        %v1561 = vmul.f32 %v1523, %v1538
        %v1562 = vmul.f32 %v1522, %v1542
        %v1563 = vmul.f32 %v1521, %v1546
        %v1564 = vmul.f32 %v1520, %v1550
        %v1565 = vmul.f32 %v1519, %v1554
        %v1566 = vmul.f32 %v1526, %v1558
        %1567 = vst [vmem:[#allocation2 + $0x440] sm:$0xff] %v1559
        %1568 = vst [vmem:[#allocation2 + $0x448] sm:$0xff] %v1560
        %1569 = vst [vmem:[#allocation2 + $0x450] sm:$0xff] %v1561
        %1570 = vst [vmem:[#allocation2 + $0x458] sm:$0xff] %v1562
        %1571 = vst [vmem:[#allocation2 + $0x460] sm:$0xff] %v1563
        %1572 = vst [vmem:[#allocation2 + $0x468] sm:$0xff] %v1564
        %1573 = vst [vmem:[#allocation2 + $0x470] sm:$0xff] %v1565
        %1574 = vst [vmem:[#allocation2 + $0x478] sm:$0xff] %v1566
        %v1575 = vlaneseq
        %v1576 = vshrl.u32 %v1575, 7
        %v1577 = vsub.s32 2, %v1576
        %v1578 = vrot.slane %v307, %v1577
        %v1579 = vlaneseq
        %v1580 = vshrl.u32 %v1579, 7
        %v1581 = vsub.s32 2, %v1580
        %v1582 = vrot.slane %v308, %v1581
        %v1583 = vlaneseq
        %v1584 = vshrl.u32 %v1583, 7
        %v1585 = vsub.s32 2, %v1584
        %v1586 = vrot.slane %v309, %v1585
        %v1587 = vlaneseq
        %v1588 = vshrl.u32 %v1587, 7
        %v1589 = vsub.s32 2, %v1588
        %v1590 = vrot.slane %v310, %v1589
        %v1591 = vlaneseq
        %v1592 = vshrl.u32 %v1591, 7
        %v1593 = vsub.s32 2, %v1592
        %v1594 = vrot.slane %v311, %v1593
        %v1595 = vlaneseq
        %v1596 = vshrl.u32 %v1595, 7
        %v1597 = vsub.s32 2, %v1596
        %v1598 = vrot.slane %v312, %v1597
        %v1599 = vlaneseq
        %v1600 = vshrl.u32 %v1599, 7
        %v1601 = vsub.s32 2, %v1600
        %v1602 = vrot.slane %v313, %v1601
        %v1603 = vlaneseq
        %v1604 = vshrl.u32 %v1603, 7
        %v1605 = vsub.s32 2, %v1604
        %v1606 = vrot.slane %v314, %v1605
        %v1607 = vmul.f32 %v349, %v1578
        %v1608 = vmul.f32 %v348, %v1582
        %v1609 = vmul.f32 %v347, %v1586
        %v1610 = vmul.f32 %v346, %v1590
        %v1611 = vmul.f32 %v345, %v1594
        %v1612 = vmul.f32 %v344, %v1598
        %v1613 = vmul.f32 %v343, %v1602
        %v1614 = vmul.f32 %v350, %v1606
        %1615 = vst [vmem:[#allocation2 + $0x480] sm:$0xff] %v1607
        %1616 = vst [vmem:[#allocation2 + $0x488] sm:$0xff] %v1608
        %1617 = vst [vmem:[#allocation2 + $0x490] sm:$0xff] %v1609
        %1618 = vst [vmem:[#allocation2 + $0x498] sm:$0xff] %v1610
        %1619 = vst [vmem:[#allocation2 + $0x4a0] sm:$0xff] %v1611
        %1620 = vst [vmem:[#allocation2 + $0x4a8] sm:$0xff] %v1612
        %1621 = vst [vmem:[#allocation2 + $0x4b0] sm:$0xff] %v1613
        %1622 = vst [vmem:[#allocation2 + $0x4b8] sm:$0xff] %v1614
        %v1623 = vlaneseq
        %v1624 = vshrl.u32 %v1623, 7
        %v1625 = vsub.s32 3, %v1624
        %v1626 = vrot.slane %v307, %v1625
        %v1627 = vlaneseq
        %v1628 = vshrl.u32 %v1627, 7
        %v1629 = vsub.s32 3, %v1628
        %v1630 = vrot.slane %v308, %v1629
        %v1631 = vlaneseq
        %v1632 = vshrl.u32 %v1631, 7
        %v1633 = vsub.s32 3, %v1632
        %v1634 = vrot.slane %v309, %v1633
        %v1635 = vlaneseq
        %v1636 = vshrl.u32 %v1635, 7
        %v1637 = vsub.s32 3, %v1636
        %v1638 = vrot.slane %v310, %v1637
        %v1639 = vlaneseq
        %v1640 = vshrl.u32 %v1639, 7
        %v1641 = vsub.s32 3, %v1640
        %v1642 = vrot.slane %v311, %v1641
        %v1643 = vlaneseq
        %v1644 = vshrl.u32 %v1643, 7
        %v1645 = vsub.s32 3, %v1644
        %v1646 = vrot.slane %v312, %v1645
        %v1647 = vlaneseq
        %v1648 = vshrl.u32 %v1647, 7
        %v1649 = vsub.s32 3, %v1648
        %v1650 = vrot.slane %v313, %v1649
        %v1651 = vlaneseq
        %v1652 = vshrl.u32 %v1651, 7
        %v1653 = vsub.s32 3, %v1652
        %v1654 = vrot.slane %v314, %v1653
        %v1655 = vmul.f32 %v422, %v1626
        %v1656 = vmul.f32 %v421, %v1630
        %v1657 = vmul.f32 %v420, %v1634
        %v1658 = vmul.f32 %v419, %v1638
        %v1659 = vmul.f32 %v418, %v1642
        %v1660 = vmul.f32 %v417, %v1646
        %v1661 = vmul.f32 %v416, %v1650
        %v1662 = vmul.f32 %v423, %v1654
        %1663 = vst [vmem:[#allocation2 + $0x4c0] sm:$0xff] %v1655
        %1664 = vst [vmem:[#allocation2 + $0x4c8] sm:$0xff] %v1656
        %1665 = vst [vmem:[#allocation2 + $0x4d0] sm:$0xff] %v1657
        %1666 = vst [vmem:[#allocation2 + $0x4d8] sm:$0xff] %v1658
        %1667 = vst [vmem:[#allocation2 + $0x4e0] sm:$0xff] %v1659
        %1668 = vst [vmem:[#allocation2 + $0x4e8] sm:$0xff] %v1660
        %1669 = vst [vmem:[#allocation2 + $0x4f0] sm:$0xff] %v1661
        %1670 = vst [vmem:[#allocation2 + $0x4f8] sm:$0xff] %v1662
        %v1671 = vlaneseq
        %v1672 = vshrl.u32 %v1671, 7
        %v1673 = vsub.s32 4, %v1672
        %v1674 = vrot.slane %v307, %v1673
        %v1675 = vlaneseq
        %v1676 = vshrl.u32 %v1675, 7
        %v1677 = vsub.s32 4, %v1676
        %v1678 = vrot.slane %v308, %v1677
        %v1679 = vlaneseq
        %v1680 = vshrl.u32 %v1679, 7
        %v1681 = vsub.s32 4, %v1680
        %v1682 = vrot.slane %v309, %v1681
        %v1683 = vlaneseq
        %v1684 = vshrl.u32 %v1683, 7
        %v1685 = vsub.s32 4, %v1684
        %v1686 = vrot.slane %v310, %v1685
        %v1687 = vlaneseq
        %v1688 = vshrl.u32 %v1687, 7
        %v1689 = vsub.s32 4, %v1688
        %v1690 = vrot.slane %v311, %v1689
        %v1691 = vlaneseq
        %v1692 = vshrl.u32 %v1691, 7
        %v1693 = vsub.s32 4, %v1692
        %v1694 = vrot.slane %v312, %v1693
        %v1695 = vlaneseq
        %v1696 = vshrl.u32 %v1695, 7
        %v1697 = vsub.s32 4, %v1696
        %v1698 = vrot.slane %v313, %v1697
        %v1699 = vlaneseq
        %v1700 = vshrl.u32 %v1699, 7
        %v1701 = vsub.s32 4, %v1700
        %v1702 = vrot.slane %v314, %v1701
        %v1703 = vmul.f32 %v495, %v1674
        %v1704 = vmul.f32 %v494, %v1678
        %v1705 = vmul.f32 %v493, %v1682
        %v1706 = vmul.f32 %v492, %v1686
        %v1707 = vmul.f32 %v491, %v1690
        %v1708 = vmul.f32 %v490, %v1694
        %v1709 = vmul.f32 %v489, %v1698
        %v1710 = vmul.f32 %v496, %v1702
        %1711 = vst [vmem:[#allocation2 + $0x500] sm:$0xff] %v1703
        %1712 = vst [vmem:[#allocation2 + $0x508] sm:$0xff] %v1704
        %1713 = vst [vmem:[#allocation2 + $0x510] sm:$0xff] %v1705
        %1714 = vst [vmem:[#allocation2 + $0x518] sm:$0xff] %v1706
        %1715 = vst [vmem:[#allocation2 + $0x520] sm:$0xff] %v1707
        %1716 = vst [vmem:[#allocation2 + $0x528] sm:$0xff] %v1708
        %1717 = vst [vmem:[#allocation2 + $0x530] sm:$0xff] %v1709
        %1718 = vst [vmem:[#allocation2 + $0x538] sm:$0xff] %v1710
        %v1719 = vlaneseq
        %v1720 = vshrl.u32 %v1719, 7
        %v1721 = vsub.s32 5, %v1720
        %v1722 = vrot.slane %v307, %v1721
        %v1723 = vlaneseq
        %v1724 = vshrl.u32 %v1723, 7
        %v1725 = vsub.s32 5, %v1724
        %v1726 = vrot.slane %v308, %v1725
        %v1727 = vlaneseq
        %v1728 = vshrl.u32 %v1727, 7
        %v1729 = vsub.s32 5, %v1728
        %v1730 = vrot.slane %v309, %v1729
        %v1731 = vlaneseq
        %v1732 = vshrl.u32 %v1731, 7
        %v1733 = vsub.s32 5, %v1732
        %v1734 = vrot.slane %v310, %v1733
        %v1735 = vlaneseq
        %v1736 = vshrl.u32 %v1735, 7
        %v1737 = vsub.s32 5, %v1736
        %v1738 = vrot.slane %v311, %v1737
        %v1739 = vlaneseq
        %v1740 = vshrl.u32 %v1739, 7
        %v1741 = vsub.s32 5, %v1740
        %v1742 = vrot.slane %v312, %v1741
        %v1743 = vlaneseq
        %v1744 = vshrl.u32 %v1743, 7
        %v1745 = vsub.s32 5, %v1744
        %v1746 = vrot.slane %v313, %v1745
        %v1747 = vlaneseq
        %v1748 = vshrl.u32 %v1747, 7
        %v1749 = vsub.s32 5, %v1748
        %v1750 = vrot.slane %v314, %v1749
        %v1751 = vmul.f32 %v568, %v1722
        %v1752 = vmul.f32 %v567, %v1726
        %v1753 = vmul.f32 %v566, %v1730
        %v1754 = vmul.f32 %v565, %v1734
        %v1755 = vmul.f32 %v564, %v1738
        %v1756 = vmul.f32 %v563, %v1742
        %v1757 = vmul.f32 %v562, %v1746
        %v1758 = vmul.f32 %v569, %v1750
        %1759 = vst [vmem:[#allocation2 + $0x540] sm:$0xff] %v1751
        %1760 = vst [vmem:[#allocation2 + $0x548] sm:$0xff] %v1752
        %1761 = vst [vmem:[#allocation2 + $0x550] sm:$0xff] %v1753
        %1762 = vst [vmem:[#allocation2 + $0x558] sm:$0xff] %v1754
        %1763 = vst [vmem:[#allocation2 + $0x560] sm:$0xff] %v1755
        %1764 = vst [vmem:[#allocation2 + $0x568] sm:$0xff] %v1756
        %1765 = vst [vmem:[#allocation2 + $0x570] sm:$0xff] %v1757
        %1766 = vst [vmem:[#allocation2 + $0x578] sm:$0xff] %v1758
        %v1767 = vlaneseq
        %v1768 = vshrl.u32 %v1767, 7
        %v1769 = vsub.s32 6, %v1768
        %v1770 = vrot.slane %v307, %v1769
        %v1771 = vlaneseq
        %v1772 = vshrl.u32 %v1771, 7
        %v1773 = vsub.s32 6, %v1772
        %v1774 = vrot.slane %v308, %v1773
        %v1775 = vlaneseq
        %v1776 = vshrl.u32 %v1775, 7
        %v1777 = vsub.s32 6, %v1776
        %v1778 = vrot.slane %v309, %v1777
        %v1779 = vlaneseq
        %v1780 = vshrl.u32 %v1779, 7
        %v1781 = vsub.s32 6, %v1780
        %v1782 = vrot.slane %v310, %v1781
        %v1783 = vlaneseq
        %v1784 = vshrl.u32 %v1783, 7
        %v1785 = vsub.s32 6, %v1784
        %v1786 = vrot.slane %v311, %v1785
        %v1787 = vlaneseq
        %v1788 = vshrl.u32 %v1787, 7
        %v1789 = vsub.s32 6, %v1788
        %v1790 = vrot.slane %v312, %v1789
        %v1791 = vlaneseq
        %v1792 = vshrl.u32 %v1791, 7
        %v1793 = vsub.s32 6, %v1792
        %v1794 = vrot.slane %v313, %v1793
        %v1795 = vlaneseq
        %v1796 = vshrl.u32 %v1795, 7
        %v1797 = vsub.s32 6, %v1796
        %v1798 = vrot.slane %v314, %v1797
        %v1799 = vmul.f32 %v641, %v1770
        %v1800 = vmul.f32 %v640, %v1774
        %v1801 = vmul.f32 %v639, %v1778
        %v1802 = vmul.f32 %v638, %v1782
        %v1803 = vmul.f32 %v637, %v1786
        %v1804 = vmul.f32 %v636, %v1790
        %v1805 = vmul.f32 %v635, %v1794
        %v1806 = vmul.f32 %v642, %v1798
        %1807 = vst [vmem:[#allocation2 + $0x580] sm:$0xff] %v1799
        %1808 = vst [vmem:[#allocation2 + $0x588] sm:$0xff] %v1800
        %1809 = vst [vmem:[#allocation2 + $0x590] sm:$0xff] %v1801
        %1810 = vst [vmem:[#allocation2 + $0x598] sm:$0xff] %v1802
        %1811 = vst [vmem:[#allocation2 + $0x5a0] sm:$0xff] %v1803
        %1812 = vst [vmem:[#allocation2 + $0x5a8] sm:$0xff] %v1804
        %1813 = vst [vmem:[#allocation2 + $0x5b0] sm:$0xff] %v1805
        %1814 = vst [vmem:[#allocation2 + $0x5b8] sm:$0xff] %v1806
        %v1815 = vlaneseq
        %v1816 = vshrl.u32 %v1815, 7
        %v1817 = vsub.s32 7, %v1816
        %v1818 = vrot.slane %v307, %v1817
        %v1819 = vlaneseq
        %v1820 = vshrl.u32 %v1819, 7
        %v1821 = vsub.s32 7, %v1820
        %v1822 = vrot.slane %v308, %v1821
        %v1823 = vlaneseq
        %v1824 = vshrl.u32 %v1823, 7
        %v1825 = vsub.s32 7, %v1824
        %v1826 = vrot.slane %v309, %v1825
        %v1827 = vlaneseq
        %v1828 = vshrl.u32 %v1827, 7
        %v1829 = vsub.s32 7, %v1828
        %v1830 = vrot.slane %v310, %v1829
        %v1831 = vlaneseq
        %v1832 = vshrl.u32 %v1831, 7
        %v1833 = vsub.s32 7, %v1832
        %v1834 = vrot.slane %v311, %v1833
        %v1835 = vlaneseq
        %v1836 = vshrl.u32 %v1835, 7
        %v1837 = vsub.s32 7, %v1836
        %v1838 = vrot.slane %v312, %v1837
        %v1839 = vlaneseq
        %v1840 = vshrl.u32 %v1839, 7
        %v1841 = vsub.s32 7, %v1840
        %v1842 = vrot.slane %v313, %v1841
        %v1843 = vlaneseq
        %v1844 = vshrl.u32 %v1843, 7
        %v1845 = vsub.s32 7, %v1844
        %v1846 = vrot.slane %v314, %v1845
        %v1847 = vmul.f32 %v714, %v1818
        %v1848 = vmul.f32 %v713, %v1822
        %v1849 = vmul.f32 %v712, %v1826
        %v1850 = vmul.f32 %v711, %v1830
        %v1851 = vmul.f32 %v710, %v1834
        %v1852 = vmul.f32 %v709, %v1838
        %v1853 = vmul.f32 %v708, %v1842
        %v1854 = vmul.f32 %v715, %v1846
        %1855 = vst [vmem:[#allocation2 + $0x5c0] sm:$0xff] %v1847
        %1856 = vst [vmem:[#allocation2 + $0x5c8] sm:$0xff] %v1848
        %1857 = vst [vmem:[#allocation2 + $0x5d0] sm:$0xff] %v1849
        %1858 = vst [vmem:[#allocation2 + $0x5d8] sm:$0xff] %v1850
        %1859 = vst [vmem:[#allocation2 + $0x5e0] sm:$0xff] %v1851
        %1860 = vst [vmem:[#allocation2 + $0x5e8] sm:$0xff] %v1852
        %1861 = vst [vmem:[#allocation2 + $0x5f0] sm:$0xff] %v1853
        %1862 = vst [vmem:[#allocation2 + $0x5f8] sm:$0xff] %v1854
        %v1863 = vlaneseq
        %v1864 = vshrl.u32 %v1863, 7
        %v1865 = vsub.s32 0, %v1864
        %v1866 = vrot.slane %v315, %v1865
        %v1867 = vlaneseq
        %v1868 = vshrl.u32 %v1867, 7
        %v1869 = vsub.s32 0, %v1868
        %v1870 = vrot.slane %v316, %v1869
        %v1871 = vlaneseq
        %v1872 = vshrl.u32 %v1871, 7
        %v1873 = vsub.s32 0, %v1872
        %v1874 = vrot.slane %v317, %v1873
        %v1875 = vlaneseq
        %v1876 = vshrl.u32 %v1875, 7
        %v1877 = vsub.s32 0, %v1876
        %v1878 = vrot.slane %v318, %v1877
        %v1879 = vlaneseq
        %v1880 = vshrl.u32 %v1879, 7
        %v1881 = vsub.s32 0, %v1880
        %v1882 = vrot.slane %v319, %v1881
        %v1883 = vlaneseq
        %v1884 = vshrl.u32 %v1883, 7
        %v1885 = vsub.s32 0, %v1884
        %v1886 = vrot.slane %v320, %v1885
        %v1887 = vlaneseq
        %v1888 = vshrl.u32 %v1887, 7
        %v1889 = vsub.s32 0, %v1888
        %v1890 = vrot.slane %v321, %v1889
        %v1891 = vlaneseq
        %v1892 = vshrl.u32 %v1891, 7
        %v1893 = vsub.s32 0, %v1892
        %v1894 = vrot.slane %v322, %v1893
        %v1895 = vmul.f32 %v787, %v1866
        %v1896 = vmul.f32 %v786, %v1870
        %v1897 = vmul.f32 %v785, %v1874
        %v1898 = vmul.f32 %v784, %v1878
        %v1899 = vmul.f32 %v783, %v1882
        %v1900 = vmul.f32 %v782, %v1886
        %v1901 = vmul.f32 %v781, %v1890
        %v1902 = vmul.f32 %v788, %v1894
        %1903 = vst [vmem:[#allocation2 + $0x600] sm:$0xff] %v1895
        %1904 = vst [vmem:[#allocation2 + $0x608] sm:$0xff] %v1896
        %1905 = vst [vmem:[#allocation2 + $0x610] sm:$0xff] %v1897
        %1906 = vst [vmem:[#allocation2 + $0x618] sm:$0xff] %v1898
        %1907 = vst [vmem:[#allocation2 + $0x620] sm:$0xff] %v1899
        %1908 = vst [vmem:[#allocation2 + $0x628] sm:$0xff] %v1900
        %1909 = vst [vmem:[#allocation2 + $0x630] sm:$0xff] %v1901
        %1910 = vst [vmem:[#allocation2 + $0x638] sm:$0xff] %v1902
        %v1911 = vlaneseq
        %v1912 = vshrl.u32 %v1911, 7
        %v1913 = vsub.s32 1, %v1912
        %v1914 = vrot.slane %v315, %v1913
        %v1915 = vlaneseq
        %v1916 = vshrl.u32 %v1915, 7
        %v1917 = vsub.s32 1, %v1916
        %v1918 = vrot.slane %v316, %v1917
        %v1919 = vlaneseq
        %v1920 = vshrl.u32 %v1919, 7
        %v1921 = vsub.s32 1, %v1920
        %v1922 = vrot.slane %v317, %v1921
        %v1923 = vlaneseq
        %v1924 = vshrl.u32 %v1923, 7
        %v1925 = vsub.s32 1, %v1924
        %v1926 = vrot.slane %v318, %v1925
        %v1927 = vlaneseq
        %v1928 = vshrl.u32 %v1927, 7
        %v1929 = vsub.s32 1, %v1928
        %v1930 = vrot.slane %v319, %v1929
        %v1931 = vlaneseq
        %v1932 = vshrl.u32 %v1931, 7
        %v1933 = vsub.s32 1, %v1932
        %v1934 = vrot.slane %v320, %v1933
        %v1935 = vlaneseq
        %v1936 = vshrl.u32 %v1935, 7
        %v1937 = vsub.s32 1, %v1936
        %v1938 = vrot.slane %v321, %v1937
        %v1939 = vlaneseq
        %v1940 = vshrl.u32 %v1939, 7
        %v1941 = vsub.s32 1, %v1940
        %v1942 = vrot.slane %v322, %v1941
        %v1943 = vmul.f32 %v860, %v1914
        %v1944 = vmul.f32 %v859, %v1918
        %v1945 = vmul.f32 %v858, %v1922
        %v1946 = vmul.f32 %v857, %v1926
        %v1947 = vmul.f32 %v856, %v1930
        %v1948 = vmul.f32 %v855, %v1934
        %v1949 = vmul.f32 %v854, %v1938
        %v1950 = vmul.f32 %v861, %v1942
        %1951 = vst [vmem:[#allocation2 + $0x640] sm:$0xff] %v1943
        %1952 = vst [vmem:[#allocation2 + $0x648] sm:$0xff] %v1944
        %1953 = vst [vmem:[#allocation2 + $0x650] sm:$0xff] %v1945
        %1954 = vst [vmem:[#allocation2 + $0x658] sm:$0xff] %v1946
        %1955 = vst [vmem:[#allocation2 + $0x660] sm:$0xff] %v1947
        %1956 = vst [vmem:[#allocation2 + $0x668] sm:$0xff] %v1948
        %1957 = vst [vmem:[#allocation2 + $0x670] sm:$0xff] %v1949
        %1958 = vst [vmem:[#allocation2 + $0x678] sm:$0xff] %v1950
        %v1959 = vlaneseq
        %v1960 = vshrl.u32 %v1959, 7
        %v1961 = vsub.s32 2, %v1960
        %v1962 = vrot.slane %v315, %v1961
        %v1963 = vlaneseq
        %v1964 = vshrl.u32 %v1963, 7
        %v1965 = vsub.s32 2, %v1964
        %v1966 = vrot.slane %v316, %v1965
        %v1967 = vlaneseq
        %v1968 = vshrl.u32 %v1967, 7
        %v1969 = vsub.s32 2, %v1968
        %v1970 = vrot.slane %v317, %v1969
        %v1971 = vlaneseq
        %v1972 = vshrl.u32 %v1971, 7
        %v1973 = vsub.s32 2, %v1972
        %v1974 = vrot.slane %v318, %v1973
        %v1975 = vlaneseq
        %v1976 = vshrl.u32 %v1975, 7
        %v1977 = vsub.s32 2, %v1976
        %v1978 = vrot.slane %v319, %v1977
        %v1979 = vlaneseq
        %v1980 = vshrl.u32 %v1979, 7
        %v1981 = vsub.s32 2, %v1980
        %v1982 = vrot.slane %v320, %v1981
        %v1983 = vlaneseq
        %v1984 = vshrl.u32 %v1983, 7
        %v1985 = vsub.s32 2, %v1984
        %v1986 = vrot.slane %v321, %v1985
        %v1987 = vlaneseq
        %v1988 = vshrl.u32 %v1987, 7
        %v1989 = vsub.s32 2, %v1988
        %v1990 = vrot.slane %v322, %v1989
        %v1991 = vmul.f32 %v933, %v1962
        %v1992 = vmul.f32 %v932, %v1966
        %v1993 = vmul.f32 %v931, %v1970
        %v1994 = vmul.f32 %v930, %v1974
        %v1995 = vmul.f32 %v929, %v1978
        %v1996 = vmul.f32 %v928, %v1982
        %v1997 = vmul.f32 %v927, %v1986
        %v1998 = vmul.f32 %v934, %v1990
        %1999 = vst [vmem:[#allocation2 + $0x680] sm:$0xff] %v1991
        %2000 = vst [vmem:[#allocation2 + $0x688] sm:$0xff] %v1992
        %2001 = vst [vmem:[#allocation2 + $0x690] sm:$0xff] %v1993
        %2002 = vst [vmem:[#allocation2 + $0x698] sm:$0xff] %v1994
        %2003 = vst [vmem:[#allocation2 + $0x6a0] sm:$0xff] %v1995
        %2004 = vst [vmem:[#allocation2 + $0x6a8] sm:$0xff] %v1996
        %2005 = vst [vmem:[#allocation2 + $0x6b0] sm:$0xff] %v1997
        %2006 = vst [vmem:[#allocation2 + $0x6b8] sm:$0xff] %v1998
        %v2007 = vld [vmem:[#allocation6] sm:$0xff]
        %v2008 = vld [vmem:[#allocation6 + $0x8] sm:$0xff]
        %v2009 = vld [vmem:[#allocation2] sm:$0xff]
        %v2010 = vld [vmem:[#allocation2 + $0x8] sm:$0xff]
        %v2011 = vld [vmem:[#allocation2 + $0x10] sm:$0xff]
        %v2012 = vld [vmem:[#allocation2 + $0x18] sm:$0xff]
        %v2013 = vld [vmem:[#allocation2 + $0x20] sm:$0xff]
        %v2014 = vld [vmem:[#allocation2 + $0x28] sm:$0xff]
        %v2015 = vld [vmem:[#allocation2 + $0x30] sm:$0xff]
        %v2016 = vld [vmem:[#allocation2 + $0x38] sm:$0xff]
        %v2017 = vld [vmem:[#allocation2 + $0x40] sm:$0xff]
        %v2018 = vld [vmem:[#allocation2 + $0x48] sm:$0xff]
        %v2019 = vld [vmem:[#allocation2 + $0x50] sm:$0xff]
        %v2020 = vld [vmem:[#allocation2 + $0x58] sm:$0xff]
        %v2021 = vld [vmem:[#allocation2 + $0x60] sm:$0xff]
        %v2022 = vld [vmem:[#allocation2 + $0x68] sm:$0xff]
        %v2023 = vld [vmem:[#allocation2 + $0x70] sm:$0xff]
        %v2024 = vld [vmem:[#allocation2 + $0x78] sm:$0xff]
        %v2025 = vld [vmem:[#allocation2 + $0x80] sm:$0xff]
        %v2026 = vld [vmem:[#allocation2 + $0x88] sm:$0xff]
        %v2027 = vld [vmem:[#allocation2 + $0x90] sm:$0xff]
        %v2028 = vld [vmem:[#allocation2 + $0x98] sm:$0xff]
        %v2029 = vld [vmem:[#allocation2 + $0xa0] sm:$0xff]
        %v2030 = vld [vmem:[#allocation2 + $0xa8] sm:$0xff]
        %v2031 = vld [vmem:[#allocation2 + $0xb0] sm:$0xff]
        %v2032 = vld [vmem:[#allocation2 + $0xb8] sm:$0xff]
        %v2033 = vld [vmem:[#allocation2 + $0xc0] sm:$0xff]
        %v2034 = vld [vmem:[#allocation2 + $0xc8] sm:$0xff]
        %v2035 = vld [vmem:[#allocation2 + $0xd0] sm:$0xff]
        %v2036 = vld [vmem:[#allocation2 + $0xd8] sm:$0xff]
        %v2037 = vld [vmem:[#allocation2 + $0xe0] sm:$0xff]
        %v2038 = vld [vmem:[#allocation2 + $0xe8] sm:$0xff]
        %v2039 = vld [vmem:[#allocation2 + $0xf0] sm:$0xff]
        %v2040 = vld [vmem:[#allocation2 + $0xf8] sm:$0xff]
        %v2041 = vld [vmem:[#allocation2 + $0x100] sm:$0xff]
        %v2042 = vld [vmem:[#allocation2 + $0x108] sm:$0xff]
        %v2043 = vld [vmem:[#allocation2 + $0x110] sm:$0xff]
        %v2044 = vld [vmem:[#allocation2 + $0x118] sm:$0xff]
        %v2045 = vld [vmem:[#allocation2 + $0x120] sm:$0xff]
        %v2046 = vld [vmem:[#allocation2 + $0x128] sm:$0xff]
        %v2047 = vld [vmem:[#allocation2 + $0x130] sm:$0xff]
        %v2048 = vld [vmem:[#allocation2 + $0x138] sm:$0xff]
        %v2049 = vld [vmem:[#allocation2 + $0x140] sm:$0xff]
        %v2050 = vld [vmem:[#allocation2 + $0x148] sm:$0xff]
        %v2051 = vld [vmem:[#allocation2 + $0x150] sm:$0xff]
        %v2052 = vld [vmem:[#allocation2 + $0x158] sm:$0xff]
        %v2053 = vld [vmem:[#allocation2 + $0x160] sm:$0xff]
        %v2054 = vld [vmem:[#allocation2 + $0x168] sm:$0xff]
        %v2055 = vld [vmem:[#allocation2 + $0x170] sm:$0xff]
        %v2056 = vld [vmem:[#allocation2 + $0x178] sm:$0xff]
        %v2057 = vld [vmem:[#allocation2 + $0x180] sm:$0xff]
        %v2058 = vld [vmem:[#allocation2 + $0x188] sm:$0xff]
        %v2059 = vld [vmem:[#allocation2 + $0x190] sm:$0xff]
        %v2060 = vld [vmem:[#allocation2 + $0x198] sm:$0xff]
        %v2061 = vld [vmem:[#allocation2 + $0x1a0] sm:$0xff]
        %v2062 = vld [vmem:[#allocation2 + $0x1a8] sm:$0xff]
        %v2063 = vld [vmem:[#allocation2 + $0x1b0] sm:$0xff]
        %v2064 = vld [vmem:[#allocation2 + $0x1b8] sm:$0xff]
        %v2065 = vld [vmem:[#allocation2 + $0x1c0] sm:$0xff]
        %v2066 = vld [vmem:[#allocation2 + $0x1c8] sm:$0xff]
        %v2067 = vld [vmem:[#allocation2 + $0x1d0] sm:$0xff]
        %v2068 = vld [vmem:[#allocation2 + $0x1d8] sm:$0xff]
        %v2069 = vld [vmem:[#allocation2 + $0x1e0] sm:$0xff]
        %v2070 = vld [vmem:[#allocation2 + $0x1e8] sm:$0xff]
        %v2071 = vld [vmem:[#allocation2 + $0x1f0] sm:$0xff]
        %v2072 = vld [vmem:[#allocation2 + $0x1f8] sm:$0xff]
        %v2073 = vld [vmem:[#allocation2 + $0x200] sm:$0xff]
        %v2074 = vld [vmem:[#allocation2 + $0x208] sm:$0xff]
        %v2075 = vld [vmem:[#allocation2 + $0x210] sm:$0xff]
        %v2076 = vld [vmem:[#allocation2 + $0x218] sm:$0xff]
        %v2077 = vld [vmem:[#allocation2 + $0x220] sm:$0xff]
        %v2078 = vld [vmem:[#allocation2 + $0x228] sm:$0xff]
        %v2079 = vld [vmem:[#allocation2 + $0x230] sm:$0xff]
        %v2080 = vld [vmem:[#allocation2 + $0x238] sm:$0xff]
        %v2081 = vld [vmem:[#allocation2 + $0x240] sm:$0xff]
        %v2082 = vld [vmem:[#allocation2 + $0x248] sm:$0xff]
        %v2083 = vld [vmem:[#allocation2 + $0x250] sm:$0xff]
        %v2084 = vld [vmem:[#allocation2 + $0x258] sm:$0xff]
        %v2085 = vld [vmem:[#allocation2 + $0x260] sm:$0xff]
        %v2086 = vld [vmem:[#allocation2 + $0x268] sm:$0xff]
        %v2087 = vld [vmem:[#allocation2 + $0x270] sm:$0xff]
        %v2088 = vld [vmem:[#allocation2 + $0x278] sm:$0xff]
        %v2089 = vld [vmem:[#allocation2 + $0x280] sm:$0xff]
        %v2090 = vld [vmem:[#allocation2 + $0x288] sm:$0xff]
        %v2091 = vld [vmem:[#allocation2 + $0x290] sm:$0xff]
        %v2092 = vld [vmem:[#allocation2 + $0x298] sm:$0xff]
        %v2093 = vld [vmem:[#allocation2 + $0x2a0] sm:$0xff]
        %v2094 = vld [vmem:[#allocation2 + $0x2a8] sm:$0xff]
        %v2095 = vld [vmem:[#allocation2 + $0x2b0] sm:$0xff]
        %v2096 = vld [vmem:[#allocation2 + $0x2b8] sm:$0xff]
        %v2097 = vld [vmem:[#allocation2 + $0x2c0] sm:$0xff]
        %v2098 = vld [vmem:[#allocation2 + $0x2c8] sm:$0xff]
        %v2099 = vld [vmem:[#allocation2 + $0x2d0] sm:$0xff]
        %v2100 = vld [vmem:[#allocation2 + $0x2d8] sm:$0xff]
        %v2101 = vld [vmem:[#allocation2 + $0x2e0] sm:$0xff]
        %v2102 = vld [vmem:[#allocation2 + $0x2e8] sm:$0xff]
        %v2103 = vld [vmem:[#allocation2 + $0x2f0] sm:$0xff]
        %v2104 = vld [vmem:[#allocation2 + $0x2f8] sm:$0xff]
        %v2105 = vld [vmem:[#allocation2 + $0x300] sm:$0xff]
        %v2106 = vld [vmem:[#allocation2 + $0x308] sm:$0xff]
        %v2107 = vld [vmem:[#allocation2 + $0x310] sm:$0xff]
        %v2108 = vld [vmem:[#allocation2 + $0x318] sm:$0xff]
        %v2109 = vld [vmem:[#allocation2 + $0x320] sm:$0xff]
        %v2110 = vld [vmem:[#allocation2 + $0x328] sm:$0xff]
        %v2111 = vld [vmem:[#allocation2 + $0x330] sm:$0xff]
        %v2112 = vld [vmem:[#allocation2 + $0x338] sm:$0xff]
        %v2113 = vld [vmem:[#allocation2 + $0x340] sm:$0xff]
        %v2114 = vld [vmem:[#allocation2 + $0x348] sm:$0xff]
        %v2115 = vld [vmem:[#allocation2 + $0x350] sm:$0xff]
        %v2116 = vld [vmem:[#allocation2 + $0x358] sm:$0xff]
        %v2117 = vld [vmem:[#allocation2 + $0x360] sm:$0xff]
        %v2118 = vld [vmem:[#allocation2 + $0x368] sm:$0xff]
        %v2119 = vld [vmem:[#allocation2 + $0x370] sm:$0xff]
        %v2120 = vld [vmem:[#allocation2 + $0x378] sm:$0xff]
        %v2121 = vld [vmem:[#allocation2 + $0x380] sm:$0xff]
        %v2122 = vld [vmem:[#allocation2 + $0x388] sm:$0xff]
        %v2123 = vld [vmem:[#allocation2 + $0x390] sm:$0xff]
        %v2124 = vld [vmem:[#allocation2 + $0x398] sm:$0xff]
        %v2125 = vld [vmem:[#allocation2 + $0x3a0] sm:$0xff]
        %v2126 = vld [vmem:[#allocation2 + $0x3a8] sm:$0xff]
        %v2127 = vld [vmem:[#allocation2 + $0x3b0] sm:$0xff]
        %v2128 = vld [vmem:[#allocation2 + $0x3b8] sm:$0xff]
        %v2129 = vld [vmem:[#allocation2 + $0x3c0] sm:$0xff]
        %v2130 = vld [vmem:[#allocation2 + $0x3c8] sm:$0xff]
        %v2131 = vld [vmem:[#allocation2 + $0x3d0] sm:$0xff]
        %v2132 = vld [vmem:[#allocation2 + $0x3d8] sm:$0xff]
        %v2133 = vld [vmem:[#allocation2 + $0x3e0] sm:$0xff]
        %v2134 = vld [vmem:[#allocation2 + $0x3e8] sm:$0xff]
        %v2135 = vld [vmem:[#allocation2 + $0x3f0] sm:$0xff]
        %v2136 = vld [vmem:[#allocation2 + $0x3f8] sm:$0xff]
        %v2137 = vld [vmem:[#allocation2 + $0x400] sm:$0xff]
        %v2138 = vld [vmem:[#allocation2 + $0x408] sm:$0xff]
        %v2139 = vld [vmem:[#allocation2 + $0x410] sm:$0xff]
        %v2140 = vld [vmem:[#allocation2 + $0x418] sm:$0xff]
        %v2141 = vld [vmem:[#allocation2 + $0x420] sm:$0xff]
        %v2142 = vld [vmem:[#allocation2 + $0x428] sm:$0xff]
        %v2143 = vld [vmem:[#allocation2 + $0x430] sm:$0xff]
        %v2144 = vld [vmem:[#allocation2 + $0x438] sm:$0xff]
        %v2145 = vld [vmem:[#allocation2 + $0x440] sm:$0xff]
        %v2146 = vld [vmem:[#allocation2 + $0x448] sm:$0xff]
        %v2147 = vld [vmem:[#allocation2 + $0x450] sm:$0xff]
        %v2148 = vld [vmem:[#allocation2 + $0x458] sm:$0xff]
        %v2149 = vld [vmem:[#allocation2 + $0x460] sm:$0xff]
        %v2150 = vld [vmem:[#allocation2 + $0x468] sm:$0xff]
        %v2151 = vld [vmem:[#allocation2 + $0x470] sm:$0xff]
        %v2152 = vld [vmem:[#allocation2 + $0x478] sm:$0xff]
        %v2153 = vld [vmem:[#allocation2 + $0x480] sm:$0xff]
        %v2154 = vld [vmem:[#allocation2 + $0x488] sm:$0xff]
        %v2155 = vld [vmem:[#allocation2 + $0x490] sm:$0xff]
        %v2156 = vld [vmem:[#allocation2 + $0x498] sm:$0xff]
        %v2157 = vld [vmem:[#allocation2 + $0x4a0] sm:$0xff]
        %v2158 = vld [vmem:[#allocation2 + $0x4a8] sm:$0xff]
        %v2159 = vld [vmem:[#allocation2 + $0x4b0] sm:$0xff]
        %v2160 = vld [vmem:[#allocation2 + $0x4b8] sm:$0xff]
        %v2161 = vld [vmem:[#allocation2 + $0x4c0] sm:$0xff]
        %v2162 = vld [vmem:[#allocation2 + $0x4c8] sm:$0xff]
        %v2163 = vld [vmem:[#allocation2 + $0x4d0] sm:$0xff]
        %v2164 = vld [vmem:[#allocation2 + $0x4d8] sm:$0xff]
        %v2165 = vld [vmem:[#allocation2 + $0x4e0] sm:$0xff]
        %v2166 = vld [vmem:[#allocation2 + $0x4e8] sm:$0xff]
        %v2167 = vld [vmem:[#allocation2 + $0x4f0] sm:$0xff]
        %v2168 = vld [vmem:[#allocation2 + $0x4f8] sm:$0xff]
        %v2169 = vld [vmem:[#allocation2 + $0x500] sm:$0xff]
        %v2170 = vld [vmem:[#allocation2 + $0x508] sm:$0xff]
        %v2171 = vld [vmem:[#allocation2 + $0x510] sm:$0xff]
        %v2172 = vld [vmem:[#allocation2 + $0x518] sm:$0xff]
        %v2173 = vld [vmem:[#allocation2 + $0x520] sm:$0xff]
        %v2174 = vld [vmem:[#allocation2 + $0x528] sm:$0xff]
        %v2175 = vld [vmem:[#allocation2 + $0x530] sm:$0xff]
        %v2176 = vld [vmem:[#allocation2 + $0x538] sm:$0xff]
        %v2177 = vld [vmem:[#allocation2 + $0x540] sm:$0xff]
        %v2178 = vld [vmem:[#allocation2 + $0x548] sm:$0xff]
        %v2179 = vld [vmem:[#allocation2 + $0x550] sm:$0xff]
        %v2180 = vld [vmem:[#allocation2 + $0x558] sm:$0xff]
        %v2181 = vld [vmem:[#allocation2 + $0x560] sm:$0xff]
        %v2182 = vld [vmem:[#allocation2 + $0x568] sm:$0xff]
        %v2183 = vld [vmem:[#allocation2 + $0x570] sm:$0xff]
        %v2184 = vld [vmem:[#allocation2 + $0x578] sm:$0xff]
        %v2185 = vld [vmem:[#allocation2 + $0x580] sm:$0xff]
        %v2186 = vld [vmem:[#allocation2 + $0x588] sm:$0xff]
        %v2187 = vld [vmem:[#allocation2 + $0x590] sm:$0xff]
        %v2188 = vld [vmem:[#allocation2 + $0x598] sm:$0xff]
        %v2189 = vld [vmem:[#allocation2 + $0x5a0] sm:$0xff]
        %v2190 = vld [vmem:[#allocation2 + $0x5a8] sm:$0xff]
        %v2191 = vld [vmem:[#allocation2 + $0x5b0] sm:$0xff]
        %v2192 = vld [vmem:[#allocation2 + $0x5b8] sm:$0xff]
        %v2193 = vld [vmem:[#allocation2 + $0x5c0] sm:$0xff]
        %v2194 = vld [vmem:[#allocation2 + $0x5c8] sm:$0xff]
        %v2195 = vld [vmem:[#allocation2 + $0x5d0] sm:$0xff]
        %v2196 = vld [vmem:[#allocation2 + $0x5d8] sm:$0xff]
        %v2197 = vld [vmem:[#allocation2 + $0x5e0] sm:$0xff]
        %v2198 = vld [vmem:[#allocation2 + $0x5e8] sm:$0xff]
        %v2199 = vld [vmem:[#allocation2 + $0x5f0] sm:$0xff]
        %v2200 = vld [vmem:[#allocation2 + $0x5f8] sm:$0xff]
        %v2201 = vld [vmem:[#allocation2 + $0x600] sm:$0xff]
        %v2202 = vld [vmem:[#allocation2 + $0x608] sm:$0xff]
        %v2203 = vld [vmem:[#allocation2 + $0x610] sm:$0xff]
        %v2204 = vld [vmem:[#allocation2 + $0x618] sm:$0xff]
        %v2205 = vld [vmem:[#allocation2 + $0x620] sm:$0xff]
        %v2206 = vld [vmem:[#allocation2 + $0x628] sm:$0xff]
        %v2207 = vld [vmem:[#allocation2 + $0x630] sm:$0xff]
        %v2208 = vld [vmem:[#allocation2 + $0x638] sm:$0xff]
        %v2209 = vld [vmem:[#allocation2 + $0x640] sm:$0xff]
        %v2210 = vld [vmem:[#allocation2 + $0x648] sm:$0xff]
        %v2211 = vld [vmem:[#allocation2 + $0x650] sm:$0xff]
        %v2212 = vld [vmem:[#allocation2 + $0x658] sm:$0xff]
        %v2213 = vld [vmem:[#allocation2 + $0x660] sm:$0xff]
        %v2214 = vld [vmem:[#allocation2 + $0x668] sm:$0xff]
        %v2215 = vld [vmem:[#allocation2 + $0x670] sm:$0xff]
        %v2216 = vld [vmem:[#allocation2 + $0x678] sm:$0xff]
        %v2217 = vld [vmem:[#allocation2 + $0x680] sm:$0xff]
        %v2218 = vld [vmem:[#allocation2 + $0x688] sm:$0xff]
        %v2219 = vld [vmem:[#allocation2 + $0x690] sm:$0xff]
        %v2220 = vld [vmem:[#allocation2 + $0x698] sm:$0xff]
        %v2221 = vld [vmem:[#allocation2 + $0x6a0] sm:$0xff]
        %v2222 = vld [vmem:[#allocation2 + $0x6a8] sm:$0xff]
        %v2223 = vld [vmem:[#allocation2 + $0x6b0] sm:$0xff]
        %v2224 = vld [vmem:[#allocation2 + $0x6b8] sm:$0xff]
        %2226 = vset.pattern.permute.xlu0 0
        %2227 = vperm.xlu0 %2226, %v323
        %v2228 = vpop.permute.xlu0 %2227
        %vm2230 = vcmask 719872
        %v2232 = vsel %vm2230, %v2008, 0
        %2234 = vmatprep.subr.mxu0 %v2130
        %2235 = vmatpush1.msra.mxu0 %v2129
        %2236 = vmatprep.subr.mxu0 %v2122
        %2237 = vmatpush1.msra.mxu0 %v2121
        %2238 = vmatprep.subr.mxu0 %v2114
        %2239 = vmatpush1.msra.mxu0 %v2113
        %2240 = vmatprep.subr.mxu0 %v2106
        %2241 = vmatpush1.msra.mxu0 %v2105
        %2242 = vmatprep.subr.mxu0 %v2098
        %2243 = vmatpush1.msra.mxu0 %v2097
        %2244 = vmatprep.subr.mxu0 %v2090
        %2245 = vmatpush1.msra.mxu0 %v2089
        %2246 = vmatprep.subr.mxu0 %v2082
        %2247 = vmatpush1.msra.mxu0 %v2081
        %2248 = vmatprep.subr.mxu0 %v2074
        %2249 = vmatpush1.msra.mxu0 %v2073
        %2250 = vmatprep.subr.mxu0 %v2066
        %2251 = vmatpush1.msra.mxu0 %v2065
        %2252 = vmatprep.subr.mxu0 %v2058
        %2253 = vmatpush1.msra.mxu0 %v2057
        %2254 = vmatprep.subr.mxu0 %v2050
        %2255 = vmatpush1.msra.mxu0 %v2049
        %2256 = vmatprep.subr.mxu0 %v2042
        %2257 = vmatpush1.msra.mxu0 %v2041
        %2258 = vmatprep.subr.mxu0 %v2034
        %2259 = vmatpush1.msra.mxu0 %v2033
        %2260 = vmatprep.subr.mxu0 %v2026
        %2261 = vmatpush1.msra.mxu0 %v2025
        %2262 = vmatprep.subr.mxu0 %v2018
        %2263 = vmatpush1.msra.mxu0 %v2017
        %2264 = vmatprep.subr.mxu0 %v2010
        %2265 = vmatpush1.msra.mxu0 %v2009
        %2266 = vmatprep.subr.mxu0 0.0
        %2267 = vmatpush2.msra.mxu0 0.0
        %2268 = vmatprep.subr.mxu0 0.0
        %2269 = vmatpush2.msra.mxu0 0.0
        %2270 = vmatprep.subr.mxu0 0.0
        %2271 = vmatpush2.msra.mxu0 0.0
        %2272 = vmatprep.subr.mxu0 0.0
        %2273 = vmatpush2.msra.mxu0 0.0
        %2274 = vmatprep.subr.mxu0 0.0
        %2275 = vmatpush2.msra.mxu0 0.0
        %2276 = vmatprep.subr.mxu0 %v2218
        %2277 = vmatpush2.msra.mxu0 %v2217
        %2278 = vmatprep.subr.mxu0 %v2210
        %2279 = vmatpush2.msra.mxu0 %v2209
        %2280 = vmatprep.subr.mxu0 %v2202
        %2281 = vmatpush2.msra.mxu0 %v2201
        %2282 = vmatprep.subr.mxu0 %v2194
        %2283 = vmatpush2.msra.mxu0 %v2193
        %2284 = vmatprep.subr.mxu0 %v2186
        %2285 = vmatpush2.msra.mxu0 %v2185
        %2286 = vmatprep.subr.mxu0 %v2178
        %2287 = vmatpush2.msra.mxu0 %v2177
        %2288 = vmatprep.subr.mxu0 %v2170
        %2289 = vmatpush2.msra.mxu0 %v2169
        %2290 = vmatprep.subr.mxu0 %v2162
        %2291 = vmatpush2.msra.mxu0 %v2161
        %2292 = vmatprep.subr.mxu0 %v2154
        %2293 = vmatpush2.msra.mxu0 %v2153
        %2294 = vmatprep.subr.mxu0 %v2146
        %2295 = vmatpush2.msra.mxu0 %v2145
        %2296 = vmatprep.subr.mxu0 %v2138
        %2297 = vmatpush2.msra.mxu0 %v2137
        %2298 = vmatprep.mubr.f32.mxu0 %v2232
        %2299 = vmatmul.mubr.f32.gmra.mxu0 %v2007
        %v2300 = vpop.f32.mrf.mxu0
        %v2301 = vadd.f32 %v2228, %v2300
        %v2302 = vpop.f32.mrf.mxu0
        %v2303 = vadd.f32 %v2228, %v2302
        %2304 = vdwg.mxu0
        %2305 = vmatprep.subr.mxu0 %v2132
        %2306 = vmatpush1.msra.mxu0 %v2131
        %2307 = vmatprep.subr.mxu0 %v2124
        %2308 = vmatpush1.msra.mxu0 %v2123
        %2309 = vmatprep.subr.mxu0 %v2116
        %2310 = vmatpush1.msra.mxu0 %v2115
        %2311 = vmatprep.subr.mxu0 %v2108
        %2312 = vmatpush1.msra.mxu0 %v2107
        %2313 = vmatprep.subr.mxu0 %v2100
        %2314 = vmatpush1.msra.mxu0 %v2099
        %2315 = vmatprep.subr.mxu0 %v2092
        %2316 = vmatpush1.msra.mxu0 %v2091
        %2317 = vmatprep.subr.mxu0 %v2084
        %2318 = vmatpush1.msra.mxu0 %v2083
        %2319 = vmatprep.subr.mxu0 %v2076
        %2320 = vmatpush1.msra.mxu0 %v2075
        %2321 = vmatprep.subr.mxu0 %v2068
        %2322 = vmatpush1.msra.mxu0 %v2067
        %2323 = vmatprep.subr.mxu0 %v2060
        %2324 = vmatpush1.msra.mxu0 %v2059
        %2325 = vmatprep.subr.mxu0 %v2052
        %2326 = vmatpush1.msra.mxu0 %v2051
        %2327 = vmatprep.subr.mxu0 %v2044
        %2328 = vmatpush1.msra.mxu0 %v2043
        %2329 = vmatprep.subr.mxu0 %v2036
        %2330 = vmatpush1.msra.mxu0 %v2035
        %2331 = vmatprep.subr.mxu0 %v2028
        %2332 = vmatpush1.msra.mxu0 %v2027
        %2333 = vmatprep.subr.mxu0 %v2020
        %2334 = vmatpush1.msra.mxu0 %v2019
        %2335 = vmatprep.subr.mxu0 %v2012
        %2336 = vmatpush1.msra.mxu0 %v2011
        %2337 = vmatprep.subr.mxu0 0.0
        %2338 = vmatpush2.msra.mxu0 0.0
        %2339 = vmatprep.subr.mxu0 0.0
        %2340 = vmatpush2.msra.mxu0 0.0
        %2341 = vmatprep.subr.mxu0 0.0
        %2342 = vmatpush2.msra.mxu0 0.0
        %2343 = vmatprep.subr.mxu0 0.0
        %2344 = vmatpush2.msra.mxu0 0.0
        %2345 = vmatprep.subr.mxu0 0.0
        %2346 = vmatpush2.msra.mxu0 0.0
        %2347 = vmatprep.subr.mxu0 %v2220
        %2348 = vmatpush2.msra.mxu0 %v2219
        %2349 = vmatprep.subr.mxu0 %v2212
        %2350 = vmatpush2.msra.mxu0 %v2211
        %2351 = vmatprep.subr.mxu0 %v2204
        %2352 = vmatpush2.msra.mxu0 %v2203
        %2353 = vmatprep.subr.mxu0 %v2196
        %2354 = vmatpush2.msra.mxu0 %v2195
        %2355 = vmatprep.subr.mxu0 %v2188
        %2356 = vmatpush2.msra.mxu0 %v2187
        %2357 = vmatprep.subr.mxu0 %v2180
        %2358 = vmatpush2.msra.mxu0 %v2179
        %2359 = vmatprep.subr.mxu0 %v2172
        %2360 = vmatpush2.msra.mxu0 %v2171
        %2361 = vmatprep.subr.mxu0 %v2164
        %2362 = vmatpush2.msra.mxu0 %v2163
        %2363 = vmatprep.subr.mxu0 %v2156
        %2364 = vmatpush2.msra.mxu0 %v2155
        %2365 = vmatprep.subr.mxu0 %v2148
        %2366 = vmatpush2.msra.mxu0 %v2147
        %2367 = vmatprep.subr.mxu0 %v2140
        %2368 = vmatpush2.msra.mxu0 %v2139
        %2369 = vmatprep.mubr.f32.mxu0 %v2232
        %2370 = vmatmul.mubr.f32.gmra.mxu0 %v2007
        %v2371 = vpop.f32.mrf.mxu0
        %v2372 = vadd.f32 %v2228, %v2371
        %v2373 = vpop.f32.mrf.mxu0
        %v2374 = vadd.f32 %v2228, %v2373
        %2375 = vdwg.mxu0
        %2376 = vmatprep.subr.mxu0 %v2134
        %2377 = vmatpush1.msra.mxu0 %v2133
        %2378 = vmatprep.subr.mxu0 %v2126
        %2379 = vmatpush1.msra.mxu0 %v2125
        %2380 = vmatprep.subr.mxu0 %v2118
        %2381 = vmatpush1.msra.mxu0 %v2117
        %2382 = vmatprep.subr.mxu0 %v2110
        %2383 = vmatpush1.msra.mxu0 %v2109
        %2384 = vmatprep.subr.mxu0 %v2102
        %2385 = vmatpush1.msra.mxu0 %v2101
        %2386 = vmatprep.subr.mxu0 %v2094
        %2387 = vmatpush1.msra.mxu0 %v2093
        %2388 = vmatprep.subr.mxu0 %v2086
        %2389 = vmatpush1.msra.mxu0 %v2085
        %2390 = vmatprep.subr.mxu0 %v2078
        %2391 = vmatpush1.msra.mxu0 %v2077
        %2392 = vmatprep.subr.mxu0 %v2070
        %2393 = vmatpush1.msra.mxu0 %v2069
        %2394 = vmatprep.subr.mxu0 %v2062
        %2395 = vmatpush1.msra.mxu0 %v2061
        %2396 = vmatprep.subr.mxu0 %v2054
        %2397 = vmatpush1.msra.mxu0 %v2053
        %2398 = vmatprep.subr.mxu0 %v2046
        %2399 = vmatpush1.msra.mxu0 %v2045
        %2400 = vmatprep.subr.mxu0 %v2038
        %2401 = vmatpush1.msra.mxu0 %v2037
        %2402 = vmatprep.subr.mxu0 %v2030
        %2403 = vmatpush1.msra.mxu0 %v2029
        %2404 = vmatprep.subr.mxu0 %v2022
        %2405 = vmatpush1.msra.mxu0 %v2021
        %2406 = vmatprep.subr.mxu0 %v2014
        %2407 = vmatpush1.msra.mxu0 %v2013
        %2408 = vmatprep.subr.mxu0 0.0
        %2409 = vmatpush2.msra.mxu0 0.0
        %2410 = vmatprep.subr.mxu0 0.0
        %2411 = vmatpush2.msra.mxu0 0.0
        %2412 = vmatprep.subr.mxu0 0.0
        %2413 = vmatpush2.msra.mxu0 0.0
        %2414 = vmatprep.subr.mxu0 0.0
        %2415 = vmatpush2.msra.mxu0 0.0
        %2416 = vmatprep.subr.mxu0 0.0
        %2417 = vmatpush2.msra.mxu0 0.0
        %2418 = vmatprep.subr.mxu0 %v2222
        %2419 = vmatpush2.msra.mxu0 %v2221
        %2420 = vmatprep.subr.mxu0 %v2214
        %2421 = vmatpush2.msra.mxu0 %v2213
        %2422 = vmatprep.subr.mxu0 %v2206
        %2423 = vmatpush2.msra.mxu0 %v2205
        %2424 = vmatprep.subr.mxu0 %v2198
        %2425 = vmatpush2.msra.mxu0 %v2197
        %2426 = vmatprep.subr.mxu0 %v2190
        %2427 = vmatpush2.msra.mxu0 %v2189
        %2428 = vmatprep.subr.mxu0 %v2182
        %2429 = vmatpush2.msra.mxu0 %v2181
        %2430 = vmatprep.subr.mxu0 %v2174
        %2431 = vmatpush2.msra.mxu0 %v2173
        %2432 = vmatprep.subr.mxu0 %v2166
        %2433 = vmatpush2.msra.mxu0 %v2165
        %2434 = vmatprep.subr.mxu0 %v2158
        %2435 = vmatpush2.msra.mxu0 %v2157
        %2436 = vmatprep.subr.mxu0 %v2150
        %2437 = vmatpush2.msra.mxu0 %v2149
        %2438 = vmatprep.subr.mxu0 %v2142
        %2439 = vmatpush2.msra.mxu0 %v2141
        %2440 = vmatprep.mubr.f32.mxu0 %v2232
        %2441 = vmatmul.mubr.f32.gmra.mxu0 %v2007
        %v2442 = vpop.f32.mrf.mxu0
        %v2443 = vadd.f32 %v2228, %v2442
        %v2444 = vpop.f32.mrf.mxu0
        %v2445 = vadd.f32 %v2228, %v2444
        %2446 = vdwg.mxu0
        %2447 = vmatprep.subr.mxu0 %v2136
        %2448 = vmatpush1.msra.mxu0 %v2135
        %2449 = vmatprep.subr.mxu0 %v2128
        %2450 = vmatpush1.msra.mxu0 %v2127
        %2451 = vmatprep.subr.mxu0 %v2120
        %2452 = vmatpush1.msra.mxu0 %v2119
        %2453 = vmatprep.subr.mxu0 %v2112
        %2454 = vmatpush1.msra.mxu0 %v2111
        %2455 = vmatprep.subr.mxu0 %v2104
        %2456 = vmatpush1.msra.mxu0 %v2103
        %2457 = vmatprep.subr.mxu0 %v2096
        %2458 = vmatpush1.msra.mxu0 %v2095
        %2459 = vmatprep.subr.mxu0 %v2088
        %2460 = vmatpush1.msra.mxu0 %v2087
        %2461 = vmatprep.subr.mxu0 %v2080
        %2462 = vmatpush1.msra.mxu0 %v2079
        %2463 = vmatprep.subr.mxu0 %v2072
        %2464 = vmatpush1.msra.mxu0 %v2071
        %2465 = vmatprep.subr.mxu0 %v2064
        %2466 = vmatpush1.msra.mxu0 %v2063
        %2467 = vmatprep.subr.mxu0 %v2056
        %2468 = vmatpush1.msra.mxu0 %v2055
        %2469 = vmatprep.subr.mxu0 %v2048
        %2470 = vmatpush1.msra.mxu0 %v2047
        %2471 = vmatprep.subr.mxu0 %v2040
        %2472 = vmatpush1.msra.mxu0 %v2039
        %2473 = vmatprep.subr.mxu0 %v2032
        %2474 = vmatpush1.msra.mxu0 %v2031
        %2475 = vmatprep.subr.mxu0 %v2024
        %2476 = vmatpush1.msra.mxu0 %v2023
        %2477 = vmatprep.subr.mxu0 %v2016
        %2478 = vmatpush1.msra.mxu0 %v2015
        %2479 = vmatprep.subr.mxu0 0.0
        %2480 = vmatpush2.msra.mxu0 0.0
        %2481 = vmatprep.subr.mxu0 0.0
        %2482 = vmatpush2.msra.mxu0 0.0
        %2483 = vmatprep.subr.mxu0 0.0
        %2484 = vmatpush2.msra.mxu0 0.0
        %2485 = vmatprep.subr.mxu0 0.0
        %2486 = vmatpush2.msra.mxu0 0.0
        %2487 = vmatprep.subr.mxu0 0.0
        %2488 = vmatpush2.msra.mxu0 0.0
        %2489 = vmatprep.subr.mxu0 %v2224
        %2490 = vmatpush2.msra.mxu0 %v2223
        %2491 = vmatprep.subr.mxu0 %v2216
        %2492 = vmatpush2.msra.mxu0 %v2215
        %2493 = vmatprep.subr.mxu0 %v2208
        %2494 = vmatpush2.msra.mxu0 %v2207
        %2495 = vmatprep.subr.mxu0 %v2200
        %2496 = vmatpush2.msra.mxu0 %v2199
        %2497 = vmatprep.subr.mxu0 %v2192
        %2498 = vmatpush2.msra.mxu0 %v2191
        %2499 = vmatprep.subr.mxu0 %v2184
        %2500 = vmatpush2.msra.mxu0 %v2183
        %2501 = vmatprep.subr.mxu0 %v2176
        %2502 = vmatpush2.msra.mxu0 %v2175
        %2503 = vmatprep.subr.mxu0 %v2168
        %2504 = vmatpush2.msra.mxu0 %v2167
        %2505 = vmatprep.subr.mxu0 %v2160
        %2506 = vmatpush2.msra.mxu0 %v2159
        %2507 = vmatprep.subr.mxu0 %v2152
        %2508 = vmatpush2.msra.mxu0 %v2151
        %2509 = vmatprep.subr.mxu0 %v2144
        %2510 = vmatpush2.msra.mxu0 %v2143
        %2511 = vmatprep.mubr.f32.mxu0 %v2232
        %2512 = vmatmul.mubr.f32.gmra.mxu0 %v2007
        %v2513 = vpop.f32.mrf.mxu0
        %v2514 = vadd.f32 %v2228, %v2513
        %v2515 = vpop.f32.mrf.mxu0
        %v2516 = vadd.f32 %v2228, %v2515
        %2517 = vdwg.mxu0
        %vm2518 = vcmp.ge.f32.partialorder %v2301, 0.0
        %vm2519 = vcmp.ge.f32.partialorder %v2303, 0.0
        %vm2520 = vcmp.ge.f32.partialorder %v2372, 0.0
        %vm2521 = vcmp.ge.f32.partialorder %v2374, 0.0
        %vm2522 = vcmp.ge.f32.partialorder %v2443, 0.0
        %vm2523 = vcmp.ge.f32.partialorder %v2445, 0.0
        %vm2524 = vcmp.ge.f32.partialorder %v2514, 0.0
        %vm2525 = vcmp.ge.f32.partialorder %v2516, 0.0
        %v2526 = vmul.f32 %v2301, 0.01
        %v2527 = vmul.f32 %v2303, 0.01
        %v2528 = vmul.f32 %v2372, 0.01
        %v2529 = vmul.f32 %v2374, 0.01
        %v2530 = vmul.f32 %v2443, 0.01
        %v2531 = vmul.f32 %v2445, 0.01
        %v2532 = vmul.f32 %v2514, 0.01
        %v2533 = vmul.f32 %v2516, 0.01
        %v2534 = vsel %vm2518, %v2301, %v2526
        %v2535 = vsel %vm2519, %v2303, %v2527
        %v2536 = vsel %vm2520, %v2372, %v2528
        %v2537 = vsel %vm2521, %v2374, %v2529
        %v2538 = vsel %vm2522, %v2443, %v2530
        %v2539 = vsel %vm2523, %v2445, %v2531
        %v2540 = vsel %vm2524, %v2514, %v2532
        %v2541 = vsel %vm2525, %v2516, %v2533
        %2542 = vrot.lane.b32.xlu0 %v2534, 73
        %v2543 = vpop.permute.xlu0 %2542
        %2544 = vrot.lane.b32.xlu0 %v2535, 73
        %v2545 = vpop.permute.xlu0 %2544
        %2546 = vrot.lane.b32.xlu0 %v2536, 73
        %v2547 = vpop.permute.xlu0 %2546
        %2548 = vrot.lane.b32.xlu0 %v2537, 73
        %v2549 = vpop.permute.xlu0 %2548
        %2550 = vrot.lane.b32.xlu0 %v2538, 73
        %v2551 = vpop.permute.xlu0 %2550
        %2552 = vrot.lane.b32.xlu0 %v2539, 73
        %v2553 = vpop.permute.xlu0 %2552
        %2554 = vrot.lane.b32.xlu0 %v2540, 73
        %v2555 = vpop.permute.xlu0 %2554
        %2556 = vrot.lane.b32.xlu0 %v2541, 73
        %v2557 = vpop.permute.xlu0 %2556
        %v2558 = vsel %vm342, %v2555, %v2557
        %v2559 = vsel %vm342, %v2553, %v2555
        %v2560 = vsel %vm342, %v2551, %v2553
        %v2561 = vsel %vm342, %v2549, %v2551
        %v2562 = vsel %vm342, %v2547, %v2549
        %v2563 = vsel %vm342, %v2545, %v2547
        %v2564 = vsel %vm342, %v2543, %v2545
        %v2565 = vsel %vm342, %v2557, %v2543
        %v2566 = vmul.f32 %v2565, %v354
        %v2567 = vmul.f32 %v2564, %v358
        %v2568 = vmul.f32 %v2563, %v362
        %v2569 = vmul.f32 %v2562, %v366
        %v2570 = vmul.f32 %v2561, %v370
        %v2571 = vmul.f32 %v2560, %v374
        %v2572 = vmul.f32 %v2559, %v378
        %v2573 = vmul.f32 %v2558, %v382
        %2574 = vst [vmem:[#allocation2] sm:$0xff] %v2566
        %2575 = vst [vmem:[#allocation2 + $0x8] sm:$0xff] %v2567
        %2576 = vst [vmem:[#allocation2 + $0x10] sm:$0xff] %v2568
        %2577 = vst [vmem:[#allocation2 + $0x18] sm:$0xff] %v2569
        %2578 = vst [vmem:[#allocation2 + $0x20] sm:$0xff] %v2570
        %2579 = vst [vmem:[#allocation2 + $0x28] sm:$0xff] %v2571
        %2580 = vst [vmem:[#allocation2 + $0x30] sm:$0xff] %v2572
        %2581 = vst [vmem:[#allocation2 + $0x38] sm:$0xff] %v2573
        %2582 = vrot.lane.b32.xlu0 %v2534, 72
        %v2583 = vpop.permute.xlu0 %2582
        %2584 = vrot.lane.b32.xlu0 %v2535, 72
        %v2585 = vpop.permute.xlu0 %2584
        %2586 = vrot.lane.b32.xlu0 %v2536, 72
        %v2587 = vpop.permute.xlu0 %2586
        %2588 = vrot.lane.b32.xlu0 %v2537, 72
        %v2589 = vpop.permute.xlu0 %2588
        %2590 = vrot.lane.b32.xlu0 %v2538, 72
        %v2591 = vpop.permute.xlu0 %2590
        %2592 = vrot.lane.b32.xlu0 %v2539, 72
        %v2593 = vpop.permute.xlu0 %2592
        %2594 = vrot.lane.b32.xlu0 %v2540, 72
        %v2595 = vpop.permute.xlu0 %2594
        %2596 = vrot.lane.b32.xlu0 %v2541, 72
        %v2597 = vpop.permute.xlu0 %2596
        %v2598 = vsel %vm415, %v2595, %v2597
        %v2599 = vsel %vm415, %v2593, %v2595
        %v2600 = vsel %vm415, %v2591, %v2593
        %v2601 = vsel %vm415, %v2589, %v2591
        %v2602 = vsel %vm415, %v2587, %v2589
        %v2603 = vsel %vm415, %v2585, %v2587
        %v2604 = vsel %vm415, %v2583, %v2585
        %v2605 = vsel %vm415, %v2597, %v2583
        %v2606 = vmul.f32 %v2605, %v427
        %v2607 = vmul.f32 %v2604, %v431
        %v2608 = vmul.f32 %v2603, %v435
        %v2609 = vmul.f32 %v2602, %v439
        %v2610 = vmul.f32 %v2601, %v443
        %v2611 = vmul.f32 %v2600, %v447
        %v2612 = vmul.f32 %v2599, %v451
        %v2613 = vmul.f32 %v2598, %v455
        %2614 = vst [vmem:[#allocation2 + $0x40] sm:$0xff] %v2606
        %2615 = vst [vmem:[#allocation2 + $0x48] sm:$0xff] %v2607
        %2616 = vst [vmem:[#allocation2 + $0x50] sm:$0xff] %v2608
        %2617 = vst [vmem:[#allocation2 + $0x58] sm:$0xff] %v2609
        %2618 = vst [vmem:[#allocation2 + $0x60] sm:$0xff] %v2610
        %2619 = vst [vmem:[#allocation2 + $0x68] sm:$0xff] %v2611
        %2620 = vst [vmem:[#allocation2 + $0x70] sm:$0xff] %v2612
        %2621 = vst [vmem:[#allocation2 + $0x78] sm:$0xff] %v2613
        %2622 = vrot.lane.b32.xlu0 %v2534, 71
        %v2623 = vpop.permute.xlu0 %2622
        %2624 = vrot.lane.b32.xlu0 %v2535, 71
        %v2625 = vpop.permute.xlu0 %2624
        %2626 = vrot.lane.b32.xlu0 %v2536, 71
        %v2627 = vpop.permute.xlu0 %2626
        %2628 = vrot.lane.b32.xlu0 %v2537, 71
        %v2629 = vpop.permute.xlu0 %2628
        %2630 = vrot.lane.b32.xlu0 %v2538, 71
        %v2631 = vpop.permute.xlu0 %2630
        %2632 = vrot.lane.b32.xlu0 %v2539, 71
        %v2633 = vpop.permute.xlu0 %2632
        %2634 = vrot.lane.b32.xlu0 %v2540, 71
        %v2635 = vpop.permute.xlu0 %2634
        %2636 = vrot.lane.b32.xlu0 %v2541, 71
        %v2637 = vpop.permute.xlu0 %2636
        %v2638 = vsel %vm488, %v2635, %v2637
        %v2639 = vsel %vm488, %v2633, %v2635
        %v2640 = vsel %vm488, %v2631, %v2633
        %v2641 = vsel %vm488, %v2629, %v2631
        %v2642 = vsel %vm488, %v2627, %v2629
        %v2643 = vsel %vm488, %v2625, %v2627
        %v2644 = vsel %vm488, %v2623, %v2625
        %v2645 = vsel %vm488, %v2637, %v2623
        %v2646 = vmul.f32 %v2645, %v500
        %v2647 = vmul.f32 %v2644, %v504
        %v2648 = vmul.f32 %v2643, %v508
        %v2649 = vmul.f32 %v2642, %v512
        %v2650 = vmul.f32 %v2641, %v516
        %v2651 = vmul.f32 %v2640, %v520
        %v2652 = vmul.f32 %v2639, %v524
        %v2653 = vmul.f32 %v2638, %v528
        %2654 = vst [vmem:[#allocation2 + $0x80] sm:$0xff] %v2646
        %2655 = vst [vmem:[#allocation2 + $0x88] sm:$0xff] %v2647
        %2656 = vst [vmem:[#allocation2 + $0x90] sm:$0xff] %v2648
        %2657 = vst [vmem:[#allocation2 + $0x98] sm:$0xff] %v2649
        %2658 = vst [vmem:[#allocation2 + $0xa0] sm:$0xff] %v2650
        %2659 = vst [vmem:[#allocation2 + $0xa8] sm:$0xff] %v2651
        %2660 = vst [vmem:[#allocation2 + $0xb0] sm:$0xff] %v2652
        %2661 = vst [vmem:[#allocation2 + $0xb8] sm:$0xff] %v2653
        %2662 = vrot.lane.b32.xlu0 %v2534, 65
        %v2663 = vpop.permute.xlu0 %2662
        %2664 = vrot.lane.b32.xlu0 %v2535, 65
        %v2665 = vpop.permute.xlu0 %2664
        %2666 = vrot.lane.b32.xlu0 %v2536, 65
        %v2667 = vpop.permute.xlu0 %2666
        %2668 = vrot.lane.b32.xlu0 %v2537, 65
        %v2669 = vpop.permute.xlu0 %2668
        %2670 = vrot.lane.b32.xlu0 %v2538, 65
        %v2671 = vpop.permute.xlu0 %2670
        %2672 = vrot.lane.b32.xlu0 %v2539, 65
        %v2673 = vpop.permute.xlu0 %2672
        %2674 = vrot.lane.b32.xlu0 %v2540, 65
        %v2675 = vpop.permute.xlu0 %2674
        %2676 = vrot.lane.b32.xlu0 %v2541, 65
        %v2677 = vpop.permute.xlu0 %2676
        %v2678 = vsel %vm561, %v2675, %v2677
        %v2679 = vsel %vm561, %v2673, %v2675
        %v2680 = vsel %vm561, %v2671, %v2673
        %v2681 = vsel %vm561, %v2669, %v2671
        %v2682 = vsel %vm561, %v2667, %v2669
        %v2683 = vsel %vm561, %v2665, %v2667
        %v2684 = vsel %vm561, %v2663, %v2665
        %v2685 = vsel %vm561, %v2677, %v2663
        %v2686 = vmul.f32 %v2685, %v573
        %v2687 = vmul.f32 %v2684, %v577
        %v2688 = vmul.f32 %v2683, %v581
        %v2689 = vmul.f32 %v2682, %v585
        %v2690 = vmul.f32 %v2681, %v589
        %v2691 = vmul.f32 %v2680, %v593
        %v2692 = vmul.f32 %v2679, %v597
        %v2693 = vmul.f32 %v2678, %v601
        %2694 = vst [vmem:[#allocation2 + $0xc0] sm:$0xff] %v2686
        %2695 = vst [vmem:[#allocation2 + $0xc8] sm:$0xff] %v2687
        %2696 = vst [vmem:[#allocation2 + $0xd0] sm:$0xff] %v2688
        %2697 = vst [vmem:[#allocation2 + $0xd8] sm:$0xff] %v2689
        %2698 = vst [vmem:[#allocation2 + $0xe0] sm:$0xff] %v2690
        %2699 = vst [vmem:[#allocation2 + $0xe8] sm:$0xff] %v2691
        %2700 = vst [vmem:[#allocation2 + $0xf0] sm:$0xff] %v2692
        %2701 = vst [vmem:[#allocation2 + $0xf8] sm:$0xff] %v2693
        %2702 = vrot.lane.b32.xlu0 %v2534, 64
        %v2703 = vpop.permute.xlu0 %2702
        %2704 = vrot.lane.b32.xlu0 %v2535, 64
        %v2705 = vpop.permute.xlu0 %2704
        %2706 = vrot.lane.b32.xlu0 %v2536, 64
        %v2707 = vpop.permute.xlu0 %2706
        %2708 = vrot.lane.b32.xlu0 %v2537, 64
        %v2709 = vpop.permute.xlu0 %2708
        %2710 = vrot.lane.b32.xlu0 %v2538, 64
        %v2711 = vpop.permute.xlu0 %2710
        %2712 = vrot.lane.b32.xlu0 %v2539, 64
        %v2713 = vpop.permute.xlu0 %2712
        %2714 = vrot.lane.b32.xlu0 %v2540, 64
        %v2715 = vpop.permute.xlu0 %2714
        %2716 = vrot.lane.b32.xlu0 %v2541, 64
        %v2717 = vpop.permute.xlu0 %2716
        %v2718 = vsel %vm634, %v2715, %v2717
        %v2719 = vsel %vm634, %v2713, %v2715
        %v2720 = vsel %vm634, %v2711, %v2713
        %v2721 = vsel %vm634, %v2709, %v2711
        %v2722 = vsel %vm634, %v2707, %v2709
        %v2723 = vsel %vm634, %v2705, %v2707
        %v2724 = vsel %vm634, %v2703, %v2705
        %v2725 = vsel %vm634, %v2717, %v2703
        %v2726 = vmul.f32 %v2725, %v646
        %v2727 = vmul.f32 %v2724, %v650
        %v2728 = vmul.f32 %v2723, %v654
        %v2729 = vmul.f32 %v2722, %v658
        %v2730 = vmul.f32 %v2721, %v662
        %v2731 = vmul.f32 %v2720, %v666
        %v2732 = vmul.f32 %v2719, %v670
        %v2733 = vmul.f32 %v2718, %v674
        %2734 = vst [vmem:[#allocation2 + $0x100] sm:$0xff] %v2726
        %2735 = vst [vmem:[#allocation2 + $0x108] sm:$0xff] %v2727
        %2736 = vst [vmem:[#allocation2 + $0x110] sm:$0xff] %v2728
        %2737 = vst [vmem:[#allocation2 + $0x118] sm:$0xff] %v2729
        %2738 = vst [vmem:[#allocation2 + $0x120] sm:$0xff] %v2730
        %2739 = vst [vmem:[#allocation2 + $0x128] sm:$0xff] %v2731
        %2740 = vst [vmem:[#allocation2 + $0x130] sm:$0xff] %v2732
        %2741 = vst [vmem:[#allocation2 + $0x138] sm:$0xff] %v2733
        %2742 = vrot.lane.b32.xlu0 %v2534, 63
        %v2743 = vpop.permute.xlu0 %2742
        %2744 = vrot.lane.b32.xlu0 %v2535, 63
        %v2745 = vpop.permute.xlu0 %2744
        %2746 = vrot.lane.b32.xlu0 %v2536, 63
        %v2747 = vpop.permute.xlu0 %2746
        %2748 = vrot.lane.b32.xlu0 %v2537, 63
        %v2749 = vpop.permute.xlu0 %2748
        %2750 = vrot.lane.b32.xlu0 %v2538, 63
        %v2751 = vpop.permute.xlu0 %2750
        %2752 = vrot.lane.b32.xlu0 %v2539, 63
        %v2753 = vpop.permute.xlu0 %2752
        %2754 = vrot.lane.b32.xlu0 %v2540, 63
        %v2755 = vpop.permute.xlu0 %2754
        %2756 = vrot.lane.b32.xlu0 %v2541, 63
        %v2757 = vpop.permute.xlu0 %2756
        %v2758 = vsel %vm707, %v2755, %v2757
        %v2759 = vsel %vm707, %v2753, %v2755
        %v2760 = vsel %vm707, %v2751, %v2753
        %v2761 = vsel %vm707, %v2749, %v2751
        %v2762 = vsel %vm707, %v2747, %v2749
        %v2763 = vsel %vm707, %v2745, %v2747
        %v2764 = vsel %vm707, %v2743, %v2745
        %v2765 = vsel %vm707, %v2757, %v2743
        %v2766 = vmul.f32 %v2765, %v719
        %v2767 = vmul.f32 %v2764, %v723
        %v2768 = vmul.f32 %v2763, %v727
        %v2769 = vmul.f32 %v2762, %v731
        %v2770 = vmul.f32 %v2761, %v735
        %v2771 = vmul.f32 %v2760, %v739
        %v2772 = vmul.f32 %v2759, %v743
        %v2773 = vmul.f32 %v2758, %v747
        %2774 = vst [vmem:[#allocation2 + $0x140] sm:$0xff] %v2766
        %2775 = vst [vmem:[#allocation2 + $0x148] sm:$0xff] %v2767
        %2776 = vst [vmem:[#allocation2 + $0x150] sm:$0xff] %v2768
        %2777 = vst [vmem:[#allocation2 + $0x158] sm:$0xff] %v2769
        %2778 = vst [vmem:[#allocation2 + $0x160] sm:$0xff] %v2770
        %2779 = vst [vmem:[#allocation2 + $0x168] sm:$0xff] %v2771
        %2780 = vst [vmem:[#allocation2 + $0x170] sm:$0xff] %v2772
        %2781 = vst [vmem:[#allocation2 + $0x178] sm:$0xff] %v2773
        %2782 = vrot.lane.b32.xlu0 %v2534, 57
        %v2783 = vpop.permute.xlu0 %2782
        %2784 = vrot.lane.b32.xlu0 %v2535, 57
        %v2785 = vpop.permute.xlu0 %2784
        %2786 = vrot.lane.b32.xlu0 %v2536, 57
        %v2787 = vpop.permute.xlu0 %2786
        %2788 = vrot.lane.b32.xlu0 %v2537, 57
        %v2789 = vpop.permute.xlu0 %2788
        %2790 = vrot.lane.b32.xlu0 %v2538, 57
        %v2791 = vpop.permute.xlu0 %2790
        %2792 = vrot.lane.b32.xlu0 %v2539, 57
        %v2793 = vpop.permute.xlu0 %2792
        %2794 = vrot.lane.b32.xlu0 %v2540, 57
        %v2795 = vpop.permute.xlu0 %2794
        %2796 = vrot.lane.b32.xlu0 %v2541, 57
        %v2797 = vpop.permute.xlu0 %2796
        %v2798 = vsel %vm780, %v2795, %v2797
        %v2799 = vsel %vm780, %v2793, %v2795
        %v2800 = vsel %vm780, %v2791, %v2793
        %v2801 = vsel %vm780, %v2789, %v2791
        %v2802 = vsel %vm780, %v2787, %v2789
        %v2803 = vsel %vm780, %v2785, %v2787
        %v2804 = vsel %vm780, %v2783, %v2785
        %v2805 = vsel %vm780, %v2797, %v2783
        %v2806 = vmul.f32 %v2805, %v792
        %v2807 = vmul.f32 %v2804, %v796
        %v2808 = vmul.f32 %v2803, %v800
        %v2809 = vmul.f32 %v2802, %v804
        %v2810 = vmul.f32 %v2801, %v808
        %v2811 = vmul.f32 %v2800, %v812
        %v2812 = vmul.f32 %v2799, %v816
        %v2813 = vmul.f32 %v2798, %v820
        %2814 = vst [vmem:[#allocation2 + $0x180] sm:$0xff] %v2806
        %2815 = vst [vmem:[#allocation2 + $0x188] sm:$0xff] %v2807
        %2816 = vst [vmem:[#allocation2 + $0x190] sm:$0xff] %v2808
        %2817 = vst [vmem:[#allocation2 + $0x198] sm:$0xff] %v2809
        %2818 = vst [vmem:[#allocation2 + $0x1a0] sm:$0xff] %v2810
        %2819 = vst [vmem:[#allocation2 + $0x1a8] sm:$0xff] %v2811
        %2820 = vst [vmem:[#allocation2 + $0x1b0] sm:$0xff] %v2812
        %2821 = vst [vmem:[#allocation2 + $0x1b8] sm:$0xff] %v2813
        %2822 = vrot.lane.b32.xlu0 %v2534, 56
        %v2823 = vpop.permute.xlu0 %2822
        %2824 = vrot.lane.b32.xlu0 %v2535, 56
        %v2825 = vpop.permute.xlu0 %2824
        %2826 = vrot.lane.b32.xlu0 %v2536, 56
        %v2827 = vpop.permute.xlu0 %2826
        %2828 = vrot.lane.b32.xlu0 %v2537, 56
        %v2829 = vpop.permute.xlu0 %2828
        %2830 = vrot.lane.b32.xlu0 %v2538, 56
        %v2831 = vpop.permute.xlu0 %2830
        %2832 = vrot.lane.b32.xlu0 %v2539, 56
        %v2833 = vpop.permute.xlu0 %2832
        %2834 = vrot.lane.b32.xlu0 %v2540, 56
        %v2835 = vpop.permute.xlu0 %2834
        %2836 = vrot.lane.b32.xlu0 %v2541, 56
        %v2837 = vpop.permute.xlu0 %2836
        %v2838 = vsel %vm853, %v2835, %v2837
        %v2839 = vsel %vm853, %v2833, %v2835
        %v2840 = vsel %vm853, %v2831, %v2833
        %v2841 = vsel %vm853, %v2829, %v2831
        %v2842 = vsel %vm853, %v2827, %v2829
        %v2843 = vsel %vm853, %v2825, %v2827
        %v2844 = vsel %vm853, %v2823, %v2825
        %v2845 = vsel %vm853, %v2837, %v2823
        %v2846 = vmul.f32 %v2845, %v865
        %v2847 = vmul.f32 %v2844, %v869
        %v2848 = vmul.f32 %v2843, %v873
        %v2849 = vmul.f32 %v2842, %v877
        %v2850 = vmul.f32 %v2841, %v881
        %v2851 = vmul.f32 %v2840, %v885
        %v2852 = vmul.f32 %v2839, %v889
        %v2853 = vmul.f32 %v2838, %v893
        %2854 = vst [vmem:[#allocation2 + $0x1c0] sm:$0xff] %v2846
        %2855 = vst [vmem:[#allocation2 + $0x1c8] sm:$0xff] %v2847
        %2856 = vst [vmem:[#allocation2 + $0x1d0] sm:$0xff] %v2848
        %2857 = vst [vmem:[#allocation2 + $0x1d8] sm:$0xff] %v2849
        %2858 = vst [vmem:[#allocation2 + $0x1e0] sm:$0xff] %v2850
        %2859 = vst [vmem:[#allocation2 + $0x1e8] sm:$0xff] %v2851
        %2860 = vst [vmem:[#allocation2 + $0x1f0] sm:$0xff] %v2852
        %2861 = vst [vmem:[#allocation2 + $0x1f8] sm:$0xff] %v2853
        %2862 = vrot.lane.b32.xlu0 %v2534, 55
        %v2863 = vpop.permute.xlu0 %2862
        %2864 = vrot.lane.b32.xlu0 %v2535, 55
        %v2865 = vpop.permute.xlu0 %2864
        %2866 = vrot.lane.b32.xlu0 %v2536, 55
        %v2867 = vpop.permute.xlu0 %2866
        %2868 = vrot.lane.b32.xlu0 %v2537, 55
        %v2869 = vpop.permute.xlu0 %2868
        %2870 = vrot.lane.b32.xlu0 %v2538, 55
        %v2871 = vpop.permute.xlu0 %2870
        %2872 = vrot.lane.b32.xlu0 %v2539, 55
        %v2873 = vpop.permute.xlu0 %2872
        %2874 = vrot.lane.b32.xlu0 %v2540, 55
        %v2875 = vpop.permute.xlu0 %2874
        %2876 = vrot.lane.b32.xlu0 %v2541, 55
        %v2877 = vpop.permute.xlu0 %2876
        %v2878 = vsel %vm926, %v2875, %v2877
        %v2879 = vsel %vm926, %v2873, %v2875
        %v2880 = vsel %vm926, %v2871, %v2873
        %v2881 = vsel %vm926, %v2869, %v2871
        %v2882 = vsel %vm926, %v2867, %v2869
        %v2883 = vsel %vm926, %v2865, %v2867
        %v2884 = vsel %vm926, %v2863, %v2865
        %v2885 = vsel %vm926, %v2877, %v2863
        %v2886 = vmul.f32 %v2885, %v938
        %v2887 = vmul.f32 %v2884, %v942
        %v2888 = vmul.f32 %v2883, %v946
        %v2889 = vmul.f32 %v2882, %v950
        %v2890 = vmul.f32 %v2881, %v954
        %v2891 = vmul.f32 %v2880, %v958
        %v2892 = vmul.f32 %v2879, %v962
        %v2893 = vmul.f32 %v2878, %v966
        %2894 = vst [vmem:[#allocation2 + $0x200] sm:$0xff] %v2886
        %2895 = vst [vmem:[#allocation2 + $0x208] sm:$0xff] %v2887
        %2896 = vst [vmem:[#allocation2 + $0x210] sm:$0xff] %v2888
        %2897 = vst [vmem:[#allocation2 + $0x218] sm:$0xff] %v2889
        %2898 = vst [vmem:[#allocation2 + $0x220] sm:$0xff] %v2890
        %2899 = vst [vmem:[#allocation2 + $0x228] sm:$0xff] %v2891
        %2900 = vst [vmem:[#allocation2 + $0x230] sm:$0xff] %v2892
        %2901 = vst [vmem:[#allocation2 + $0x238] sm:$0xff] %v2893
        %2902 = vrot.lane.b32.xlu0 %v2534, 9
        %v2903 = vpop.permute.xlu0 %2902
        %2904 = vrot.lane.b32.xlu0 %v2535, 9
        %v2905 = vpop.permute.xlu0 %2904
        %2906 = vrot.lane.b32.xlu0 %v2536, 9
        %v2907 = vpop.permute.xlu0 %2906
        %2908 = vrot.lane.b32.xlu0 %v2537, 9
        %v2909 = vpop.permute.xlu0 %2908
        %2910 = vrot.lane.b32.xlu0 %v2538, 9
        %v2911 = vpop.permute.xlu0 %2910
        %2912 = vrot.lane.b32.xlu0 %v2539, 9
        %v2913 = vpop.permute.xlu0 %2912
        %2914 = vrot.lane.b32.xlu0 %v2540, 9
        %v2915 = vpop.permute.xlu0 %2914
        %2916 = vrot.lane.b32.xlu0 %v2541, 9
        %v2917 = vpop.permute.xlu0 %2916
        %v2918 = vsel %vm999, %v2915, %v2917
        %v2919 = vsel %vm999, %v2913, %v2915
        %v2920 = vsel %vm999, %v2911, %v2913
        %v2921 = vsel %vm999, %v2909, %v2911
        %v2922 = vsel %vm999, %v2907, %v2909
        %v2923 = vsel %vm999, %v2905, %v2907
        %v2924 = vsel %vm999, %v2903, %v2905
        %v2925 = vsel %vm999, %v2917, %v2903
        %v2926 = vmul.f32 %v2925, %v1011
        %v2927 = vmul.f32 %v2924, %v1015
        %v2928 = vmul.f32 %v2923, %v1019
        %v2929 = vmul.f32 %v2922, %v1023
        %v2930 = vmul.f32 %v2921, %v1027
        %v2931 = vmul.f32 %v2920, %v1031
        %v2932 = vmul.f32 %v2919, %v1035
        %v2933 = vmul.f32 %v2918, %v1039
        %2934 = vst [vmem:[#allocation2 + $0x240] sm:$0xff] %v2926
        %2935 = vst [vmem:[#allocation2 + $0x248] sm:$0xff] %v2927
        %2936 = vst [vmem:[#allocation2 + $0x250] sm:$0xff] %v2928
        %2937 = vst [vmem:[#allocation2 + $0x258] sm:$0xff] %v2929
        %2938 = vst [vmem:[#allocation2 + $0x260] sm:$0xff] %v2930
        %2939 = vst [vmem:[#allocation2 + $0x268] sm:$0xff] %v2931
        %2940 = vst [vmem:[#allocation2 + $0x270] sm:$0xff] %v2932
        %2941 = vst [vmem:[#allocation2 + $0x278] sm:$0xff] %v2933
        %2942 = vrot.lane.b32.xlu0 %v2534, 8
        %v2943 = vpop.permute.xlu0 %2942
        %2944 = vrot.lane.b32.xlu0 %v2535, 8
        %v2945 = vpop.permute.xlu0 %2944
        %2946 = vrot.lane.b32.xlu0 %v2536, 8
        %v2947 = vpop.permute.xlu0 %2946
        %2948 = vrot.lane.b32.xlu0 %v2537, 8
        %v2949 = vpop.permute.xlu0 %2948
        %2950 = vrot.lane.b32.xlu0 %v2538, 8
        %v2951 = vpop.permute.xlu0 %2950
        %2952 = vrot.lane.b32.xlu0 %v2539, 8
        %v2953 = vpop.permute.xlu0 %2952
        %2954 = vrot.lane.b32.xlu0 %v2540, 8
        %v2955 = vpop.permute.xlu0 %2954
        %2956 = vrot.lane.b32.xlu0 %v2541, 8
        %v2957 = vpop.permute.xlu0 %2956
        %v2958 = vsel %vm1072, %v2955, %v2957
        %v2959 = vsel %vm1072, %v2953, %v2955
        %v2960 = vsel %vm1072, %v2951, %v2953
        %v2961 = vsel %vm1072, %v2949, %v2951
        %v2962 = vsel %vm1072, %v2947, %v2949
        %v2963 = vsel %vm1072, %v2945, %v2947
        %v2964 = vsel %vm1072, %v2943, %v2945
        %v2965 = vsel %vm1072, %v2957, %v2943
        %v2966 = vmul.f32 %v2965, %v1084
        %v2967 = vmul.f32 %v2964, %v1088
        %v2968 = vmul.f32 %v2963, %v1092
        %v2969 = vmul.f32 %v2962, %v1096
        %v2970 = vmul.f32 %v2961, %v1100
        %v2971 = vmul.f32 %v2960, %v1104
        %v2972 = vmul.f32 %v2959, %v1108
        %v2973 = vmul.f32 %v2958, %v1112
        %2974 = vst [vmem:[#allocation2 + $0x280] sm:$0xff] %v2966
        %2975 = vst [vmem:[#allocation2 + $0x288] sm:$0xff] %v2967
        %2976 = vst [vmem:[#allocation2 + $0x290] sm:$0xff] %v2968
        %2977 = vst [vmem:[#allocation2 + $0x298] sm:$0xff] %v2969
        %2978 = vst [vmem:[#allocation2 + $0x2a0] sm:$0xff] %v2970
        %2979 = vst [vmem:[#allocation2 + $0x2a8] sm:$0xff] %v2971
        %2980 = vst [vmem:[#allocation2 + $0x2b0] sm:$0xff] %v2972
        %2981 = vst [vmem:[#allocation2 + $0x2b8] sm:$0xff] %v2973
        %2982 = vrot.lane.b32.xlu0 %v2534, 7
        %v2983 = vpop.permute.xlu0 %2982
        %2984 = vrot.lane.b32.xlu0 %v2535, 7
        %v2985 = vpop.permute.xlu0 %2984
        %2986 = vrot.lane.b32.xlu0 %v2536, 7
        %v2987 = vpop.permute.xlu0 %2986
        %2988 = vrot.lane.b32.xlu0 %v2537, 7
        %v2989 = vpop.permute.xlu0 %2988
        %2990 = vrot.lane.b32.xlu0 %v2538, 7
        %v2991 = vpop.permute.xlu0 %2990
        %2992 = vrot.lane.b32.xlu0 %v2539, 7
        %v2993 = vpop.permute.xlu0 %2992
        %2994 = vrot.lane.b32.xlu0 %v2540, 7
        %v2995 = vpop.permute.xlu0 %2994
        %2996 = vrot.lane.b32.xlu0 %v2541, 7
        %v2997 = vpop.permute.xlu0 %2996
        %v2998 = vsel %vm1145, %v2995, %v2997
        %v2999 = vsel %vm1145, %v2993, %v2995
        %v3000 = vsel %vm1145, %v2991, %v2993
        %v3001 = vsel %vm1145, %v2989, %v2991
        %v3002 = vsel %vm1145, %v2987, %v2989
        %v3003 = vsel %vm1145, %v2985, %v2987
        %v3004 = vsel %vm1145, %v2983, %v2985
        %v3005 = vsel %vm1145, %v2997, %v2983
        %v3006 = vmul.f32 %v3005, %v1157
        %v3007 = vmul.f32 %v3004, %v1161
        %v3008 = vmul.f32 %v3003, %v1165
        %v3009 = vmul.f32 %v3002, %v1169
        %v3010 = vmul.f32 %v3001, %v1173
        %v3011 = vmul.f32 %v3000, %v1177
        %v3012 = vmul.f32 %v2999, %v1181
        %v3013 = vmul.f32 %v2998, %v1185
        %3014 = vst [vmem:[#allocation2 + $0x2c0] sm:$0xff] %v3006
        %3015 = vst [vmem:[#allocation2 + $0x2c8] sm:$0xff] %v3007
        %3016 = vst [vmem:[#allocation2 + $0x2d0] sm:$0xff] %v3008
        %3017 = vst [vmem:[#allocation2 + $0x2d8] sm:$0xff] %v3009
        %3018 = vst [vmem:[#allocation2 + $0x2e0] sm:$0xff] %v3010
        %3019 = vst [vmem:[#allocation2 + $0x2e8] sm:$0xff] %v3011
        %3020 = vst [vmem:[#allocation2 + $0x2f0] sm:$0xff] %v3012
        %3021 = vst [vmem:[#allocation2 + $0x2f8] sm:$0xff] %v3013
        %3022 = vrot.lane.b32.xlu0 %v2534, 1
        %v3023 = vpop.permute.xlu0 %3022
        %3024 = vrot.lane.b32.xlu0 %v2535, 1
        %v3025 = vpop.permute.xlu0 %3024
        %3026 = vrot.lane.b32.xlu0 %v2536, 1
        %v3027 = vpop.permute.xlu0 %3026
        %3028 = vrot.lane.b32.xlu0 %v2537, 1
        %v3029 = vpop.permute.xlu0 %3028
        %3030 = vrot.lane.b32.xlu0 %v2538, 1
        %v3031 = vpop.permute.xlu0 %3030
        %3032 = vrot.lane.b32.xlu0 %v2539, 1
        %v3033 = vpop.permute.xlu0 %3032
        %3034 = vrot.lane.b32.xlu0 %v2540, 1
        %v3035 = vpop.permute.xlu0 %3034
        %3036 = vrot.lane.b32.xlu0 %v2541, 1
        %v3037 = vpop.permute.xlu0 %3036
        %v3038 = vsel %vm1218, %v3035, %v3037
        %v3039 = vsel %vm1218, %v3033, %v3035
        %v3040 = vsel %vm1218, %v3031, %v3033
        %v3041 = vsel %vm1218, %v3029, %v3031
        %v3042 = vsel %vm1218, %v3027, %v3029
        %v3043 = vsel %vm1218, %v3025, %v3027
        %v3044 = vsel %vm1218, %v3023, %v3025
        %v3045 = vsel %vm1218, %v3037, %v3023
        %v3046 = vmul.f32 %v3045, %v1230
        %v3047 = vmul.f32 %v3044, %v1234
        %v3048 = vmul.f32 %v3043, %v1238
        %v3049 = vmul.f32 %v3042, %v1242
        %v3050 = vmul.f32 %v3041, %v1246
        %v3051 = vmul.f32 %v3040, %v1250
        %v3052 = vmul.f32 %v3039, %v1254
        %v3053 = vmul.f32 %v3038, %v1258
        %3054 = vst [vmem:[#allocation2 + $0x300] sm:$0xff] %v3046
        %3055 = vst [vmem:[#allocation2 + $0x308] sm:$0xff] %v3047
        %3056 = vst [vmem:[#allocation2 + $0x310] sm:$0xff] %v3048
        %3057 = vst [vmem:[#allocation2 + $0x318] sm:$0xff] %v3049
        %3058 = vst [vmem:[#allocation2 + $0x320] sm:$0xff] %v3050
        %3059 = vst [vmem:[#allocation2 + $0x328] sm:$0xff] %v3051
        %3060 = vst [vmem:[#allocation2 + $0x330] sm:$0xff] %v3052
        %3061 = vst [vmem:[#allocation2 + $0x338] sm:$0xff] %v3053
        %3062 = vst [vmem:[#allocation2 + $0x340] sm:$0xff] %v2534
        %3063 = vst [vmem:[#allocation2 + $0x348] sm:$0xff] %v2535
        %3064 = vst [vmem:[#allocation2 + $0x350] sm:$0xff] %v2536
        %3065 = vst [vmem:[#allocation2 + $0x358] sm:$0xff] %v2537
        %3066 = vst [vmem:[#allocation2 + $0x360] sm:$0xff] %v2538
        %3067 = vst [vmem:[#allocation2 + $0x368] sm:$0xff] %v2539
        %3068 = vst [vmem:[#allocation2 + $0x370] sm:$0xff] %v2540
        %3069 = vst [vmem:[#allocation2 + $0x378] sm:$0xff] %v2541
        %3070 = vrot.lane.b32.xlu0 %v2534, 127
        %v3071 = vpop.permute.xlu0 %3070
        %3072 = vrot.lane.b32.xlu0 %v2535, 127
        %v3073 = vpop.permute.xlu0 %3072
        %3074 = vrot.lane.b32.xlu0 %v2536, 127
        %v3075 = vpop.permute.xlu0 %3074
        %3076 = vrot.lane.b32.xlu0 %v2537, 127
        %v3077 = vpop.permute.xlu0 %3076
        %3078 = vrot.lane.b32.xlu0 %v2538, 127
        %v3079 = vpop.permute.xlu0 %3078
        %3080 = vrot.lane.b32.xlu0 %v2539, 127
        %v3081 = vpop.permute.xlu0 %3080
        %3082 = vrot.lane.b32.xlu0 %v2540, 127
        %v3083 = vpop.permute.xlu0 %3082
        %3084 = vrot.lane.b32.xlu0 %v2541, 127
        %v3085 = vpop.permute.xlu0 %3084
        %v3086 = vsel %vm1299, %v3083, %v3085
        %v3087 = vsel %vm1299, %v3081, %v3083
        %v3088 = vsel %vm1299, %v3079, %v3081
        %v3089 = vsel %vm1299, %v3077, %v3079
        %v3090 = vsel %vm1299, %v3075, %v3077
        %v3091 = vsel %vm1299, %v3073, %v3075
        %v3092 = vsel %vm1299, %v3071, %v3073
        %v3093 = vsel %vm1299, %v3085, %v3071
        %v3094 = vmul.f32 %v3092, %v1311
        %v3095 = vmul.f32 %v3091, %v1315
        %v3096 = vmul.f32 %v3090, %v1319
        %v3097 = vmul.f32 %v3089, %v1323
        %v3098 = vmul.f32 %v3088, %v1327
        %v3099 = vmul.f32 %v3087, %v1331
        %v3100 = vmul.f32 %v3086, %v1335
        %v3101 = vmul.f32 %v3093, %v1339
        %3102 = vst [vmem:[#allocation2 + $0x380] sm:$0xff] %v3094
        %3103 = vst [vmem:[#allocation2 + $0x388] sm:$0xff] %v3095
        %3104 = vst [vmem:[#allocation2 + $0x390] sm:$0xff] %v3096
        %3105 = vst [vmem:[#allocation2 + $0x398] sm:$0xff] %v3097
        %3106 = vst [vmem:[#allocation2 + $0x3a0] sm:$0xff] %v3098
        %3107 = vst [vmem:[#allocation2 + $0x3a8] sm:$0xff] %v3099
        %3108 = vst [vmem:[#allocation2 + $0x3b0] sm:$0xff] %v3100
        %3109 = vst [vmem:[#allocation2 + $0x3b8] sm:$0xff] %v3101
        %3110 = vrot.lane.b32.xlu0 %v2534, 121
        %v3111 = vpop.permute.xlu0 %3110
        %3112 = vrot.lane.b32.xlu0 %v2535, 121
        %v3113 = vpop.permute.xlu0 %3112
        %3114 = vrot.lane.b32.xlu0 %v2536, 121
        %v3115 = vpop.permute.xlu0 %3114
        %3116 = vrot.lane.b32.xlu0 %v2537, 121
        %v3117 = vpop.permute.xlu0 %3116
        %3118 = vrot.lane.b32.xlu0 %v2538, 121
        %v3119 = vpop.permute.xlu0 %3118
        %3120 = vrot.lane.b32.xlu0 %v2539, 121
        %v3121 = vpop.permute.xlu0 %3120
        %3122 = vrot.lane.b32.xlu0 %v2540, 121
        %v3123 = vpop.permute.xlu0 %3122
        %3124 = vrot.lane.b32.xlu0 %v2541, 121
        %v3125 = vpop.permute.xlu0 %3124
        %v3126 = vsel %vm1372, %v3123, %v3125
        %v3127 = vsel %vm1372, %v3121, %v3123
        %v3128 = vsel %vm1372, %v3119, %v3121
        %v3129 = vsel %vm1372, %v3117, %v3119
        %v3130 = vsel %vm1372, %v3115, %v3117
        %v3131 = vsel %vm1372, %v3113, %v3115
        %v3132 = vsel %vm1372, %v3111, %v3113
        %v3133 = vsel %vm1372, %v3125, %v3111
        %v3134 = vmul.f32 %v3132, %v1384
        %v3135 = vmul.f32 %v3131, %v1388
        %v3136 = vmul.f32 %v3130, %v1392
        %v3137 = vmul.f32 %v3129, %v1396
        %v3138 = vmul.f32 %v3128, %v1400
        %v3139 = vmul.f32 %v3127, %v1404
        %v3140 = vmul.f32 %v3126, %v1408
        %v3141 = vmul.f32 %v3133, %v1412
        %3142 = vst [vmem:[#allocation2 + $0x3c0] sm:$0xff] %v3134
        %3143 = vst [vmem:[#allocation2 + $0x3c8] sm:$0xff] %v3135
        %3144 = vst [vmem:[#allocation2 + $0x3d0] sm:$0xff] %v3136
        %3145 = vst [vmem:[#allocation2 + $0x3d8] sm:$0xff] %v3137
        %3146 = vst [vmem:[#allocation2 + $0x3e0] sm:$0xff] %v3138
        %3147 = vst [vmem:[#allocation2 + $0x3e8] sm:$0xff] %v3139
        %3148 = vst [vmem:[#allocation2 + $0x3f0] sm:$0xff] %v3140
        %3149 = vst [vmem:[#allocation2 + $0x3f8] sm:$0xff] %v3141
        %3150 = vrot.lane.b32.xlu0 %v2534, 120
        %v3151 = vpop.permute.xlu0 %3150
        %3152 = vrot.lane.b32.xlu0 %v2535, 120
        %v3153 = vpop.permute.xlu0 %3152
        %3154 = vrot.lane.b32.xlu0 %v2536, 120
        %v3155 = vpop.permute.xlu0 %3154
        %3156 = vrot.lane.b32.xlu0 %v2537, 120
        %v3157 = vpop.permute.xlu0 %3156
        %3158 = vrot.lane.b32.xlu0 %v2538, 120
        %v3159 = vpop.permute.xlu0 %3158
        %3160 = vrot.lane.b32.xlu0 %v2539, 120
        %v3161 = vpop.permute.xlu0 %3160
        %3162 = vrot.lane.b32.xlu0 %v2540, 120
        %v3163 = vpop.permute.xlu0 %3162
        %3164 = vrot.lane.b32.xlu0 %v2541, 120
        %v3165 = vpop.permute.xlu0 %3164
        %v3166 = vsel %vm1445, %v3163, %v3165
        %v3167 = vsel %vm1445, %v3161, %v3163
        %v3168 = vsel %vm1445, %v3159, %v3161
        %v3169 = vsel %vm1445, %v3157, %v3159
        %v3170 = vsel %vm1445, %v3155, %v3157
        %v3171 = vsel %vm1445, %v3153, %v3155
        %v3172 = vsel %vm1445, %v3151, %v3153
        %v3173 = vsel %vm1445, %v3165, %v3151
        %v3174 = vmul.f32 %v3172, %v1457
        %v3175 = vmul.f32 %v3171, %v1461
        %v3176 = vmul.f32 %v3170, %v1465
        %v3177 = vmul.f32 %v3169, %v1469
        %v3178 = vmul.f32 %v3168, %v1473
        %v3179 = vmul.f32 %v3167, %v1477
        %v3180 = vmul.f32 %v3166, %v1481
        %v3181 = vmul.f32 %v3173, %v1485
        %3182 = vst [vmem:[#allocation2 + $0x400] sm:$0xff] %v3174
        %3183 = vst [vmem:[#allocation2 + $0x408] sm:$0xff] %v3175
        %3184 = vst [vmem:[#allocation2 + $0x410] sm:$0xff] %v3176
        %3185 = vst [vmem:[#allocation2 + $0x418] sm:$0xff] %v3177
        %3186 = vst [vmem:[#allocation2 + $0x420] sm:$0xff] %v3178
        %3187 = vst [vmem:[#allocation2 + $0x428] sm:$0xff] %v3179
        %3188 = vst [vmem:[#allocation2 + $0x430] sm:$0xff] %v3180
        %3189 = vst [vmem:[#allocation2 + $0x438] sm:$0xff] %v3181
        %3190 = vrot.lane.b32.xlu0 %v2534, 119
        %v3191 = vpop.permute.xlu0 %3190
        %3192 = vrot.lane.b32.xlu0 %v2535, 119
        %v3193 = vpop.permute.xlu0 %3192
        %3194 = vrot.lane.b32.xlu0 %v2536, 119
        %v3195 = vpop.permute.xlu0 %3194
        %3196 = vrot.lane.b32.xlu0 %v2537, 119
        %v3197 = vpop.permute.xlu0 %3196
        %3198 = vrot.lane.b32.xlu0 %v2538, 119
        %v3199 = vpop.permute.xlu0 %3198
        %3200 = vrot.lane.b32.xlu0 %v2539, 119
        %v3201 = vpop.permute.xlu0 %3200
        %3202 = vrot.lane.b32.xlu0 %v2540, 119
        %v3203 = vpop.permute.xlu0 %3202
        %3204 = vrot.lane.b32.xlu0 %v2541, 119
        %v3205 = vpop.permute.xlu0 %3204
        %v3206 = vsel %vm1518, %v3203, %v3205
        %v3207 = vsel %vm1518, %v3201, %v3203
        %v3208 = vsel %vm1518, %v3199, %v3201
        %v3209 = vsel %vm1518, %v3197, %v3199
        %v3210 = vsel %vm1518, %v3195, %v3197
        %v3211 = vsel %vm1518, %v3193, %v3195
        %v3212 = vsel %vm1518, %v3191, %v3193
        %v3213 = vsel %vm1518, %v3205, %v3191
        %v3214 = vmul.f32 %v3212, %v1530
        %v3215 = vmul.f32 %v3211, %v1534
        %v3216 = vmul.f32 %v3210, %v1538
        %v3217 = vmul.f32 %v3209, %v1542
        %v3218 = vmul.f32 %v3208, %v1546
        %v3219 = vmul.f32 %v3207, %v1550
        %v3220 = vmul.f32 %v3206, %v1554
        %v3221 = vmul.f32 %v3213, %v1558
        %3222 = vst [vmem:[#allocation2 + $0x440] sm:$0xff] %v3214
        %3223 = vst [vmem:[#allocation2 + $0x448] sm:$0xff] %v3215
        %3224 = vst [vmem:[#allocation2 + $0x450] sm:$0xff] %v3216
        %3225 = vst [vmem:[#allocation2 + $0x458] sm:$0xff] %v3217
        %3226 = vst [vmem:[#allocation2 + $0x460] sm:$0xff] %v3218
        %3227 = vst [vmem:[#allocation2 + $0x468] sm:$0xff] %v3219
        %3228 = vst [vmem:[#allocation2 + $0x470] sm:$0xff] %v3220
        %3229 = vst [vmem:[#allocation2 + $0x478] sm:$0xff] %v3221
        %v3230 = vmul.f32 %v2564, %v1578
        %v3231 = vmul.f32 %v2563, %v1582
        %v3232 = vmul.f32 %v2562, %v1586
        %v3233 = vmul.f32 %v2561, %v1590
        %v3234 = vmul.f32 %v2560, %v1594
        %v3235 = vmul.f32 %v2559, %v1598
        %v3236 = vmul.f32 %v2558, %v1602
        %v3237 = vmul.f32 %v2565, %v1606
        %3238 = vst [vmem:[#allocation2 + $0x480] sm:$0xff] %v3230
        %3239 = vst [vmem:[#allocation2 + $0x488] sm:$0xff] %v3231
        %3240 = vst [vmem:[#allocation2 + $0x490] sm:$0xff] %v3232
        %3241 = vst [vmem:[#allocation2 + $0x498] sm:$0xff] %v3233
        %3242 = vst [vmem:[#allocation2 + $0x4a0] sm:$0xff] %v3234
        %3243 = vst [vmem:[#allocation2 + $0x4a8] sm:$0xff] %v3235
        %3244 = vst [vmem:[#allocation2 + $0x4b0] sm:$0xff] %v3236
        %3245 = vst [vmem:[#allocation2 + $0x4b8] sm:$0xff] %v3237
        %v3246 = vmul.f32 %v2604, %v1626
        %v3247 = vmul.f32 %v2603, %v1630
        %v3248 = vmul.f32 %v2602, %v1634
        %v3249 = vmul.f32 %v2601, %v1638
        %v3250 = vmul.f32 %v2600, %v1642
        %v3251 = vmul.f32 %v2599, %v1646
        %v3252 = vmul.f32 %v2598, %v1650
        %v3253 = vmul.f32 %v2605, %v1654
        %3254 = vst [vmem:[#allocation2 + $0x4c0] sm:$0xff] %v3246
        %3255 = vst [vmem:[#allocation2 + $0x4c8] sm:$0xff] %v3247
        %3256 = vst [vmem:[#allocation2 + $0x4d0] sm:$0xff] %v3248
        %3257 = vst [vmem:[#allocation2 + $0x4d8] sm:$0xff] %v3249
        %3258 = vst [vmem:[#allocation2 + $0x4e0] sm:$0xff] %v3250
        %3259 = vst [vmem:[#allocation2 + $0x4e8] sm:$0xff] %v3251
        %3260 = vst [vmem:[#allocation2 + $0x4f0] sm:$0xff] %v3252
        %3261 = vst [vmem:[#allocation2 + $0x4f8] sm:$0xff] %v3253
        %v3262 = vmul.f32 %v2644, %v1674
        %v3263 = vmul.f32 %v2643, %v1678
        %v3264 = vmul.f32 %v2642, %v1682
        %v3265 = vmul.f32 %v2641, %v1686
        %v3266 = vmul.f32 %v2640, %v1690
        %v3267 = vmul.f32 %v2639, %v1694
        %v3268 = vmul.f32 %v2638, %v1698
        %v3269 = vmul.f32 %v2645, %v1702
        %3270 = vst [vmem:[#allocation2 + $0x500] sm:$0xff] %v3262
        %3271 = vst [vmem:[#allocation2 + $0x508] sm:$0xff] %v3263
        %3272 = vst [vmem:[#allocation2 + $0x510] sm:$0xff] %v3264
        %3273 = vst [vmem:[#allocation2 + $0x518] sm:$0xff] %v3265
        %3274 = vst [vmem:[#allocation2 + $0x520] sm:$0xff] %v3266
        %3275 = vst [vmem:[#allocation2 + $0x528] sm:$0xff] %v3267
        %3276 = vst [vmem:[#allocation2 + $0x530] sm:$0xff] %v3268
        %3277 = vst [vmem:[#allocation2 + $0x538] sm:$0xff] %v3269
        %v3278 = vmul.f32 %v2684, %v1722
        %v3279 = vmul.f32 %v2683, %v1726
        %v3280 = vmul.f32 %v2682, %v1730
        %v3281 = vmul.f32 %v2681, %v1734
        %v3282 = vmul.f32 %v2680, %v1738
        %v3283 = vmul.f32 %v2679, %v1742
        %v3284 = vmul.f32 %v2678, %v1746
        %v3285 = vmul.f32 %v2685, %v1750
        %3286 = vst [vmem:[#allocation2 + $0x540] sm:$0xff] %v3278
        %3287 = vst [vmem:[#allocation2 + $0x548] sm:$0xff] %v3279
        %3288 = vst [vmem:[#allocation2 + $0x550] sm:$0xff] %v3280
        %3289 = vst [vmem:[#allocation2 + $0x558] sm:$0xff] %v3281
        %3290 = vst [vmem:[#allocation2 + $0x560] sm:$0xff] %v3282
        %3291 = vst [vmem:[#allocation2 + $0x568] sm:$0xff] %v3283
        %3292 = vst [vmem:[#allocation2 + $0x570] sm:$0xff] %v3284
        %3293 = vst [vmem:[#allocation2 + $0x578] sm:$0xff] %v3285
        %v3294 = vmul.f32 %v2724, %v1770
        %v3295 = vmul.f32 %v2723, %v1774
        %v3296 = vmul.f32 %v2722, %v1778
        %v3297 = vmul.f32 %v2721, %v1782
        %v3298 = vmul.f32 %v2720, %v1786
        %v3299 = vmul.f32 %v2719, %v1790
        %v3300 = vmul.f32 %v2718, %v1794
        %v3301 = vmul.f32 %v2725, %v1798
        %3302 = vst [vmem:[#allocation2 + $0x580] sm:$0xff] %v3294
        %3303 = vst [vmem:[#allocation2 + $0x588] sm:$0xff] %v3295
        %3304 = vst [vmem:[#allocation2 + $0x590] sm:$0xff] %v3296
        %3305 = vst [vmem:[#allocation2 + $0x598] sm:$0xff] %v3297
        %3306 = vst [vmem:[#allocation2 + $0x5a0] sm:$0xff] %v3298
        %3307 = vst [vmem:[#allocation2 + $0x5a8] sm:$0xff] %v3299
        %3308 = vst [vmem:[#allocation2 + $0x5b0] sm:$0xff] %v3300
        %3309 = vst [vmem:[#allocation2 + $0x5b8] sm:$0xff] %v3301
        %v3310 = vmul.f32 %v2764, %v1818
        %v3311 = vmul.f32 %v2763, %v1822
        %v3312 = vmul.f32 %v2762, %v1826
        %v3313 = vmul.f32 %v2761, %v1830
        %v3314 = vmul.f32 %v2760, %v1834
        %v3315 = vmul.f32 %v2759, %v1838
        %v3316 = vmul.f32 %v2758, %v1842
        %v3317 = vmul.f32 %v2765, %v1846
        %3318 = vst [vmem:[#allocation2 + $0x5c0] sm:$0xff] %v3310
        %3319 = vst [vmem:[#allocation2 + $0x5c8] sm:$0xff] %v3311
        %3320 = vst [vmem:[#allocation2 + $0x5d0] sm:$0xff] %v3312
        %3321 = vst [vmem:[#allocation2 + $0x5d8] sm:$0xff] %v3313
        %3322 = vst [vmem:[#allocation2 + $0x5e0] sm:$0xff] %v3314
        %3323 = vst [vmem:[#allocation2 + $0x5e8] sm:$0xff] %v3315
        %3324 = vst [vmem:[#allocation2 + $0x5f0] sm:$0xff] %v3316
        %3325 = vst [vmem:[#allocation2 + $0x5f8] sm:$0xff] %v3317
        %v3326 = vmul.f32 %v2804, %v1866
        %v3327 = vmul.f32 %v2803, %v1870
        %v3328 = vmul.f32 %v2802, %v1874
        %v3329 = vmul.f32 %v2801, %v1878
        %v3330 = vmul.f32 %v2800, %v1882
        %v3331 = vmul.f32 %v2799, %v1886
        %v3332 = vmul.f32 %v2798, %v1890
        %v3333 = vmul.f32 %v2805, %v1894
        %3334 = vst [vmem:[#allocation2 + $0x600] sm:$0xff] %v3326
        %3335 = vst [vmem:[#allocation2 + $0x608] sm:$0xff] %v3327
        %3336 = vst [vmem:[#allocation2 + $0x610] sm:$0xff] %v3328
        %3337 = vst [vmem:[#allocation2 + $0x618] sm:$0xff] %v3329
        %3338 = vst [vmem:[#allocation2 + $0x620] sm:$0xff] %v3330
        %3339 = vst [vmem:[#allocation2 + $0x628] sm:$0xff] %v3331
        %3340 = vst [vmem:[#allocation2 + $0x630] sm:$0xff] %v3332
        %3341 = vst [vmem:[#allocation2 + $0x638] sm:$0xff] %v3333
        %v3342 = vmul.f32 %v2844, %v1914
        %v3343 = vmul.f32 %v2843, %v1918
        %v3344 = vmul.f32 %v2842, %v1922
        %v3345 = vmul.f32 %v2841, %v1926
        %v3346 = vmul.f32 %v2840, %v1930
        %v3347 = vmul.f32 %v2839, %v1934
        %v3348 = vmul.f32 %v2838, %v1938
        %v3349 = vmul.f32 %v2845, %v1942
        %3350 = vst [vmem:[#allocation2 + $0x640] sm:$0xff] %v3342
        %3351 = vst [vmem:[#allocation2 + $0x648] sm:$0xff] %v3343
        %3352 = vst [vmem:[#allocation2 + $0x650] sm:$0xff] %v3344
        %3353 = vst [vmem:[#allocation2 + $0x658] sm:$0xff] %v3345
        %3354 = vst [vmem:[#allocation2 + $0x660] sm:$0xff] %v3346
        %3355 = vst [vmem:[#allocation2 + $0x668] sm:$0xff] %v3347
        %3356 = vst [vmem:[#allocation2 + $0x670] sm:$0xff] %v3348
        %3357 = vst [vmem:[#allocation2 + $0x678] sm:$0xff] %v3349
        %v3358 = vmul.f32 %v2884, %v1962
        %v3359 = vmul.f32 %v2883, %v1966
        %v3360 = vmul.f32 %v2882, %v1970
        %v3361 = vmul.f32 %v2881, %v1974
        %v3362 = vmul.f32 %v2880, %v1978
        %v3363 = vmul.f32 %v2879, %v1982
        %v3364 = vmul.f32 %v2878, %v1986
        %v3365 = vmul.f32 %v2885, %v1990
        %3366 = vst [vmem:[#allocation2 + $0x680] sm:$0xff] %v3358
        %3367 = vst [vmem:[#allocation2 + $0x688] sm:$0xff] %v3359
        %3368 = vst [vmem:[#allocation2 + $0x690] sm:$0xff] %v3360
        %3369 = vst [vmem:[#allocation2 + $0x698] sm:$0xff] %v3361
        %3370 = vst [vmem:[#allocation2 + $0x6a0] sm:$0xff] %v3362
        %3371 = vst [vmem:[#allocation2 + $0x6a8] sm:$0xff] %v3363
        %3372 = vst [vmem:[#allocation2 + $0x6b0] sm:$0xff] %v3364
        %3373 = vst [vmem:[#allocation2 + $0x6b8] sm:$0xff] %v3365
        %v3374 = vld [vmem:[#allocation8] sm:$0xff]
        %v3375 = vld [vmem:[#allocation8 + $0x8] sm:$0xff]
        %v3376 = vld [vmem:[#allocation2] sm:$0xff]
        %v3377 = vld [vmem:[#allocation2 + $0x8] sm:$0xff]
        %v3378 = vld [vmem:[#allocation2 + $0x10] sm:$0xff]
        %v3379 = vld [vmem:[#allocation2 + $0x18] sm:$0xff]
        %v3380 = vld [vmem:[#allocation2 + $0x20] sm:$0xff]
        %v3381 = vld [vmem:[#allocation2 + $0x28] sm:$0xff]
        %v3382 = vld [vmem:[#allocation2 + $0x30] sm:$0xff]
        %v3383 = vld [vmem:[#allocation2 + $0x38] sm:$0xff]
        %v3384 = vld [vmem:[#allocation2 + $0x40] sm:$0xff]
        %v3385 = vld [vmem:[#allocation2 + $0x48] sm:$0xff]
        %v3386 = vld [vmem:[#allocation2 + $0x50] sm:$0xff]
        %v3387 = vld [vmem:[#allocation2 + $0x58] sm:$0xff]
        %v3388 = vld [vmem:[#allocation2 + $0x60] sm:$0xff]
        %v3389 = vld [vmem:[#allocation2 + $0x68] sm:$0xff]
        %v3390 = vld [vmem:[#allocation2 + $0x70] sm:$0xff]
        %v3391 = vld [vmem:[#allocation2 + $0x78] sm:$0xff]
        %v3392 = vld [vmem:[#allocation2 + $0x80] sm:$0xff]
        %v3393 = vld [vmem:[#allocation2 + $0x88] sm:$0xff]
        %v3394 = vld [vmem:[#allocation2 + $0x90] sm:$0xff]
        %v3395 = vld [vmem:[#allocation2 + $0x98] sm:$0xff]
        %v3396 = vld [vmem:[#allocation2 + $0xa0] sm:$0xff]
        %v3397 = vld [vmem:[#allocation2 + $0xa8] sm:$0xff]
        %v3398 = vld [vmem:[#allocation2 + $0xb0] sm:$0xff]
        %v3399 = vld [vmem:[#allocation2 + $0xb8] sm:$0xff]
        %v3400 = vld [vmem:[#allocation2 + $0xc0] sm:$0xff]
        %v3401 = vld [vmem:[#allocation2 + $0xc8] sm:$0xff]
        %v3402 = vld [vmem:[#allocation2 + $0xd0] sm:$0xff]
        %v3403 = vld [vmem:[#allocation2 + $0xd8] sm:$0xff]
        %v3404 = vld [vmem:[#allocation2 + $0xe0] sm:$0xff]
        %v3405 = vld [vmem:[#allocation2 + $0xe8] sm:$0xff]
        %v3406 = vld [vmem:[#allocation2 + $0xf0] sm:$0xff]
        %v3407 = vld [vmem:[#allocation2 + $0xf8] sm:$0xff]
        %v3408 = vld [vmem:[#allocation2 + $0x100] sm:$0xff]
        %v3409 = vld [vmem:[#allocation2 + $0x108] sm:$0xff]
        %v3410 = vld [vmem:[#allocation2 + $0x110] sm:$0xff]
        %v3411 = vld [vmem:[#allocation2 + $0x118] sm:$0xff]
        %v3412 = vld [vmem:[#allocation2 + $0x120] sm:$0xff]
        %v3413 = vld [vmem:[#allocation2 + $0x128] sm:$0xff]
        %v3414 = vld [vmem:[#allocation2 + $0x130] sm:$0xff]
        %v3415 = vld [vmem:[#allocation2 + $0x138] sm:$0xff]
        %v3416 = vld [vmem:[#allocation2 + $0x140] sm:$0xff]
        %v3417 = vld [vmem:[#allocation2 + $0x148] sm:$0xff]
        %v3418 = vld [vmem:[#allocation2 + $0x150] sm:$0xff]
        %v3419 = vld [vmem:[#allocation2 + $0x158] sm:$0xff]
        %v3420 = vld [vmem:[#allocation2 + $0x160] sm:$0xff]
        %v3421 = vld [vmem:[#allocation2 + $0x168] sm:$0xff]
        %v3422 = vld [vmem:[#allocation2 + $0x170] sm:$0xff]
        %v3423 = vld [vmem:[#allocation2 + $0x178] sm:$0xff]
        %v3424 = vld [vmem:[#allocation2 + $0x180] sm:$0xff]
        %v3425 = vld [vmem:[#allocation2 + $0x188] sm:$0xff]
        %v3426 = vld [vmem:[#allocation2 + $0x190] sm:$0xff]
        %v3427 = vld [vmem:[#allocation2 + $0x198] sm:$0xff]
        %v3428 = vld [vmem:[#allocation2 + $0x1a0] sm:$0xff]
        %v3429 = vld [vmem:[#allocation2 + $0x1a8] sm:$0xff]
        %v3430 = vld [vmem:[#allocation2 + $0x1b0] sm:$0xff]
        %v3431 = vld [vmem:[#allocation2 + $0x1b8] sm:$0xff]
        %v3432 = vld [vmem:[#allocation2 + $0x1c0] sm:$0xff]
        %v3433 = vld [vmem:[#allocation2 + $0x1c8] sm:$0xff]
        %v3434 = vld [vmem:[#allocation2 + $0x1d0] sm:$0xff]
        %v3435 = vld [vmem:[#allocation2 + $0x1d8] sm:$0xff]
        %v3436 = vld [vmem:[#allocation2 + $0x1e0] sm:$0xff]
        %v3437 = vld [vmem:[#allocation2 + $0x1e8] sm:$0xff]
        %v3438 = vld [vmem:[#allocation2 + $0x1f0] sm:$0xff]
        %v3439 = vld [vmem:[#allocation2 + $0x1f8] sm:$0xff]
        %v3440 = vld [vmem:[#allocation2 + $0x200] sm:$0xff]
        %v3441 = vld [vmem:[#allocation2 + $0x208] sm:$0xff]
        %v3442 = vld [vmem:[#allocation2 + $0x210] sm:$0xff]
        %v3443 = vld [vmem:[#allocation2 + $0x218] sm:$0xff]
        %v3444 = vld [vmem:[#allocation2 + $0x220] sm:$0xff]
        %v3445 = vld [vmem:[#allocation2 + $0x228] sm:$0xff]
        %v3446 = vld [vmem:[#allocation2 + $0x230] sm:$0xff]
        %v3447 = vld [vmem:[#allocation2 + $0x238] sm:$0xff]
        %v3448 = vld [vmem:[#allocation2 + $0x240] sm:$0xff]
        %v3449 = vld [vmem:[#allocation2 + $0x248] sm:$0xff]
        %v3450 = vld [vmem:[#allocation2 + $0x250] sm:$0xff]
        %v3451 = vld [vmem:[#allocation2 + $0x258] sm:$0xff]
        %v3452 = vld [vmem:[#allocation2 + $0x260] sm:$0xff]
        %v3453 = vld [vmem:[#allocation2 + $0x268] sm:$0xff]
        %v3454 = vld [vmem:[#allocation2 + $0x270] sm:$0xff]
        %v3455 = vld [vmem:[#allocation2 + $0x278] sm:$0xff]
        %v3456 = vld [vmem:[#allocation2 + $0x280] sm:$0xff]
        %v3457 = vld [vmem:[#allocation2 + $0x288] sm:$0xff]
        %v3458 = vld [vmem:[#allocation2 + $0x290] sm:$0xff]
        %v3459 = vld [vmem:[#allocation2 + $0x298] sm:$0xff]
        %v3460 = vld [vmem:[#allocation2 + $0x2a0] sm:$0xff]
        %v3461 = vld [vmem:[#allocation2 + $0x2a8] sm:$0xff]
        %v3462 = vld [vmem:[#allocation2 + $0x2b0] sm:$0xff]
        %v3463 = vld [vmem:[#allocation2 + $0x2b8] sm:$0xff]
        %v3464 = vld [vmem:[#allocation2 + $0x2c0] sm:$0xff]
        %v3465 = vld [vmem:[#allocation2 + $0x2c8] sm:$0xff]
        %v3466 = vld [vmem:[#allocation2 + $0x2d0] sm:$0xff]
        %v3467 = vld [vmem:[#allocation2 + $0x2d8] sm:$0xff]
        %v3468 = vld [vmem:[#allocation2 + $0x2e0] sm:$0xff]
        %v3469 = vld [vmem:[#allocation2 + $0x2e8] sm:$0xff]
        %v3470 = vld [vmem:[#allocation2 + $0x2f0] sm:$0xff]
        %v3471 = vld [vmem:[#allocation2 + $0x2f8] sm:$0xff]
        %v3472 = vld [vmem:[#allocation2 + $0x300] sm:$0xff]
        %v3473 = vld [vmem:[#allocation2 + $0x308] sm:$0xff]
        %v3474 = vld [vmem:[#allocation2 + $0x310] sm:$0xff]
        %v3475 = vld [vmem:[#allocation2 + $0x318] sm:$0xff]
        %v3476 = vld [vmem:[#allocation2 + $0x320] sm:$0xff]
        %v3477 = vld [vmem:[#allocation2 + $0x328] sm:$0xff]
        %v3478 = vld [vmem:[#allocation2 + $0x330] sm:$0xff]
        %v3479 = vld [vmem:[#allocation2 + $0x338] sm:$0xff]
        %v3480 = vld [vmem:[#allocation2 + $0x340] sm:$0xff]
        %v3481 = vld [vmem:[#allocation2 + $0x348] sm:$0xff]
        %v3482 = vld [vmem:[#allocation2 + $0x350] sm:$0xff]
        %v3483 = vld [vmem:[#allocation2 + $0x358] sm:$0xff]
        %v3484 = vld [vmem:[#allocation2 + $0x360] sm:$0xff]
        %v3485 = vld [vmem:[#allocation2 + $0x368] sm:$0xff]
        %v3486 = vld [vmem:[#allocation2 + $0x370] sm:$0xff]
        %v3487 = vld [vmem:[#allocation2 + $0x378] sm:$0xff]
        %v3488 = vld [vmem:[#allocation2 + $0x380] sm:$0xff]
        %v3489 = vld [vmem:[#allocation2 + $0x388] sm:$0xff]
        %v3490 = vld [vmem:[#allocation2 + $0x390] sm:$0xff]
        %v3491 = vld [vmem:[#allocation2 + $0x398] sm:$0xff]
        %v3492 = vld [vmem:[#allocation2 + $0x3a0] sm:$0xff]
        %v3493 = vld [vmem:[#allocation2 + $0x3a8] sm:$0xff]
        %v3494 = vld [vmem:[#allocation2 + $0x3b0] sm:$0xff]
        %v3495 = vld [vmem:[#allocation2 + $0x3b8] sm:$0xff]
        %v3496 = vld [vmem:[#allocation2 + $0x3c0] sm:$0xff]
        %v3497 = vld [vmem:[#allocation2 + $0x3c8] sm:$0xff]
        %v3498 = vld [vmem:[#allocation2 + $0x3d0] sm:$0xff]
        %v3499 = vld [vmem:[#allocation2 + $0x3d8] sm:$0xff]
        %v3500 = vld [vmem:[#allocation2 + $0x3e0] sm:$0xff]
        %v3501 = vld [vmem:[#allocation2 + $0x3e8] sm:$0xff]
        %v3502 = vld [vmem:[#allocation2 + $0x3f0] sm:$0xff]
        %v3503 = vld [vmem:[#allocation2 + $0x3f8] sm:$0xff]
        %v3504 = vld [vmem:[#allocation2 + $0x400] sm:$0xff]
        %v3505 = vld [vmem:[#allocation2 + $0x408] sm:$0xff]
        %v3506 = vld [vmem:[#allocation2 + $0x410] sm:$0xff]
        %v3507 = vld [vmem:[#allocation2 + $0x418] sm:$0xff]
        %v3508 = vld [vmem:[#allocation2 + $0x420] sm:$0xff]
        %v3509 = vld [vmem:[#allocation2 + $0x428] sm:$0xff]
        %v3510 = vld [vmem:[#allocation2 + $0x430] sm:$0xff]
        %v3511 = vld [vmem:[#allocation2 + $0x438] sm:$0xff]
        %v3512 = vld [vmem:[#allocation2 + $0x440] sm:$0xff]
        %v3513 = vld [vmem:[#allocation2 + $0x448] sm:$0xff]
        %v3514 = vld [vmem:[#allocation2 + $0x450] sm:$0xff]
        %v3515 = vld [vmem:[#allocation2 + $0x458] sm:$0xff]
        %v3516 = vld [vmem:[#allocation2 + $0x460] sm:$0xff]
        %v3517 = vld [vmem:[#allocation2 + $0x468] sm:$0xff]
        %v3518 = vld [vmem:[#allocation2 + $0x470] sm:$0xff]
        %v3519 = vld [vmem:[#allocation2 + $0x478] sm:$0xff]
        %v3520 = vld [vmem:[#allocation2 + $0x480] sm:$0xff]
        %v3521 = vld [vmem:[#allocation2 + $0x488] sm:$0xff]
        %v3522 = vld [vmem:[#allocation2 + $0x490] sm:$0xff]
        %v3523 = vld [vmem:[#allocation2 + $0x498] sm:$0xff]
        %v3524 = vld [vmem:[#allocation2 + $0x4a0] sm:$0xff]
        %v3525 = vld [vmem:[#allocation2 + $0x4a8] sm:$0xff]
        %v3526 = vld [vmem:[#allocation2 + $0x4b0] sm:$0xff]
        %v3527 = vld [vmem:[#allocation2 + $0x4b8] sm:$0xff]
        %v3528 = vld [vmem:[#allocation2 + $0x4c0] sm:$0xff]
        %v3529 = vld [vmem:[#allocation2 + $0x4c8] sm:$0xff]
        %v3530 = vld [vmem:[#allocation2 + $0x4d0] sm:$0xff]
        %v3531 = vld [vmem:[#allocation2 + $0x4d8] sm:$0xff]
        %v3532 = vld [vmem:[#allocation2 + $0x4e0] sm:$0xff]
        %v3533 = vld [vmem:[#allocation2 + $0x4e8] sm:$0xff]
        %v3534 = vld [vmem:[#allocation2 + $0x4f0] sm:$0xff]
        %v3535 = vld [vmem:[#allocation2 + $0x4f8] sm:$0xff]
        %v3536 = vld [vmem:[#allocation2 + $0x500] sm:$0xff]
        %v3537 = vld [vmem:[#allocation2 + $0x508] sm:$0xff]
        %v3538 = vld [vmem:[#allocation2 + $0x510] sm:$0xff]
        %v3539 = vld [vmem:[#allocation2 + $0x518] sm:$0xff]
        %v3540 = vld [vmem:[#allocation2 + $0x520] sm:$0xff]
        %v3541 = vld [vmem:[#allocation2 + $0x528] sm:$0xff]
        %v3542 = vld [vmem:[#allocation2 + $0x530] sm:$0xff]
        %v3543 = vld [vmem:[#allocation2 + $0x538] sm:$0xff]
        %v3544 = vld [vmem:[#allocation2 + $0x540] sm:$0xff]
        %v3545 = vld [vmem:[#allocation2 + $0x548] sm:$0xff]
        %v3546 = vld [vmem:[#allocation2 + $0x550] sm:$0xff]
        %v3547 = vld [vmem:[#allocation2 + $0x558] sm:$0xff]
        %v3548 = vld [vmem:[#allocation2 + $0x560] sm:$0xff]
        %v3549 = vld [vmem:[#allocation2 + $0x568] sm:$0xff]
        %v3550 = vld [vmem:[#allocation2 + $0x570] sm:$0xff]
        %v3551 = vld [vmem:[#allocation2 + $0x578] sm:$0xff]
        %v3552 = vld [vmem:[#allocation2 + $0x580] sm:$0xff]
        %v3553 = vld [vmem:[#allocation2 + $0x588] sm:$0xff]
        %v3554 = vld [vmem:[#allocation2 + $0x590] sm:$0xff]
        %v3555 = vld [vmem:[#allocation2 + $0x598] sm:$0xff]
        %v3556 = vld [vmem:[#allocation2 + $0x5a0] sm:$0xff]
        %v3557 = vld [vmem:[#allocation2 + $0x5a8] sm:$0xff]
        %v3558 = vld [vmem:[#allocation2 + $0x5b0] sm:$0xff]
        %v3559 = vld [vmem:[#allocation2 + $0x5b8] sm:$0xff]
        %v3560 = vld [vmem:[#allocation2 + $0x5c0] sm:$0xff]
        %v3561 = vld [vmem:[#allocation2 + $0x5c8] sm:$0xff]
        %v3562 = vld [vmem:[#allocation2 + $0x5d0] sm:$0xff]
        %v3563 = vld [vmem:[#allocation2 + $0x5d8] sm:$0xff]
        %v3564 = vld [vmem:[#allocation2 + $0x5e0] sm:$0xff]
        %v3565 = vld [vmem:[#allocation2 + $0x5e8] sm:$0xff]
        %v3566 = vld [vmem:[#allocation2 + $0x5f0] sm:$0xff]
        %v3567 = vld [vmem:[#allocation2 + $0x5f8] sm:$0xff]
        %v3568 = vld [vmem:[#allocation2 + $0x600] sm:$0xff]
        %v3569 = vld [vmem:[#allocation2 + $0x608] sm:$0xff]
        %v3570 = vld [vmem:[#allocation2 + $0x610] sm:$0xff]
        %v3571 = vld [vmem:[#allocation2 + $0x618] sm:$0xff]
        %v3572 = vld [vmem:[#allocation2 + $0x620] sm:$0xff]
        %v3573 = vld [vmem:[#allocation2 + $0x628] sm:$0xff]
        %v3574 = vld [vmem:[#allocation2 + $0x630] sm:$0xff]
        %v3575 = vld [vmem:[#allocation2 + $0x638] sm:$0xff]
        %v3576 = vld [vmem:[#allocation2 + $0x640] sm:$0xff]
        %v3577 = vld [vmem:[#allocation2 + $0x648] sm:$0xff]
        %v3578 = vld [vmem:[#allocation2 + $0x650] sm:$0xff]
        %v3579 = vld [vmem:[#allocation2 + $0x658] sm:$0xff]
        %v3580 = vld [vmem:[#allocation2 + $0x660] sm:$0xff]
        %v3581 = vld [vmem:[#allocation2 + $0x668] sm:$0xff]
        %v3582 = vld [vmem:[#allocation2 + $0x670] sm:$0xff]
        %v3583 = vld [vmem:[#allocation2 + $0x678] sm:$0xff]
        %v3584 = vld [vmem:[#allocation2 + $0x680] sm:$0xff]
        %v3585 = vld [vmem:[#allocation2 + $0x688] sm:$0xff]
        %v3586 = vld [vmem:[#allocation2 + $0x690] sm:$0xff]
        %v3587 = vld [vmem:[#allocation2 + $0x698] sm:$0xff]
        %v3588 = vld [vmem:[#allocation2 + $0x6a0] sm:$0xff]
        %v3589 = vld [vmem:[#allocation2 + $0x6a8] sm:$0xff]
        %v3590 = vld [vmem:[#allocation2 + $0x6b0] sm:$0xff]
        %v3591 = vld [vmem:[#allocation2 + $0x6b8] sm:$0xff]
        %v3593 = vsel %vm2230, %v3375, 0
        %3595 = vmatprep.subr.mxu0 %v3497
        %3596 = vmatpush1.msra.mxu0 %v3496
        %3597 = vmatprep.subr.mxu0 %v3489
        %3598 = vmatpush1.msra.mxu0 %v3488
        %3599 = vmatprep.subr.mxu0 %v3481
        %3600 = vmatpush1.msra.mxu0 %v3480
        %3601 = vmatprep.subr.mxu0 %v3473
        %3602 = vmatpush1.msra.mxu0 %v3472
        %3603 = vmatprep.subr.mxu0 %v3465
        %3604 = vmatpush1.msra.mxu0 %v3464
        %3605 = vmatprep.subr.mxu0 %v3457
        %3606 = vmatpush1.msra.mxu0 %v3456
        %3607 = vmatprep.subr.mxu0 %v3449
        %3608 = vmatpush1.msra.mxu0 %v3448
        %3609 = vmatprep.subr.mxu0 %v3441
        %3610 = vmatpush1.msra.mxu0 %v3440
        %3611 = vmatprep.subr.mxu0 %v3433
        %3612 = vmatpush1.msra.mxu0 %v3432
        %3613 = vmatprep.subr.mxu0 %v3425
        %3614 = vmatpush1.msra.mxu0 %v3424
        %3615 = vmatprep.subr.mxu0 %v3417
        %3616 = vmatpush1.msra.mxu0 %v3416
        %3617 = vmatprep.subr.mxu0 %v3409
        %3618 = vmatpush1.msra.mxu0 %v3408
        %3619 = vmatprep.subr.mxu0 %v3401
        %3620 = vmatpush1.msra.mxu0 %v3400
        %3621 = vmatprep.subr.mxu0 %v3393
        %3622 = vmatpush1.msra.mxu0 %v3392
        %3623 = vmatprep.subr.mxu0 %v3385
        %3624 = vmatpush1.msra.mxu0 %v3384
        %3625 = vmatprep.subr.mxu0 %v3377
        %3626 = vmatpush1.msra.mxu0 %v3376
        %3627 = vmatprep.subr.mxu0 0.0
        %3628 = vmatpush2.msra.mxu0 0.0
        %3629 = vmatprep.subr.mxu0 0.0
        %3630 = vmatpush2.msra.mxu0 0.0
        %3631 = vmatprep.subr.mxu0 0.0
        %3632 = vmatpush2.msra.mxu0 0.0
        %3633 = vmatprep.subr.mxu0 0.0
        %3634 = vmatpush2.msra.mxu0 0.0
        %3635 = vmatprep.subr.mxu0 0.0
        %3636 = vmatpush2.msra.mxu0 0.0
        %3637 = vmatprep.subr.mxu0 %v3585
        %3638 = vmatpush2.msra.mxu0 %v3584
        %3639 = vmatprep.subr.mxu0 %v3577
        %3640 = vmatpush2.msra.mxu0 %v3576
        %3641 = vmatprep.subr.mxu0 %v3569
        %3642 = vmatpush2.msra.mxu0 %v3568
        %3643 = vmatprep.subr.mxu0 %v3561
        %3644 = vmatpush2.msra.mxu0 %v3560
        %3645 = vmatprep.subr.mxu0 %v3553
        %3646 = vmatpush2.msra.mxu0 %v3552
        %3647 = vmatprep.subr.mxu0 %v3545
        %3648 = vmatpush2.msra.mxu0 %v3544
        %3649 = vmatprep.subr.mxu0 %v3537
        %3650 = vmatpush2.msra.mxu0 %v3536
        %3651 = vmatprep.subr.mxu0 %v3529
        %3652 = vmatpush2.msra.mxu0 %v3528
        %3653 = vmatprep.subr.mxu0 %v3521
        %3654 = vmatpush2.msra.mxu0 %v3520
        %3655 = vmatprep.subr.mxu0 %v3513
        %3656 = vmatpush2.msra.mxu0 %v3512
        %3657 = vmatprep.subr.mxu0 %v3505
        %3658 = vmatpush2.msra.mxu0 %v3504
        %3659 = vmatprep.mubr.f32.mxu0 %v3593
        %3660 = vmatmul.mubr.f32.gmra.mxu0 %v3374
        %v3661 = vpop.f32.mrf.mxu0
        %v3662 = vadd.f32 %v2228, %v3661
        %v3663 = vpop.f32.mrf.mxu0
        %v3664 = vadd.f32 %v2228, %v3663
        %3665 = vdwg.mxu0
        %3666 = vmatprep.subr.mxu0 %v3499
        %3667 = vmatpush1.msra.mxu0 %v3498
        %3668 = vmatprep.subr.mxu0 %v3491
        %3669 = vmatpush1.msra.mxu0 %v3490
        %3670 = vmatprep.subr.mxu0 %v3483
        %3671 = vmatpush1.msra.mxu0 %v3482
        %3672 = vmatprep.subr.mxu0 %v3475
        %3673 = vmatpush1.msra.mxu0 %v3474
        %3674 = vmatprep.subr.mxu0 %v3467
        %3675 = vmatpush1.msra.mxu0 %v3466
        %3676 = vmatprep.subr.mxu0 %v3459
        %3677 = vmatpush1.msra.mxu0 %v3458
        %3678 = vmatprep.subr.mxu0 %v3451
        %3679 = vmatpush1.msra.mxu0 %v3450
        %3680 = vmatprep.subr.mxu0 %v3443
        %3681 = vmatpush1.msra.mxu0 %v3442
        %3682 = vmatprep.subr.mxu0 %v3435
        %3683 = vmatpush1.msra.mxu0 %v3434
        %3684 = vmatprep.subr.mxu0 %v3427
        %3685 = vmatpush1.msra.mxu0 %v3426
        %3686 = vmatprep.subr.mxu0 %v3419
        %3687 = vmatpush1.msra.mxu0 %v3418
        %3688 = vmatprep.subr.mxu0 %v3411
        %3689 = vmatpush1.msra.mxu0 %v3410
        %3690 = vmatprep.subr.mxu0 %v3403
        %3691 = vmatpush1.msra.mxu0 %v3402
        %3692 = vmatprep.subr.mxu0 %v3395
        %3693 = vmatpush1.msra.mxu0 %v3394
        %3694 = vmatprep.subr.mxu0 %v3387
        %3695 = vmatpush1.msra.mxu0 %v3386
        %3696 = vmatprep.subr.mxu0 %v3379
        %3697 = vmatpush1.msra.mxu0 %v3378
        %3698 = vmatprep.subr.mxu0 0.0
        %3699 = vmatpush2.msra.mxu0 0.0
        %3700 = vmatprep.subr.mxu0 0.0
        %3701 = vmatpush2.msra.mxu0 0.0
        %3702 = vmatprep.subr.mxu0 0.0
        %3703 = vmatpush2.msra.mxu0 0.0
        %3704 = vmatprep.subr.mxu0 0.0
        %3705 = vmatpush2.msra.mxu0 0.0
        %3706 = vmatprep.subr.mxu0 0.0
        %3707 = vmatpush2.msra.mxu0 0.0
        %3708 = vmatprep.subr.mxu0 %v3587
        %3709 = vmatpush2.msra.mxu0 %v3586
        %3710 = vmatprep.subr.mxu0 %v3579
        %3711 = vmatpush2.msra.mxu0 %v3578
        %3712 = vmatprep.subr.mxu0 %v3571
        %3713 = vmatpush2.msra.mxu0 %v3570
        %3714 = vmatprep.subr.mxu0 %v3563
        %3715 = vmatpush2.msra.mxu0 %v3562
        %3716 = vmatprep.subr.mxu0 %v3555
        %3717 = vmatpush2.msra.mxu0 %v3554
        %3718 = vmatprep.subr.mxu0 %v3547
        %3719 = vmatpush2.msra.mxu0 %v3546
        %3720 = vmatprep.subr.mxu0 %v3539
        %3721 = vmatpush2.msra.mxu0 %v3538
        %3722 = vmatprep.subr.mxu0 %v3531
        %3723 = vmatpush2.msra.mxu0 %v3530
        %3724 = vmatprep.subr.mxu0 %v3523
        %3725 = vmatpush2.msra.mxu0 %v3522
        %3726 = vmatprep.subr.mxu0 %v3515
        %3727 = vmatpush2.msra.mxu0 %v3514
        %3728 = vmatprep.subr.mxu0 %v3507
        %3729 = vmatpush2.msra.mxu0 %v3506
        %3730 = vmatprep.mubr.f32.mxu0 %v3593
        %3731 = vmatmul.mubr.f32.gmra.mxu0 %v3374
        %v3732 = vpop.f32.mrf.mxu0
        %v3733 = vadd.f32 %v2228, %v3732
        %v3734 = vpop.f32.mrf.mxu0
        %v3735 = vadd.f32 %v2228, %v3734
        %3736 = vdwg.mxu0
        %3737 = vmatprep.subr.mxu0 %v3501
        %3738 = vmatpush1.msra.mxu0 %v3500
        %3739 = vmatprep.subr.mxu0 %v3493
        %3740 = vmatpush1.msra.mxu0 %v3492
        %3741 = vmatprep.subr.mxu0 %v3485
        %3742 = vmatpush1.msra.mxu0 %v3484
        %3743 = vmatprep.subr.mxu0 %v3477
        %3744 = vmatpush1.msra.mxu0 %v3476
        %3745 = vmatprep.subr.mxu0 %v3469
        %3746 = vmatpush1.msra.mxu0 %v3468
        %3747 = vmatprep.subr.mxu0 %v3461
        %3748 = vmatpush1.msra.mxu0 %v3460
        %3749 = vmatprep.subr.mxu0 %v3453
        %3750 = vmatpush1.msra.mxu0 %v3452
        %3751 = vmatprep.subr.mxu0 %v3445
        %3752 = vmatpush1.msra.mxu0 %v3444
        %3753 = vmatprep.subr.mxu0 %v3437
        %3754 = vmatpush1.msra.mxu0 %v3436
        %3755 = vmatprep.subr.mxu0 %v3429
        %3756 = vmatpush1.msra.mxu0 %v3428
        %3757 = vmatprep.subr.mxu0 %v3421
        %3758 = vmatpush1.msra.mxu0 %v3420
        %3759 = vmatprep.subr.mxu0 %v3413
        %3760 = vmatpush1.msra.mxu0 %v3412
        %3761 = vmatprep.subr.mxu0 %v3405
        %3762 = vmatpush1.msra.mxu0 %v3404
        %3763 = vmatprep.subr.mxu0 %v3397
        %3764 = vmatpush1.msra.mxu0 %v3396
        %3765 = vmatprep.subr.mxu0 %v3389
        %3766 = vmatpush1.msra.mxu0 %v3388
        %3767 = vmatprep.subr.mxu0 %v3381
        %3768 = vmatpush1.msra.mxu0 %v3380
        %3769 = vmatprep.subr.mxu0 0.0
        %3770 = vmatpush2.msra.mxu0 0.0
        %3771 = vmatprep.subr.mxu0 0.0
        %3772 = vmatpush2.msra.mxu0 0.0
        %3773 = vmatprep.subr.mxu0 0.0
        %3774 = vmatpush2.msra.mxu0 0.0
        %3775 = vmatprep.subr.mxu0 0.0
        %3776 = vmatpush2.msra.mxu0 0.0
        %3777 = vmatprep.subr.mxu0 0.0
        %3778 = vmatpush2.msra.mxu0 0.0
        %3779 = vmatprep.subr.mxu0 %v3589
        %3780 = vmatpush2.msra.mxu0 %v3588
        %3781 = vmatprep.subr.mxu0 %v3581
        %3782 = vmatpush2.msra.mxu0 %v3580
        %3783 = vmatprep.subr.mxu0 %v3573
        %3784 = vmatpush2.msra.mxu0 %v3572
        %3785 = vmatprep.subr.mxu0 %v3565
        %3786 = vmatpush2.msra.mxu0 %v3564
        %3787 = vmatprep.subr.mxu0 %v3557
        %3788 = vmatpush2.msra.mxu0 %v3556
        %3789 = vmatprep.subr.mxu0 %v3549
        %3790 = vmatpush2.msra.mxu0 %v3548
        %3791 = vmatprep.subr.mxu0 %v3541
        %3792 = vmatpush2.msra.mxu0 %v3540
        %3793 = vmatprep.subr.mxu0 %v3533
        %3794 = vmatpush2.msra.mxu0 %v3532
        %3795 = vmatprep.subr.mxu0 %v3525
        %3796 = vmatpush2.msra.mxu0 %v3524
        %3797 = vmatprep.subr.mxu0 %v3517
        %3798 = vmatpush2.msra.mxu0 %v3516
        %3799 = vmatprep.subr.mxu0 %v3509
        %3800 = vmatpush2.msra.mxu0 %v3508
        %3801 = vmatprep.mubr.f32.mxu0 %v3593
        %3802 = vmatmul.mubr.f32.gmra.mxu0 %v3374
        %v3803 = vpop.f32.mrf.mxu0
        %v3804 = vadd.f32 %v2228, %v3803
        %v3805 = vpop.f32.mrf.mxu0
        %v3806 = vadd.f32 %v2228, %v3805
        %3807 = vdwg.mxu0
        %3808 = vmatprep.subr.mxu0 %v3503
        %3809 = vmatpush1.msra.mxu0 %v3502
        %3810 = vmatprep.subr.mxu0 %v3495
        %3811 = vmatpush1.msra.mxu0 %v3494
        %3812 = vmatprep.subr.mxu0 %v3487
        %3813 = vmatpush1.msra.mxu0 %v3486
        %3814 = vmatprep.subr.mxu0 %v3479
        %3815 = vmatpush1.msra.mxu0 %v3478
        %3816 = vmatprep.subr.mxu0 %v3471
        %3817 = vmatpush1.msra.mxu0 %v3470
        %3818 = vmatprep.subr.mxu0 %v3463
        %3819 = vmatpush1.msra.mxu0 %v3462
        %3820 = vmatprep.subr.mxu0 %v3455
        %3821 = vmatpush1.msra.mxu0 %v3454
        %3822 = vmatprep.subr.mxu0 %v3447
        %3823 = vmatpush1.msra.mxu0 %v3446
        %3824 = vmatprep.subr.mxu0 %v3439
        %3825 = vmatpush1.msra.mxu0 %v3438
        %3826 = vmatprep.subr.mxu0 %v3431
        %3827 = vmatpush1.msra.mxu0 %v3430
        %3828 = vmatprep.subr.mxu0 %v3423
        %3829 = vmatpush1.msra.mxu0 %v3422
        %3830 = vmatprep.subr.mxu0 %v3415
        %3831 = vmatpush1.msra.mxu0 %v3414
        %3832 = vmatprep.subr.mxu0 %v3407
        %3833 = vmatpush1.msra.mxu0 %v3406
        %3834 = vmatprep.subr.mxu0 %v3399
        %3835 = vmatpush1.msra.mxu0 %v3398
        %3836 = vmatprep.subr.mxu0 %v3391
        %3837 = vmatpush1.msra.mxu0 %v3390
        %3838 = vmatprep.subr.mxu0 %v3383
        %3839 = vmatpush1.msra.mxu0 %v3382
        %3840 = vmatprep.subr.mxu0 0.0
        %3841 = vmatpush2.msra.mxu0 0.0
        %3842 = vmatprep.subr.mxu0 0.0
        %3843 = vmatpush2.msra.mxu0 0.0
        %3844 = vmatprep.subr.mxu0 0.0
        %3845 = vmatpush2.msra.mxu0 0.0
        %3846 = vmatprep.subr.mxu0 0.0
        %3847 = vmatpush2.msra.mxu0 0.0
        %3848 = vmatprep.subr.mxu0 0.0
        %3849 = vmatpush2.msra.mxu0 0.0
        %3850 = vmatprep.subr.mxu0 %v3591
        %3851 = vmatpush2.msra.mxu0 %v3590
        %3852 = vmatprep.subr.mxu0 %v3583
        %3853 = vmatpush2.msra.mxu0 %v3582
        %3854 = vmatprep.subr.mxu0 %v3575
        %3855 = vmatpush2.msra.mxu0 %v3574
        %3856 = vmatprep.subr.mxu0 %v3567
        %3857 = vmatpush2.msra.mxu0 %v3566
        %3858 = vmatprep.subr.mxu0 %v3559
        %3859 = vmatpush2.msra.mxu0 %v3558
        %3860 = vmatprep.subr.mxu0 %v3551
        %3861 = vmatpush2.msra.mxu0 %v3550
        %3862 = vmatprep.subr.mxu0 %v3543
        %3863 = vmatpush2.msra.mxu0 %v3542
        %3864 = vmatprep.subr.mxu0 %v3535
        %3865 = vmatpush2.msra.mxu0 %v3534
        %3866 = vmatprep.subr.mxu0 %v3527
        %3867 = vmatpush2.msra.mxu0 %v3526
        %3868 = vmatprep.subr.mxu0 %v3519
        %3869 = vmatpush2.msra.mxu0 %v3518
        %3870 = vmatprep.subr.mxu0 %v3511
        %3871 = vmatpush2.msra.mxu0 %v3510
        %3872 = vmatprep.mubr.f32.mxu0 %v3593
        %3873 = vmatmul.mubr.f32.gmra.mxu0 %v3374
        %v3874 = vpop.f32.mrf.mxu0
        %v3875 = vadd.f32 %v2228, %v3874
        %v3876 = vpop.f32.mrf.mxu0
        %v3877 = vadd.f32 %v2228, %v3876
        %3878 = vdwg.mxu0
        %v3879 = vadd.f32 %v3662, %v283
        %v3880 = vadd.f32 %v3664, %v284
        %v3881 = vadd.f32 %v3733, %v285
        %v3882 = vadd.f32 %v3735, %v286
        %v3883 = vadd.f32 %v3804, %v287
        %v3884 = vadd.f32 %v3806, %v288
        %v3885 = vadd.f32 %v3875, %v289
        %v3886 = vadd.f32 %v3877, %v290
        %vm3887 = vcmp.ge.f32.partialorder %v3879, 0.0
        %vm3888 = vcmp.ge.f32.partialorder %v3880, 0.0
        %vm3889 = vcmp.ge.f32.partialorder %v3881, 0.0
        %vm3890 = vcmp.ge.f32.partialorder %v3882, 0.0
        %vm3891 = vcmp.ge.f32.partialorder %v3883, 0.0
        %vm3892 = vcmp.ge.f32.partialorder %v3884, 0.0
        %vm3893 = vcmp.ge.f32.partialorder %v3885, 0.0
        %vm3894 = vcmp.ge.f32.partialorder %v3886, 0.0
        %v3895 = vmul.f32 %v3879, 0.01
        %v3896 = vmul.f32 %v3880, 0.01
        %v3897 = vmul.f32 %v3881, 0.01
        %v3898 = vmul.f32 %v3882, 0.01
        %v3899 = vmul.f32 %v3883, 0.01
        %v3900 = vmul.f32 %v3884, 0.01
        %v3901 = vmul.f32 %v3885, 0.01
        %v3902 = vmul.f32 %v3886, 0.01
        %v3903 = vsel %vm3887, %v3879, %v3895
        %v3904 = vsel %vm3888, %v3880, %v3896
        %v3905 = vsel %vm3889, %v3881, %v3897
        %v3906 = vsel %vm3890, %v3882, %v3898
        %v3907 = vsel %vm3891, %v3883, %v3899
        %v3908 = vsel %vm3892, %v3884, %v3900
        %v3909 = vsel %vm3893, %v3885, %v3901
        %v3910 = vsel %vm3894, %v3886, %v3902
        %3911 = vst [vmem:[%s280] sm:$0xff] %v3903
        %3912 = vst [vmem:[%s280 + $0x8] sm:$0xff] %v3904
        %3913 = vst [vmem:[%s280 + $0x10] sm:$0xff] %v3905
        %3914 = vst [vmem:[%s280 + $0x18] sm:$0xff] %v3906
        %3915 = vst [vmem:[%s280 + $0x20] sm:$0xff] %v3907
        %3916 = vst [vmem:[%s280 + $0x28] sm:$0xff] %v3908
        %3917 = vst [vmem:[%s280 + $0x30] sm:$0xff] %v3909
        %3918 = vst [vmem:[%s280 + $0x38] sm:$0xff] %v3910
        %s3919 = sand.u32 %s142, 1
        %s3920 = scalar_lea.sflag [#allocation5], %s3919
        %s3921 = sand.u32 %s142, 1
        %s3922 = smul.addr %s3921, 64
        %s3923 = scalar_lea.vmem [#allocation11], %s3922
        // Predicated region
        $region57: #{tpu_custom_call.1} parent=39 // pred_check
          %p3924 = pneg %p152
        $region58: #{tpu_custom_call.1} parent=39 // pred_check_branch
          %3926 = sbr.rel (%p3924) target = $region60
        $region59: #{tpu_custom_call.1} parent=39 // pred_region
          %s3927 = smul.u32 8, %s24
          %s3929 = ssub.s32 1024, 1024
          %3930 = vsyncadd %s3920, %s3929
          %s3931 = smul.addr %s3927, 128
          %s3932 = scalar_lea.hbm %s5, %s3931
          %s3934 = sshll.u32 %s3923, 4
          %s3935 = int_to_ptr.vmem [resolvable:$true] %s3934
          %3937 = dma.vmem_to_hbm [thread:$0]  %s3935, 1024, %s3932, %s3920
        $region60: #{tpu_custom_call.1} parent=39 // pred_fallthru
          _
      $region40: #{tpu_custom_call.1} parent=5 // pred_fallthru
        _
      %p3938 = scmp.le.s32.totalorder 2, %s19
      // Predicated region
      $region61: #{tpu_custom_call.1} parent=5 // pred_check
        %p3939 = pneg %p3938
      $region62: #{tpu_custom_call.1} parent=5 // pred_check_branch
        %3941 = sbr.rel (%p3939) target = $region64
      $region63: #{tpu_custom_call.1} parent=5 // pred_region
        %s3942 = ssub.s32 %s19, 2
        // Predicated region
        $region65: #{tpu_custom_call.1} parent=63 // pred_check
          %p3943 = pneg %p158
        $region66: #{tpu_custom_call.1} parent=63 // pred_check_branch
          %3945 = sbr.rel (%p3943) target = $region68
        $region67: #{tpu_custom_call.1} parent=63 // pred_region
          %s3946 = sand.u32 %s143, 1
          %s3947 = scalar_lea.sflag [#allocation5], %s3946
          %s3948 = sand.u32 %s143, 1
          %s3949 = smul.addr %s3948, 64
          %s3950 = scalar_lea.vmem [#allocation11], %s3949
          %3951 = dma.done %s3947, 1024
        $region68: #{tpu_custom_call.1} parent=63 // pred_fallthru
          _
      $region64: #{tpu_custom_call.1} parent=5 // pred_fallthru
        _
    $region6: #{tpu_custom_call.1} parent=1 // loop_footer
      %s23 = sadd.s32 1, %s19
    $region7: #{tpu_custom_call.1} parent=1 // loop_footer_branch
      %18 = sbr.rel target = $region3
    $region8: #{tpu_custom_call.1} parent=1 // loop_exit
      _
    %3952 = vsyncpa [#allocation4], 1
    %s3953 = scalar_lea.sflag [#allocation4], 1
    %3954 = vsyncpa %s3953, 1
    %3955 = vsyncpa [#allocation7], 1
    %3956 = vsyncpa [#allocation10], 1
    %3957 = vsyncpa [#allocation5], 1
    %s3958 = scalar_lea.sflag [#allocation5], 1
    %3959 = vsyncpa %s3958, 1

</llo_original>
